<compile_context>
chip_gen: v5e
topology: v5e:2x2
jax: 0.10.0
libtpu: 0.0.40
codegen_flags: <defaults>
</compile_context>

<pallas_src>
import numpy as np
import jax
import jax.numpy as jnp
from jax import lax
from jax.experimental import pallas as pl
from jax.experimental.pallas import tpu as pltpu

EPS = 1e-5      # BatchNorm1d default eps
SEQ = 16        # token sequence length -> input channels of Conv1
EMB = 32        # embedding dim         -> spatial length L of the 1-D convs

F32 = jnp.float32
BF16 = jnp.bfloat16


# ----------------------------------------------------------------- kernel ---

def n2et_kernel(a0_ref, w32_ref, w64_ref, bn32_ref, bn64_ref,
                wsum_ref, tail_ref, out_ref):
  R = a0_ref.shape[0]                       # B * 32 rows
  B = R // EMB
  inv_half = 1.0 / float(B * (EMB // 2))    # valid positions of the pooled stage

  # ---- masks, hoisted once as (R, 1) columns (bitwise AND, no int div) ----
  ridx = lax.broadcasted_iota(jnp.int32, (R, 1), 0)
  pos = jnp.bitwise_and(ridx, EMB - 1)      # r % 32   (EMB is a power of two)
  lo1 = (pos >= 1).astype(F32)
  hi1 = (pos < EMB - 1).astype(F32)
  lo2 = (pos >= 2).astype(F32)
  hi2 = (pos < EMB - 2).astype(F32)
  even = (jnp.bitwise_and(ridx, 1) == 0).astype(F32)

  def fconv(x, lo, hi, w, step):
    """Conv1d(k=3, pad=1) as ONE fused (R, 3*Cin) @ (3*Cin, Cout) MXU launch."""
    xm = pltpu.roll(x, step, 0) * lo        # reads x[r - step], block-masked
    xp = pltpu.roll(x, R - step, 0) * hi    # reads x[r + step], block-masked
    cat = jnp.concatenate([xm, x, xp], axis=1).astype(BF16)
    return jnp.dot(cat, w, preferred_element_type=F32)

  def bn(y, g, b, mask=None, inv_count=None):
    """BatchNorm1d, training-mode batch stats, one pass (f32); optional row mask."""
    if mask is None:
      mu = jnp.mean(y, axis=0, keepdims=True)
      ms = jnp.mean(y * y, axis=0, keepdims=True)
    else:
      mu = jnp.sum(y * mask, axis=0, keepdims=True) * inv_count
      ms = jnp.sum(y * y * mask, axis=0, keepdims=True) * inv_count
    var = jnp.maximum(ms - mu * mu, 0.0)
    return g * (y - mu) * lax.rsqrt(var + EPS) + b

  a0 = a0_ref[...]                                               # (R, 16) f32

  # Conv1 = Conv1d(16->32)+BN + Conv1d(32->32)+BN   (no ReLU in N2et)
  c1a = bn(fconv(a0, lo1, hi1, w32_ref[0:48, :], 1),
           bn32_ref[0:1, :], bn32_ref[1:2, :])
  conv1 = bn(fconv(c1a, lo1, hi1, w32_ref[48:144, :], 1),
             bn32_ref[2:3, :], bn32_ref[3:4, :])                 # (R, 32)

  # F.max_pool1d(conv1, 2): keep full row resolution; valid data on even rows.
  pool1 = jnp.maximum(conv1, pltpu.roll(conv1, R - 1, 0))        # (R, 32)

  # Conv2 = Conv1d(32->64)+BN + Conv1d(64->64)+BN on the pooled (even-row)
  # signal: taps shift by 2 rows; BN stats masked to the B*16 valid rows.
  c2a = bn(fconv(pool1, lo2, hi2, w64_ref[0:96, :], 2),
           bn64_ref[0:1, :], bn64_ref[1:2, :], even, inv_half)
  conv2 = bn(fconv(c2a, lo2, hi2, w64_ref[96:288, :], 2),
             bn64_ref[2:3, :], bn64_ref[3:4, :], even, inv_half)  # (R, 64)

  # deconv1 = ConvTranspose1d(64->32, k=2, s=2) + BN: one fused matmul whose
  # lane halves are the even/odd taps, then an even/odd row interleave.
  y = jnp.dot(conv2.astype(BF16), w64_ref[288:352, :],
              preferred_element_type=F32)                         # (R, 64)
  y_d = even * y[:, 0:EMB] + (1.0 - even) * pltpu.roll(y[:, EMB:2 * EMB], 1, 0)
  convt1 = bn(y_d, bn32_ref[4:5, :], bn32_ref[5:6, :])            # (R, 32)

  # Conv3 on torch.cat([convt1, conv1], dim=1): a single lane concat feeds the
  # fused (R, 192) @ (192, 32) conv.
  xcat = jnp.concatenate([convt1, conv1], axis=1)                 # (R, 64)
  c3a = bn(fconv(xcat, lo1, hi1, w32_ref[144:336, :], 1),
           bn32_ref[6:7, :], bn32_ref[7:8, :])
  conv3 = bn(fconv(c3a, lo1, hi1, w32_ref[336:432, :], 1),
             bn32_ref[8:9, :], bn32_ref[9:10, :])                 # (R, 32)

  # Tail: Conv1d(32,1,1) then Linear(32,1) over the length axis, folded into
  # one (B, R)@(R, 32) matmul plus a lane reduction.  wsum is O(B^2) but ~1 KiB
  # at B=4; replace with a per-block reduction if B ever grows large.
  m = jnp.dot(wsum_ref[...], conv3.astype(BF16), preferred_element_type=F32)
  out_ref[...] = (jnp.sum(m * tail_ref[0:1, :], axis=1, keepdims=True)
                  + tail_ref[1:2, 0:1])


# ---------------------------------------------------------------- wrapper ---

def n2et_forward(tokens, p):
  B = tokens.shape[0]
  # nn.Embedding(16, 32): gather kept as plain-JAX glue; result is NCL (B, 16, 32).
  emb = p['embedding'][tokens]
  a0 = jnp.transpose(emb, (0, 2, 1)).reshape(B * EMB, SEQ).astype(F32)

  def fw(w):   # PyTorch conv weight (Cout, Cin, 3) -> fused-tap (3*Cin, Cout) bf16
    return jnp.transpose(w, (2, 1, 0)).reshape(-1, w.shape[0]).astype(BF16)

  # Fused weight stacks; in-kernel row-slice offsets are all 16-sublane aligned.
  w32 = jnp.concatenate([fw(p['conv1a_w']),      # rows   0: 48
                         fw(p['conv1b_w']),      # rows  48:144
                         fw(p['conv3a_w']),      # rows 144:336  (cin: convt1|conv1)
                         fw(p['conv3b_w'])],     # rows 336:432
                        axis=0)                                   # (432, 32)
  wd_cat = jnp.concatenate([p['deconv_w'][:, :, 0],
                            p['deconv_w'][:, :, 1]], axis=1).astype(BF16)  # (64, 64)
  w64 = jnp.concatenate([fw(p['conv2a_w']),      # rows   0: 96
                         fw(p['conv2b_w']),      # rows  96:288
                         wd_cat],                # rows 288:352
                        axis=0)                                   # (352, 64)

  def gb(name):  # BN (gamma, beta) -> (2, C); conv biases dropped (cancel in BN).
    return jnp.stack([p[f'{name}_g'], p[f'{name}_b']]).astype(F32)

  bn32 = jnp.concatenate([gb('bn1a'), gb('bn1b'), gb('bnd'),
                          gb('bn3a'), gb('bn3b')], axis=0)        # (10, 32)
  bn64 = jnp.concatenate([gb('bn2a'), gb('bn2b')], axis=0)        # (4, 64)

  # Tail: wsum[b, r] = out_w[r % 32] if r // 32 == b else 0     (B, B*32)
  row = jnp.arange(B * EMB)
  blk = (row[None, :] // EMB) == jnp.arange(B)[:, None]
  wsum = (blk.astype(F32) * jnp.tile(p['out_w'][0], B)[None, :]).astype(BF16)
  cst = p['conv_b'][0] * jnp.sum(p['out_w'][0]) + p['out_b'][0]
  tail = jnp.concatenate([p['conv_w'].reshape(1, EMB),
                          jnp.zeros((1, EMB), F32).at[0, 0].set(cst)],
                         axis=0).astype(F32)                      # (2, 32)

  operands = [a0, w32, w64, bn32, bn64, wsum, tail]

  # Gridless single program: at B=4 every slab is one (128, C) tile and the
  # whole problem is latency-bound (total VMEM << 1 MiB on all generations).
  out = pl.pallas_call(
      n2et_kernel,
      out_shape=jax.ShapeDtypeStruct((B, 1), F32),
      in_specs=[pl.BlockSpec(memory_space=pltpu.MemorySpace.VMEM)
                for _ in operands],
      out_specs=pl.BlockSpec(memory_space=pltpu.MemorySpace.VMEM),
  )(*operands)
  return out.reshape(B, 1, 1)


# --------------------------------------------- pure-JAX reference (NCL) -----

def _conv1d_ref(x, w, b):
  L = x.shape[-1]
  xp = jnp.pad(x, ((0, 0), (0, 0), (1, 1)))
  y = sum(jnp.einsum('bcl,oc->bol', xp[:, :, k:k + L], w[:, :, k])
          for k in range(w.shape[-1]))
  return y + b[None, :, None]


def _bn_ref(x, g, be):
  mu = jnp.mean(x, axis=(0, 2), keepdims=True)
  var = jnp.mean((x - mu) ** 2, axis=(0, 2), keepdims=True)
  return g[None, :, None] * (x - mu) * lax.rsqrt(var + EPS) + be[None, :, None]


def n2et_reference(tokens, p):
  emb = p['embedding'][tokens]                                   # (B, 16, 32)
  c1a = _bn_ref(_conv1d_ref(emb, p['conv1a_w'], p['conv1a_b']), p['bn1a_g'], p['bn1a_b'])
  conv1 = _bn_ref(_conv1d_ref(c1a, p['conv1b_w'], p['conv1b_b']), p['bn1b_g'], p['bn1b_b'])
  B, C, L = conv1.shape
  pool1 = jnp.max(conv1.reshape(B, C, L // 2, 2), axis=-1)
  c2a = _bn_ref(_conv1d_ref(pool1, p['conv2a_w'], p['conv2a_b']), p['bn2a_g'], p['bn2a_b'])
  conv2 = _bn_ref(_conv1d_ref(c2a, p['conv2b_w'], p['conv2b_b']), p['bn2b_g'], p['bn2b_b'])
  ye = jnp.einsum('bcl,co->bol', conv2, p['deconv_w'][:, :, 0])
  yo = jnp.einsum('bcl,co->bol', conv2, p['deconv_w'][:, :, 1])
  y = jnp.stack([ye, yo], axis=-1).reshape(B, 32, L) + p['deconv_b'][None, :, None]
  convt1 = _bn_ref(y, p['bnd_g'], p['bnd_b'])
  concat1 = jnp.concatenate([convt1, conv1], axis=1)
  c3a = _bn_ref(_conv1d_ref(concat1, p['conv3a_w'], p['conv3a_b']), p['bn3a_g'], p['bn3a_b'])
  conv3 = _bn_ref(_conv1d_ref(c3a, p['conv3b_w'], p['conv3b_b']), p['bn3b_g'], p['bn3b_b'])
  c1x1 = jnp.einsum('bcl,oc->bol', conv3, p['conv_w'][:, :, 0]) + p['conv_b'][None, :, None]
  out = jnp.einsum('bol,nl->bon', c1x1, p['out_w']) + p['out_b'][None, None, :]
  return out


# ----------------------------------------------------------- param init -----

def init_params(key):
  keys = iter(jax.random.split(key, 64))

  def nrm(shape, scale=0.1):
    return scale * jax.random.normal(next(keys), shape, F32)

  p = {'embedding': nrm((16, EMB), 1.0)}

  def add_conv(name, cout, cin, k=3):
    p[f'{name}_w'] = nrm((cout, cin, k))
    p[f'{name}_b'] = nrm((cout,), 0.05)

  def add_bn(name, c):
    p[f'{name}_g'] = 1.0 + nrm((c,), 0.1)
    p[f'{name}_b'] = nrm((c,), 0.1)

  add_conv('conv1a', 32, 16); add_bn('bn1a', 32)
  add_conv('conv1b', 32, 32); add_bn('bn1b', 32)
  add_conv('conv2a', 64, 32); add_bn('bn2a', 64)
  add_conv('conv2b', 64, 64); add_bn('bn2b', 64)
  p['deconv_w'] = nrm((64, 32, 2)); p['deconv_b'] = nrm((32,), 0.05); add_bn('bnd', 32)
  add_conv('conv3a', 32, 64); add_bn('bn3a', 32)
  add_conv('conv3b', 32, 32); add_bn('bn3b', 32)
  p['conv_w'] = nrm((1, 32, 1)); p['conv_b'] = nrm((1,), 0.05)
  p['out_w'] = nrm((1, 32)); p['out_b'] = nrm((1,), 0.05)
  return p


if __name__ == "__main__":
  key = jax.random.PRNGKey(0)
  k_x, k_p = jax.random.split(key)
  B = 4
  tokens = jax.random.randint(k_x, (B, SEQ), 0, 16)   # int32 token ids in [0, 16)
  params = init_params(k_p)

  out = n2et_forward(tokens, params)
  out = jax.block_until_ready(out)
  assert out.shape == (B, 1, 1)

  ref = n2et_reference(tokens, params)
  # bf16 MXU inputs across 8 matmul/BN stages vs an all-f32 reference -> 2e-2 tolerance.
  np.testing.assert_allclose(np.asarray(out), np.asarray(ref), rtol=2e-2, atol=2e-2)
  print("KERNEL_OK")
</pallas_src>

<mosaic_0001>
module attributes {stable_mosaic.version = 11 : i64} {
  func.func @n2et_kernel(%arg0: memref<128x16xf32, #tpu.memory_space<vmem>>, %arg1: memref<432x32xbf16, #tpu.memory_space<vmem>>, %arg2: memref<352x64xbf16, #tpu.memory_space<vmem>>, %arg3: memref<10x32xf32, #tpu.memory_space<vmem>>, %arg4: memref<4x64xf32, #tpu.memory_space<vmem>>, %arg5: memref<4x128xbf16, #tpu.memory_space<vmem>>, %arg6: memref<2x32xf32, #tpu.memory_space<vmem>>, %arg7: memref<4x1xf32, #tpu.memory_space<vmem>>) attributes {dimension_semantics = [], scalar_prefetch = 0 : i64, scratch_operands = 0 : i64, tpu.core_type = #tpu.core_type<tc>} {
    %0 = tpu.iota {dimensions = array<i32: 0>} : vector<128x1xi32>
    %c31_i32 = arith.constant 31 : i32
    %1 = vector.broadcast %c31_i32 : i32 to vector<128x1xi32>
    %2 = arith.andi %0, %1 : vector<128x1xi32>
    %c1_i32 = arith.constant 1 : i32
    %3 = vector.broadcast %c1_i32 : i32 to vector<128x1xi32>
    %4 = arith.cmpi sge, %2, %3 : vector<128x1xi32>
    %5 = arith.extui %4 : vector<128x1xi1> to vector<128x1xi32>
    %6 = arith.sitofp %5 : vector<128x1xi32> to vector<128x1xf32>
    %c31_i32_0 = arith.constant 31 : i32
    %7 = vector.broadcast %c31_i32_0 : i32 to vector<128x1xi32>
    %8 = arith.cmpi slt, %2, %7 : vector<128x1xi32>
    %9 = arith.extui %8 : vector<128x1xi1> to vector<128x1xi32>
    %10 = arith.sitofp %9 : vector<128x1xi32> to vector<128x1xf32>
    %c2_i32 = arith.constant 2 : i32
    %11 = vector.broadcast %c2_i32 : i32 to vector<128x1xi32>
    %12 = arith.cmpi sge, %2, %11 : vector<128x1xi32>
    %13 = arith.extui %12 : vector<128x1xi1> to vector<128x1xi32>
    %14 = arith.sitofp %13 : vector<128x1xi32> to vector<128x1xf32>
    %c30_i32 = arith.constant 30 : i32
    %15 = vector.broadcast %c30_i32 : i32 to vector<128x1xi32>
    %16 = arith.cmpi slt, %2, %15 : vector<128x1xi32>
    %17 = arith.extui %16 : vector<128x1xi1> to vector<128x1xi32>
    %18 = arith.sitofp %17 : vector<128x1xi32> to vector<128x1xf32>
    %c1_i32_1 = arith.constant 1 : i32
    %19 = vector.broadcast %c1_i32_1 : i32 to vector<128x1xi32>
    %20 = arith.andi %0, %19 : vector<128x1xi32>
    %c0_i32 = arith.constant 0 : i32
    %21 = vector.broadcast %c0_i32 : i32 to vector<128x1xi32>
    %22 = arith.cmpi eq, %20, %21 : vector<128x1xi32>
    %23 = arith.extui %22 : vector<128x1xi1> to vector<128x1xi32>
    %24 = arith.sitofp %23 : vector<128x1xi32> to vector<128x1xf32>
    %c0 = arith.constant 0 : index
    %c0_2 = arith.constant 0 : index
    %25 = vector.load %arg0[%c0, %c0_2] : memref<128x16xf32, #tpu.memory_space<vmem>>, vector<128x16xf32>
    %c0_3 = arith.constant 0 : index
    %c0_4 = arith.constant 0 : index
    %26 = vector.load %arg1[%c0_3, %c0_4] : memref<432x32xbf16, #tpu.memory_space<vmem>>, vector<48x32xbf16>
    %c1_i32_5 = arith.constant 1 : i32
    %27 = tpu.dynamic_rotate %25 by %c1_i32_5 dim 0 : vector<128x16xf32>, i32 -> vector<128x16xf32>
    %28 = vector.broadcast %6 : vector<128x1xf32> to vector<128x16xf32>
    %29 = arith.mulf %27, %28 : vector<128x16xf32>
    %c127_i32 = arith.constant 127 : i32
    %30 = tpu.dynamic_rotate %25 by %c127_i32 dim 0 : vector<128x16xf32>, i32 -> vector<128x16xf32>
    %31 = vector.broadcast %10 : vector<128x1xf32> to vector<128x16xf32>
    %32 = arith.mulf %30, %31 : vector<128x16xf32>
    %33 = tpu.concatenate %29, %25, %32 in 1 : vector<128x16xf32>, vector<128x16xf32>, vector<128x16xf32> -> vector<128x48xf32>
    %34 = arith.truncf %33 : vector<128x48xf32> to vector<128x48xbf16>
    %cst = arith.constant dense<0.000000e+00> : vector<128x32xf32>
    %35 = tpu.matmul %34, %26, %cst {dimension_numbers = #tpu.dot_dimension_numbers<[1], [0], [0], [1], [0, 0, 1, 1], [], []>} : vector<128x48xbf16>, vector<48x32xbf16>, vector<128x32xf32> -> vector<128x32xf32>
    %c0_6 = arith.constant 0 : index
    %c0_7 = arith.constant 0 : index
    %36 = vector.load %arg3[%c0_6, %c0_7] : memref<10x32xf32, #tpu.memory_space<vmem>>, vector<1x32xf32>
    %c1 = arith.constant 1 : index
    %c0_8 = arith.constant 0 : index
    %37 = vector.load %arg3[%c1, %c0_8] : memref<10x32xf32, #tpu.memory_space<vmem>>, vector<1x32xf32>
    %cst_9 = arith.constant dense<0.000000e+00> : vector<32xf32>
    %38 = vector.multi_reduction <add>, %35, %cst_9 [0] : vector<128x32xf32> to vector<32xf32>
    %39 = vector.shape_cast %38 : vector<32xf32> to vector<1x32xf32>
    %cst_10 = arith.constant 1.280000e+02 : f32
    %40 = vector.broadcast %cst_10 : f32 to vector<1x32xf32>
    %41 = arith.divf %39, %40 : vector<1x32xf32>
    %42 = arith.mulf %35, %35 : vector<128x32xf32>
    %cst_11 = arith.constant dense<0.000000e+00> : vector<32xf32>
    %43 = vector.multi_reduction <add>, %42, %cst_11 [0] : vector<128x32xf32> to vector<32xf32>
    %44 = vector.shape_cast %43 : vector<32xf32> to vector<1x32xf32>
    %cst_12 = arith.constant 1.280000e+02 : f32
    %45 = vector.broadcast %cst_12 : f32 to vector<1x32xf32>
    %46 = arith.divf %44, %45 : vector<1x32xf32>
    %47 = arith.mulf %41, %41 : vector<1x32xf32>
    %48 = arith.subf %46, %47 : vector<1x32xf32>
    %cst_13 = arith.constant 0.000000e+00 : f32
    %49 = vector.broadcast %cst_13 : f32 to vector<1x32xf32>
    %50 = arith.maximumf %48, %49 : vector<1x32xf32>
    %51 = vector.broadcast %41 : vector<1x32xf32> to vector<128x32xf32>
    %52 = arith.subf %35, %51 : vector<128x32xf32>
    %53 = vector.broadcast %36 : vector<1x32xf32> to vector<128x32xf32>
    %54 = arith.mulf %53, %52 : vector<128x32xf32>
    %cst_14 = arith.constant 9.99999974E-6 : f32
    %55 = vector.broadcast %cst_14 : f32 to vector<1x32xf32>
    %56 = arith.addf %50, %55 : vector<1x32xf32>
    %57 = math.rsqrt %56 : vector<1x32xf32>
    %58 = vector.broadcast %57 : vector<1x32xf32> to vector<128x32xf32>
    %59 = arith.mulf %54, %58 : vector<128x32xf32>
    %60 = vector.broadcast %37 : vector<1x32xf32> to vector<128x32xf32>
    %61 = arith.addf %59, %60 : vector<128x32xf32>
    %c48 = arith.constant 48 : index
    %c0_15 = arith.constant 0 : index
    %62 = vector.load %arg1[%c48, %c0_15] : memref<432x32xbf16, #tpu.memory_space<vmem>>, vector<96x32xbf16>
    %c1_i32_16 = arith.constant 1 : i32
    %63 = tpu.dynamic_rotate %61 by %c1_i32_16 dim 0 : vector<128x32xf32>, i32 -> vector<128x32xf32>
    %64 = vector.broadcast %6 : vector<128x1xf32> to vector<128x32xf32>
    %65 = arith.mulf %63, %64 : vector<128x32xf32>
    %c127_i32_17 = arith.constant 127 : i32
    %66 = tpu.dynamic_rotate %61 by %c127_i32_17 dim 0 : vector<128x32xf32>, i32 -> vector<128x32xf32>
    %67 = vector.broadcast %10 : vector<128x1xf32> to vector<128x32xf32>
    %68 = arith.mulf %66, %67 : vector<128x32xf32>
    %69 = tpu.concatenate %65, %61, %68 in 1 : vector<128x32xf32>, vector<128x32xf32>, vector<128x32xf32> -> vector<128x96xf32>
    %70 = arith.truncf %69 : vector<128x96xf32> to vector<128x96xbf16>
    %cst_18 = arith.constant dense<0.000000e+00> : vector<128x32xf32>
    %71 = tpu.matmul %70, %62, %cst_18 {dimension_numbers = #tpu.dot_dimension_numbers<[1], [0], [0], [1], [0, 0, 1, 1], [], []>} : vector<128x96xbf16>, vector<96x32xbf16>, vector<128x32xf32> -> vector<128x32xf32>
    %c2 = arith.constant 2 : index
    %c0_19 = arith.constant 0 : index
    %72 = vector.load %arg3[%c2, %c0_19] : memref<10x32xf32, #tpu.memory_space<vmem>>, vector<1x32xf32>
    %c3 = arith.constant 3 : index
    %c0_20 = arith.constant 0 : index
    %73 = vector.load %arg3[%c3, %c0_20] : memref<10x32xf32, #tpu.memory_space<vmem>>, vector<1x32xf32>
    %cst_21 = arith.constant dense<0.000000e+00> : vector<32xf32>
    %74 = vector.multi_reduction <add>, %71, %cst_21 [0] : vector<128x32xf32> to vector<32xf32>
    %75 = vector.shape_cast %74 : vector<32xf32> to vector<1x32xf32>
    %cst_22 = arith.constant 1.280000e+02 : f32
    %76 = vector.broadcast %cst_22 : f32 to vector<1x32xf32>
    %77 = arith.divf %75, %76 : vector<1x32xf32>
    %78 = arith.mulf %71, %71 : vector<128x32xf32>
    %cst_23 = arith.constant dense<0.000000e+00> : vector<32xf32>
    %79 = vector.multi_reduction <add>, %78, %cst_23 [0] : vector<128x32xf32> to vector<32xf32>
    %80 = vector.shape_cast %79 : vector<32xf32> to vector<1x32xf32>
    %cst_24 = arith.constant 1.280000e+02 : f32
    %81 = vector.broadcast %cst_24 : f32 to vector<1x32xf32>
    %82 = arith.divf %80, %81 : vector<1x32xf32>
    %83 = arith.mulf %77, %77 : vector<1x32xf32>
    %84 = arith.subf %82, %83 : vector<1x32xf32>
    %cst_25 = arith.constant 0.000000e+00 : f32
    %85 = vector.broadcast %cst_25 : f32 to vector<1x32xf32>
    %86 = arith.maximumf %84, %85 : vector<1x32xf32>
    %87 = vector.broadcast %77 : vector<1x32xf32> to vector<128x32xf32>
    %88 = arith.subf %71, %87 : vector<128x32xf32>
    %89 = vector.broadcast %72 : vector<1x32xf32> to vector<128x32xf32>
    %90 = arith.mulf %89, %88 : vector<128x32xf32>
    %cst_26 = arith.constant 9.99999974E-6 : f32
    %91 = vector.broadcast %cst_26 : f32 to vector<1x32xf32>
    %92 = arith.addf %86, %91 : vector<1x32xf32>
    %93 = math.rsqrt %92 : vector<1x32xf32>
    %94 = vector.broadcast %93 : vector<1x32xf32> to vector<128x32xf32>
    %95 = arith.mulf %90, %94 : vector<128x32xf32>
    %96 = vector.broadcast %73 : vector<1x32xf32> to vector<128x32xf32>
    %97 = arith.addf %95, %96 : vector<128x32xf32>
    %c127_i32_27 = arith.constant 127 : i32
    %98 = tpu.dynamic_rotate %97 by %c127_i32_27 dim 0 : vector<128x32xf32>, i32 -> vector<128x32xf32>
    %99 = arith.maximumf %97, %98 : vector<128x32xf32>
    %c0_28 = arith.constant 0 : index
    %c0_29 = arith.constant 0 : index
    %100 = vector.load %arg2[%c0_28, %c0_29] : memref<352x64xbf16, #tpu.memory_space<vmem>>, vector<96x64xbf16>
    %c2_i32_30 = arith.constant 2 : i32
    %101 = tpu.dynamic_rotate %99 by %c2_i32_30 dim 0 : vector<128x32xf32>, i32 -> vector<128x32xf32>
    %102 = vector.broadcast %14 : vector<128x1xf32> to vector<128x32xf32>
    %103 = arith.mulf %101, %102 : vector<128x32xf32>
    %c126_i32 = arith.constant 126 : i32
    %104 = tpu.dynamic_rotate %99 by %c126_i32 dim 0 : vector<128x32xf32>, i32 -> vector<128x32xf32>
    %105 = vector.broadcast %18 : vector<128x1xf32> to vector<128x32xf32>
    %106 = arith.mulf %104, %105 : vector<128x32xf32>
    %107 = tpu.concatenate %103, %99, %106 in 1 : vector<128x32xf32>, vector<128x32xf32>, vector<128x32xf32> -> vector<128x96xf32>
    %108 = arith.truncf %107 : vector<128x96xf32> to vector<128x96xbf16>
    %cst_31 = arith.constant dense<0.000000e+00> : vector<128x64xf32>
    %109 = tpu.matmul %108, %100, %cst_31 {dimension_numbers = #tpu.dot_dimension_numbers<[1], [0], [0], [1], [0, 0, 1, 1], [], []>} : vector<128x96xbf16>, vector<96x64xbf16>, vector<128x64xf32> -> vector<128x64xf32>
    %c0_32 = arith.constant 0 : index
    %c0_33 = arith.constant 0 : index
    %110 = vector.load %arg4[%c0_32, %c0_33] : memref<4x64xf32, #tpu.memory_space<vmem>>, vector<1x64xf32>
    %c1_34 = arith.constant 1 : index
    %c0_35 = arith.constant 0 : index
    %111 = vector.load %arg4[%c1_34, %c0_35] : memref<4x64xf32, #tpu.memory_space<vmem>>, vector<1x64xf32>
    %112 = vector.broadcast %24 : vector<128x1xf32> to vector<128x64xf32>
    %113 = arith.mulf %109, %112 : vector<128x64xf32>
    %cst_36 = arith.constant dense<0.000000e+00> : vector<64xf32>
    %114 = vector.multi_reduction <add>, %113, %cst_36 [0] : vector<128x64xf32> to vector<64xf32>
    %115 = vector.shape_cast %114 : vector<64xf32> to vector<1x64xf32>
    %cst_37 = arith.constant 1.562500e-02 : f32
    %116 = vector.broadcast %cst_37 : f32 to vector<1x64xf32>
    %117 = arith.mulf %115, %116 : vector<1x64xf32>
    %118 = arith.mulf %109, %109 : vector<128x64xf32>
    %119 = vector.broadcast %24 : vector<128x1xf32> to vector<128x64xf32>
    %120 = arith.mulf %118, %119 : vector<128x64xf32>
    %cst_38 = arith.constant dense<0.000000e+00> : vector<64xf32>
    %121 = vector.multi_reduction <add>, %120, %cst_38 [0] : vector<128x64xf32> to vector<64xf32>
    %122 = vector.shape_cast %121 : vector<64xf32> to vector<1x64xf32>
    %cst_39 = arith.constant 1.562500e-02 : f32
    %123 = vector.broadcast %cst_39 : f32 to vector<1x64xf32>
    %124 = arith.mulf %122, %123 : vector<1x64xf32>
    %125 = arith.mulf %117, %117 : vector<1x64xf32>
    %126 = arith.subf %124, %125 : vector<1x64xf32>
    %cst_40 = arith.constant 0.000000e+00 : f32
    %127 = vector.broadcast %cst_40 : f32 to vector<1x64xf32>
    %128 = arith.maximumf %126, %127 : vector<1x64xf32>
    %129 = vector.broadcast %117 : vector<1x64xf32> to vector<128x64xf32>
    %130 = arith.subf %109, %129 : vector<128x64xf32>
    %131 = vector.broadcast %110 : vector<1x64xf32> to vector<128x64xf32>
    %132 = arith.mulf %131, %130 : vector<128x64xf32>
    %cst_41 = arith.constant 9.99999974E-6 : f32
    %133 = vector.broadcast %cst_41 : f32 to vector<1x64xf32>
    %134 = arith.addf %128, %133 : vector<1x64xf32>
    %135 = math.rsqrt %134 : vector<1x64xf32>
    %136 = vector.broadcast %135 : vector<1x64xf32> to vector<128x64xf32>
    %137 = arith.mulf %132, %136 : vector<128x64xf32>
    %138 = vector.broadcast %111 : vector<1x64xf32> to vector<128x64xf32>
    %139 = arith.addf %137, %138 : vector<128x64xf32>
    %c96 = arith.constant 96 : index
    %c0_42 = arith.constant 0 : index
    %140 = vector.load %arg2[%c96, %c0_42] : memref<352x64xbf16, #tpu.memory_space<vmem>>, vector<192x64xbf16>
    %c2_i32_43 = arith.constant 2 : i32
    %141 = tpu.dynamic_rotate %139 by %c2_i32_43 dim 0 : vector<128x64xf32>, i32 -> vector<128x64xf32>
    %142 = vector.broadcast %14 : vector<128x1xf32> to vector<128x64xf32>
    %143 = arith.mulf %141, %142 : vector<128x64xf32>
    %c126_i32_44 = arith.constant 126 : i32
    %144 = tpu.dynamic_rotate %139 by %c126_i32_44 dim 0 : vector<128x64xf32>, i32 -> vector<128x64xf32>
    %145 = vector.broadcast %18 : vector<128x1xf32> to vector<128x64xf32>
    %146 = arith.mulf %144, %145 : vector<128x64xf32>
    %147 = tpu.concatenate %143, %139, %146 in 1 : vector<128x64xf32>, vector<128x64xf32>, vector<128x64xf32> -> vector<128x192xf32>
    %148 = arith.truncf %147 : vector<128x192xf32> to vector<128x192xbf16>
    %cst_45 = arith.constant dense<0.000000e+00> : vector<128x64xf32>
    %149 = tpu.matmul %148, %140, %cst_45 {dimension_numbers = #tpu.dot_dimension_numbers<[1], [0], [0], [1], [0, 0, 1, 1], [], []>} : vector<128x192xbf16>, vector<192x64xbf16>, vector<128x64xf32> -> vector<128x64xf32>
    %c2_46 = arith.constant 2 : index
    %c0_47 = arith.constant 0 : index
    %150 = vector.load %arg4[%c2_46, %c0_47] : memref<4x64xf32, #tpu.memory_space<vmem>>, vector<1x64xf32>
    %c3_48 = arith.constant 3 : index
    %c0_49 = arith.constant 0 : index
    %151 = vector.load %arg4[%c3_48, %c0_49] : memref<4x64xf32, #tpu.memory_space<vmem>>, vector<1x64xf32>
    %152 = vector.broadcast %24 : vector<128x1xf32> to vector<128x64xf32>
    %153 = arith.mulf %149, %152 : vector<128x64xf32>
    %cst_50 = arith.constant dense<0.000000e+00> : vector<64xf32>
    %154 = vector.multi_reduction <add>, %153, %cst_50 [0] : vector<128x64xf32> to vector<64xf32>
    %155 = vector.shape_cast %154 : vector<64xf32> to vector<1x64xf32>
    %cst_51 = arith.constant 1.562500e-02 : f32
    %156 = vector.broadcast %cst_51 : f32 to vector<1x64xf32>
    %157 = arith.mulf %155, %156 : vector<1x64xf32>
    %158 = arith.mulf %149, %149 : vector<128x64xf32>
    %159 = vector.broadcast %24 : vector<128x1xf32> to vector<128x64xf32>
    %160 = arith.mulf %158, %159 : vector<128x64xf32>
    %cst_52 = arith.constant dense<0.000000e+00> : vector<64xf32>
    %161 = vector.multi_reduction <add>, %160, %cst_52 [0] : vector<128x64xf32> to vector<64xf32>
    %162 = vector.shape_cast %161 : vector<64xf32> to vector<1x64xf32>
    %cst_53 = arith.constant 1.562500e-02 : f32
    %163 = vector.broadcast %cst_53 : f32 to vector<1x64xf32>
    %164 = arith.mulf %162, %163 : vector<1x64xf32>
    %165 = arith.mulf %157, %157 : vector<1x64xf32>
    %166 = arith.subf %164, %165 : vector<1x64xf32>
    %cst_54 = arith.constant 0.000000e+00 : f32
    %167 = vector.broadcast %cst_54 : f32 to vector<1x64xf32>
    %168 = arith.maximumf %166, %167 : vector<1x64xf32>
    %169 = vector.broadcast %157 : vector<1x64xf32> to vector<128x64xf32>
    %170 = arith.subf %149, %169 : vector<128x64xf32>
    %171 = vector.broadcast %150 : vector<1x64xf32> to vector<128x64xf32>
    %172 = arith.mulf %171, %170 : vector<128x64xf32>
    %cst_55 = arith.constant 9.99999974E-6 : f32
    %173 = vector.broadcast %cst_55 : f32 to vector<1x64xf32>
    %174 = arith.addf %168, %173 : vector<1x64xf32>
    %175 = math.rsqrt %174 : vector<1x64xf32>
    %176 = vector.broadcast %175 : vector<1x64xf32> to vector<128x64xf32>
    %177 = arith.mulf %172, %176 : vector<128x64xf32>
    %178 = vector.broadcast %151 : vector<1x64xf32> to vector<128x64xf32>
    %179 = arith.addf %177, %178 : vector<128x64xf32>
    %180 = arith.truncf %179 : vector<128x64xf32> to vector<128x64xbf16>
    %c288 = arith.constant 288 : index
    %c0_56 = arith.constant 0 : index
    %181 = vector.load %arg2[%c288, %c0_56] : memref<352x64xbf16, #tpu.memory_space<vmem>>, vector<64x64xbf16>
    %cst_57 = arith.constant dense<0.000000e+00> : vector<128x64xf32>
    %182 = tpu.matmul %180, %181, %cst_57 {dimension_numbers = #tpu.dot_dimension_numbers<[1], [0], [0], [1], [0, 0, 1, 1], [], []>} : vector<128x64xbf16>, vector<64x64xbf16>, vector<128x64xf32> -> vector<128x64xf32>
    %183 = vector.extract_strided_slice %182 {offsets = [0, 0], sizes = [128, 32], strides = [1, 1]} : vector<128x64xf32> to vector<128x32xf32>
    %184 = vector.broadcast %24 : vector<128x1xf32> to vector<128x32xf32>
    %185 = arith.mulf %184, %183 : vector<128x32xf32>
    %cst_58 = arith.constant 1.000000e+00 : f32
    %186 = vector.broadcast %cst_58 : f32 to vector<128x1xf32>
    %187 = arith.subf %186, %24 : vector<128x1xf32>
    %188 = vector.extract_strided_slice %182 {offsets = [0, 32], sizes = [128, 32], strides = [1, 1]} : vector<128x64xf32> to vector<128x32xf32>
    %c1_i32_59 = arith.constant 1 : i32
    %189 = tpu.dynamic_rotate %188 by %c1_i32_59 dim 0 : vector<128x32xf32>, i32 -> vector<128x32xf32>
    %190 = vector.broadcast %187 : vector<128x1xf32> to vector<128x32xf32>
    %191 = arith.mulf %190, %189 : vector<128x32xf32>
    %192 = arith.addf %185, %191 : vector<128x32xf32>
    %c4 = arith.constant 4 : index
    %c0_60 = arith.constant 0 : index
    %193 = vector.load %arg3[%c4, %c0_60] : memref<10x32xf32, #tpu.memory_space<vmem>>, vector<1x32xf32>
    %c5 = arith.constant 5 : index
    %c0_61 = arith.constant 0 : index
    %194 = vector.load %arg3[%c5, %c0_61] : memref<10x32xf32, #tpu.memory_space<vmem>>, vector<1x32xf32>
    %cst_62 = arith.constant dense<0.000000e+00> : vector<32xf32>
    %195 = vector.multi_reduction <add>, %192, %cst_62 [0] : vector<128x32xf32> to vector<32xf32>
    %196 = vector.shape_cast %195 : vector<32xf32> to vector<1x32xf32>
    %cst_63 = arith.constant 1.280000e+02 : f32
    %197 = vector.broadcast %cst_63 : f32 to vector<1x32xf32>
    %198 = arith.divf %196, %197 : vector<1x32xf32>
    %199 = arith.mulf %192, %192 : vector<128x32xf32>
    %cst_64 = arith.constant dense<0.000000e+00> : vector<32xf32>
    %200 = vector.multi_reduction <add>, %199, %cst_64 [0] : vector<128x32xf32> to vector<32xf32>
    %201 = vector.shape_cast %200 : vector<32xf32> to vector<1x32xf32>
    %cst_65 = arith.constant 1.280000e+02 : f32
    %202 = vector.broadcast %cst_65 : f32 to vector<1x32xf32>
    %203 = arith.divf %201, %202 : vector<1x32xf32>
    %204 = arith.mulf %198, %198 : vector<1x32xf32>
    %205 = arith.subf %203, %204 : vector<1x32xf32>
    %cst_66 = arith.constant 0.000000e+00 : f32
    %206 = vector.broadcast %cst_66 : f32 to vector<1x32xf32>
    %207 = arith.maximumf %205, %206 : vector<1x32xf32>
    %208 = vector.broadcast %198 : vector<1x32xf32> to vector<128x32xf32>
    %209 = arith.subf %192, %208 : vector<128x32xf32>
    %210 = vector.broadcast %193 : vector<1x32xf32> to vector<128x32xf32>
    %211 = arith.mulf %210, %209 : vector<128x32xf32>
    %cst_67 = arith.constant 9.99999974E-6 : f32
    %212 = vector.broadcast %cst_67 : f32 to vector<1x32xf32>
    %213 = arith.addf %207, %212 : vector<1x32xf32>
    %214 = math.rsqrt %213 : vector<1x32xf32>
    %215 = vector.broadcast %214 : vector<1x32xf32> to vector<128x32xf32>
    %216 = arith.mulf %211, %215 : vector<128x32xf32>
    %217 = vector.broadcast %194 : vector<1x32xf32> to vector<128x32xf32>
    %218 = arith.addf %216, %217 : vector<128x32xf32>
    %219 = tpu.concatenate %218, %97 in 1 : vector<128x32xf32>, vector<128x32xf32> -> vector<128x64xf32>
    %c144 = arith.constant 144 : index
    %c0_68 = arith.constant 0 : index
    %220 = vector.load %arg1[%c144, %c0_68] : memref<432x32xbf16, #tpu.memory_space<vmem>>, vector<192x32xbf16>
    %c1_i32_69 = arith.constant 1 : i32
    %221 = tpu.dynamic_rotate %219 by %c1_i32_69 dim 0 : vector<128x64xf32>, i32 -> vector<128x64xf32>
    %222 = vector.broadcast %6 : vector<128x1xf32> to vector<128x64xf32>
    %223 = arith.mulf %221, %222 : vector<128x64xf32>
    %c127_i32_70 = arith.constant 127 : i32
    %224 = tpu.dynamic_rotate %219 by %c127_i32_70 dim 0 : vector<128x64xf32>, i32 -> vector<128x64xf32>
    %225 = vector.broadcast %10 : vector<128x1xf32> to vector<128x64xf32>
    %226 = arith.mulf %224, %225 : vector<128x64xf32>
    %227 = tpu.concatenate %223, %219, %226 in 1 : vector<128x64xf32>, vector<128x64xf32>, vector<128x64xf32> -> vector<128x192xf32>
    %228 = arith.truncf %227 : vector<128x192xf32> to vector<128x192xbf16>
    %cst_71 = arith.constant dense<0.000000e+00> : vector<128x32xf32>
    %229 = tpu.matmul %228, %220, %cst_71 {dimension_numbers = #tpu.dot_dimension_numbers<[1], [0], [0], [1], [0, 0, 1, 1], [], []>} : vector<128x192xbf16>, vector<192x32xbf16>, vector<128x32xf32> -> vector<128x32xf32>
    %c6 = arith.constant 6 : index
    %c0_72 = arith.constant 0 : index
    %230 = vector.load %arg3[%c6, %c0_72] : memref<10x32xf32, #tpu.memory_space<vmem>>, vector<1x32xf32>
    %c7 = arith.constant 7 : index
    %c0_73 = arith.constant 0 : index
    %231 = vector.load %arg3[%c7, %c0_73] : memref<10x32xf32, #tpu.memory_space<vmem>>, vector<1x32xf32>
    %cst_74 = arith.constant dense<0.000000e+00> : vector<32xf32>
    %232 = vector.multi_reduction <add>, %229, %cst_74 [0] : vector<128x32xf32> to vector<32xf32>
    %233 = vector.shape_cast %232 : vector<32xf32> to vector<1x32xf32>
    %cst_75 = arith.constant 1.280000e+02 : f32
    %234 = vector.broadcast %cst_75 : f32 to vector<1x32xf32>
    %235 = arith.divf %233, %234 : vector<1x32xf32>
    %236 = arith.mulf %229, %229 : vector<128x32xf32>
    %cst_76 = arith.constant dense<0.000000e+00> : vector<32xf32>
    %237 = vector.multi_reduction <add>, %236, %cst_76 [0] : vector<128x32xf32> to vector<32xf32>
    %238 = vector.shape_cast %237 : vector<32xf32> to vector<1x32xf32>
    %cst_77 = arith.constant 1.280000e+02 : f32
    %239 = vector.broadcast %cst_77 : f32 to vector<1x32xf32>
    %240 = arith.divf %238, %239 : vector<1x32xf32>
    %241 = arith.mulf %235, %235 : vector<1x32xf32>
    %242 = arith.subf %240, %241 : vector<1x32xf32>
    %cst_78 = arith.constant 0.000000e+00 : f32
    %243 = vector.broadcast %cst_78 : f32 to vector<1x32xf32>
    %244 = arith.maximumf %242, %243 : vector<1x32xf32>
    %245 = vector.broadcast %235 : vector<1x32xf32> to vector<128x32xf32>
    %246 = arith.subf %229, %245 : vector<128x32xf32>
    %247 = vector.broadcast %230 : vector<1x32xf32> to vector<128x32xf32>
    %248 = arith.mulf %247, %246 : vector<128x32xf32>
    %cst_79 = arith.constant 9.99999974E-6 : f32
    %249 = vector.broadcast %cst_79 : f32 to vector<1x32xf32>
    %250 = arith.addf %244, %249 : vector<1x32xf32>
    %251 = math.rsqrt %250 : vector<1x32xf32>
    %252 = vector.broadcast %251 : vector<1x32xf32> to vector<128x32xf32>
    %253 = arith.mulf %248, %252 : vector<128x32xf32>
    %254 = vector.broadcast %231 : vector<1x32xf32> to vector<128x32xf32>
    %255 = arith.addf %253, %254 : vector<128x32xf32>
    %c336 = arith.constant 336 : index
    %c0_80 = arith.constant 0 : index
    %256 = vector.load %arg1[%c336, %c0_80] : memref<432x32xbf16, #tpu.memory_space<vmem>>, vector<96x32xbf16>
    %c1_i32_81 = arith.constant 1 : i32
    %257 = tpu.dynamic_rotate %255 by %c1_i32_81 dim 0 : vector<128x32xf32>, i32 -> vector<128x32xf32>
    %258 = vector.broadcast %6 : vector<128x1xf32> to vector<128x32xf32>
    %259 = arith.mulf %257, %258 : vector<128x32xf32>
    %c127_i32_82 = arith.constant 127 : i32
    %260 = tpu.dynamic_rotate %255 by %c127_i32_82 dim 0 : vector<128x32xf32>, i32 -> vector<128x32xf32>
    %261 = vector.broadcast %10 : vector<128x1xf32> to vector<128x32xf32>
    %262 = arith.mulf %260, %261 : vector<128x32xf32>
    %263 = tpu.concatenate %259, %255, %262 in 1 : vector<128x32xf32>, vector<128x32xf32>, vector<128x32xf32> -> vector<128x96xf32>
    %264 = arith.truncf %263 : vector<128x96xf32> to vector<128x96xbf16>
    %cst_83 = arith.constant dense<0.000000e+00> : vector<128x32xf32>
    %265 = tpu.matmul %264, %256, %cst_83 {dimension_numbers = #tpu.dot_dimension_numbers<[1], [0], [0], [1], [0, 0, 1, 1], [], []>} : vector<128x96xbf16>, vector<96x32xbf16>, vector<128x32xf32> -> vector<128x32xf32>
    %c8 = arith.constant 8 : index
    %c0_84 = arith.constant 0 : index
    %266 = vector.load %arg3[%c8, %c0_84] : memref<10x32xf32, #tpu.memory_space<vmem>>, vector<1x32xf32>
    %c9 = arith.constant 9 : index
    %c0_85 = arith.constant 0 : index
    %267 = vector.load %arg3[%c9, %c0_85] : memref<10x32xf32, #tpu.memory_space<vmem>>, vector<1x32xf32>
    %cst_86 = arith.constant dense<0.000000e+00> : vector<32xf32>
    %268 = vector.multi_reduction <add>, %265, %cst_86 [0] : vector<128x32xf32> to vector<32xf32>
    %269 = vector.shape_cast %268 : vector<32xf32> to vector<1x32xf32>
    %cst_87 = arith.constant 1.280000e+02 : f32
    %270 = vector.broadcast %cst_87 : f32 to vector<1x32xf32>
    %271 = arith.divf %269, %270 : vector<1x32xf32>
    %272 = arith.mulf %265, %265 : vector<128x32xf32>
    %cst_88 = arith.constant dense<0.000000e+00> : vector<32xf32>
    %273 = vector.multi_reduction <add>, %272, %cst_88 [0] : vector<128x32xf32> to vector<32xf32>
    %274 = vector.shape_cast %273 : vector<32xf32> to vector<1x32xf32>
    %cst_89 = arith.constant 1.280000e+02 : f32
    %275 = vector.broadcast %cst_89 : f32 to vector<1x32xf32>
    %276 = arith.divf %274, %275 : vector<1x32xf32>
    %277 = arith.mulf %271, %271 : vector<1x32xf32>
    %278 = arith.subf %276, %277 : vector<1x32xf32>
    %cst_90 = arith.constant 0.000000e+00 : f32
    %279 = vector.broadcast %cst_90 : f32 to vector<1x32xf32>
    %280 = arith.maximumf %278, %279 : vector<1x32xf32>
    %281 = vector.broadcast %271 : vector<1x32xf32> to vector<128x32xf32>
    %282 = arith.subf %265, %281 : vector<128x32xf32>
    %283 = vector.broadcast %266 : vector<1x32xf32> to vector<128x32xf32>
    %284 = arith.mulf %283, %282 : vector<128x32xf32>
    %cst_91 = arith.constant 9.99999974E-6 : f32
    %285 = vector.broadcast %cst_91 : f32 to vector<1x32xf32>
    %286 = arith.addf %280, %285 : vector<1x32xf32>
    %287 = math.rsqrt %286 : vector<1x32xf32>
    %288 = vector.broadcast %287 : vector<1x32xf32> to vector<128x32xf32>
    %289 = arith.mulf %284, %288 : vector<128x32xf32>
    %290 = vector.broadcast %267 : vector<1x32xf32> to vector<128x32xf32>
    %291 = arith.addf %289, %290 : vector<128x32xf32>
    %c0_92 = arith.constant 0 : index
    %c0_93 = arith.constant 0 : index
    %292 = vector.load %arg5[%c0_92, %c0_93] : memref<4x128xbf16, #tpu.memory_space<vmem>>, vector<4x128xbf16>
    %293 = arith.truncf %291 : vector<128x32xf32> to vector<128x32xbf16>
    %cst_94 = arith.constant dense<0.000000e+00> : vector<4x32xf32>
    %294 = tpu.matmul %292, %293, %cst_94 {dimension_numbers = #tpu.dot_dimension_numbers<[1], [0], [0], [1], [0, 0, 1, 1], [], []>} : vector<4x128xbf16>, vector<128x32xbf16>, vector<4x32xf32> -> vector<4x32xf32>
    %c0_95 = arith.constant 0 : index
    %c0_96 = arith.constant 0 : index
    %295 = vector.load %arg6[%c0_95, %c0_96] : memref<2x32xf32, #tpu.memory_space<vmem>>, vector<1x32xf32>
    %296 = vector.broadcast %295 : vector<1x32xf32> to vector<4x32xf32>
    %297 = arith.mulf %294, %296 : vector<4x32xf32>
    %cst_97 = arith.constant dense<0.000000e+00> : vector<4xf32>
    %298 = vector.multi_reduction <add>, %297, %cst_97 [1] : vector<4x32xf32> to vector<4xf32>
    %299 = vector.shape_cast %298 : vector<4xf32> to vector<4x1xf32>
    %c1_98 = arith.constant 1 : index
    %c0_99 = arith.constant 0 : index
    %300 = vector.load %arg6[%c1_98, %c0_99] : memref<2x32xf32, #tpu.memory_space<vmem>>, vector<1x1xf32>
    %301 = vector.broadcast %300 : vector<1x1xf32> to vector<4x1xf32>
    %302 = arith.addf %299, %301 : vector<4x1xf32>
    %c0_100 = arith.constant 0 : index
    %c0_101 = arith.constant 0 : index
    %303 = vector.load %arg7[%c0_100, %c0_101] : memref<4x1xf32, #tpu.memory_space<vmem>>, vector<4x1xf32>
    tpu.vector_store %arg7[%c0_100, %c0_101], %302 {strides = array<i32>} : memref<4x1xf32, #tpu.memory_space<vmem>>, vector<4x1xf32>,
    return
  }
}

</mosaic_0001>

<llo_original>
// kernel: tpu_custom_call.1
$region0: #{tpu_custom_call.1}
  #allocation0 [shape = 'u32[]', space=smem, size = 0x4, offset = 0x4, fixed_abs, tag = 'smem constant byte address 0x4 - core index']
  #allocation1 [shape = 'u32[72,128]{1,0:T(1,128)}', space=vmem, size = 0x9000, scoped, tag = 'internal scratch']
  %s0 = inlined_call_operand.vmem [shape: f32[128,16], index: 0, kind: input, shape index: {}]
  %s1 = inlined_call_operand.vmem [shape: bf16[432,32], index: 1, kind: input, shape index: {}]
  %s2 = inlined_call_operand.vmem [shape: bf16[352,64], index: 2, kind: input, shape index: {}]
  %s3 = inlined_call_operand.vmem [shape: f32[10,32], index: 3, kind: input, shape index: {}]
  %s4 = inlined_call_operand.vmem [shape: f32[4,64], index: 4, kind: input, shape index: {}]
  %s5 = inlined_call_operand.vmem [shape: bf16[4,128], index: 5, kind: input, shape index: {}]
  %s6 = inlined_call_operand.vmem [shape: f32[2,32], index: 6, kind: input, shape index: {}]
  %s7 = inlined_call_operand.vmem [shape: f32[4,1], index: 7, kind: output, shape index: {}]
  %s8 = sld [smem:[#allocation0]]
  $region38: #{tpu_custom_call.1} parent=0
    _
  %s10 = ssub.s32 1, %s8
  %s11 = scalar_select 0, %s10, %s8
  // Predicated region
  $region2: #{tpu_custom_call.1} parent=0 // pred_check
    _
  $region3: #{tpu_custom_call.1} parent=0 // pred_check_branch
    %13 = sbr.rel (0) target = $region5
  $region4: #{tpu_custom_call.1} parent=0 // pred_region
    _
  $region5: #{tpu_custom_call.1} parent=0 // pred_fallthru
    _
  // Predicated region
  $region6: #{tpu_custom_call.1} parent=0 // pred_check
    _
  $region7: #{tpu_custom_call.1} parent=0 // pred_check_branch
    %15 = sbr.rel (0) target = $region9
  $region8: #{tpu_custom_call.1} parent=0 // pred_region
    _
  $region9: #{tpu_custom_call.1} parent=0 // pred_fallthru
    _
  // Predicated region
  $region10: #{tpu_custom_call.1} parent=0 // pred_check
    _
  $region11: #{tpu_custom_call.1} parent=0 // pred_check_branch
    %17 = sbr.rel (0) target = $region13
  $region12: #{tpu_custom_call.1} parent=0 // pred_region
    _
  $region13: #{tpu_custom_call.1} parent=0 // pred_fallthru
    _
  // Predicated region
  $region14: #{tpu_custom_call.1} parent=0 // pred_check
    _
  $region15: #{tpu_custom_call.1} parent=0 // pred_check_branch
    %19 = sbr.rel (0) target = $region17
  $region16: #{tpu_custom_call.1} parent=0 // pred_region
    _
  $region17: #{tpu_custom_call.1} parent=0 // pred_fallthru
    _
  // Predicated region
  $region18: #{tpu_custom_call.1} parent=0 // pred_check
    _
  $region19: #{tpu_custom_call.1} parent=0 // pred_check_branch
    %21 = sbr.rel (0) target = $region21
  $region20: #{tpu_custom_call.1} parent=0 // pred_region
    _
  $region21: #{tpu_custom_call.1} parent=0 // pred_fallthru
    _
  // Predicated region
  $region22: #{tpu_custom_call.1} parent=0 // pred_check
    _
  $region23: #{tpu_custom_call.1} parent=0 // pred_check_branch
    %23 = sbr.rel (0) target = $region25
  $region24: #{tpu_custom_call.1} parent=0 // pred_region
    _
  $region25: #{tpu_custom_call.1} parent=0 // pred_fallthru
    _
  // Predicated region
  $region26: #{tpu_custom_call.1} parent=0 // pred_check
    _
  $region27: #{tpu_custom_call.1} parent=0 // pred_check_branch
    %25 = sbr.rel (0) target = $region29
  $region28: #{tpu_custom_call.1} parent=0 // pred_region
    _
  $region29: #{tpu_custom_call.1} parent=0 // pred_fallthru
    _
  %v27 = vlaneseq
  %v28 = vshrl.u32 %v27, 7
  %v29 = vadd.s32 %v28, 8
  %v30 = vadd.s32 %v28, 16
  %v31 = vadd.s32 %v28, 24
  %v32 = vadd.s32 %v28, 32
  %v33 = vadd.s32 %v28, 40
  %v34 = vadd.s32 %v28, 48
  %v35 = vadd.s32 %v28, 56
  %v36 = vadd.s32 %v28, 64
  %v37 = vadd.s32 %v28, 72
  %v38 = vadd.s32 %v28, 80
  %v39 = vadd.s32 %v28, 88
  %v40 = vadd.s32 %v28, 96
  %v41 = vadd.s32 %v28, 104
  %v42 = vadd.s32 %v28, 112
  %v43 = vadd.s32 %v28, 120
  %v44 = vand.u32 %v28, 31
  %v45 = vand.u32 %v29, 31
  %v46 = vand.u32 %v30, 31
  %v47 = vand.u32 %v31, 31
  %v48 = vand.u32 %v32, 31
  %v49 = vand.u32 %v33, 31
  %v50 = vand.u32 %v34, 31
  %v51 = vand.u32 %v35, 31
  %v52 = vand.u32 %v36, 31
  %v53 = vand.u32 %v37, 31
  %v54 = vand.u32 %v38, 31
  %v55 = vand.u32 %v39, 31
  %v56 = vand.u32 %v40, 31
  %v57 = vand.u32 %v41, 31
  %v58 = vand.u32 %v42, 31
  %v59 = vand.u32 %v43, 31
  %vm60 = vcmp.ge.s32.totalorder %v44, 1
  %vm61 = vcmp.ge.s32.totalorder %v45, 1
  %vm62 = vcmp.ge.s32.totalorder %v46, 1
  %vm63 = vcmp.ge.s32.totalorder %v47, 1
  %vm64 = vcmp.ge.s32.totalorder %v48, 1
  %vm65 = vcmp.ge.s32.totalorder %v49, 1
  %vm66 = vcmp.ge.s32.totalorder %v50, 1
  %vm67 = vcmp.ge.s32.totalorder %v51, 1
  %vm68 = vcmp.ge.s32.totalorder %v52, 1
  %vm69 = vcmp.ge.s32.totalorder %v53, 1
  %vm70 = vcmp.ge.s32.totalorder %v54, 1
  %vm71 = vcmp.ge.s32.totalorder %v55, 1
  %vm72 = vcmp.ge.s32.totalorder %v56, 1
  %vm73 = vcmp.ge.s32.totalorder %v57, 1
  %vm74 = vcmp.ge.s32.totalorder %v58, 1
  %vm75 = vcmp.ge.s32.totalorder %v59, 1
  %v76 = vsel %vm60, 1, 0
  %v77 = vsel %vm61, 1, 0
  %v78 = vsel %vm62, 1, 0
  %v79 = vsel %vm63, 1, 0
  %v80 = vsel %vm64, 1, 0
  %v81 = vsel %vm65, 1, 0
  %v82 = vsel %vm66, 1, 0
  %v83 = vsel %vm67, 1, 0
  %v84 = vsel %vm68, 1, 0
  %v85 = vsel %vm69, 1, 0
  %v86 = vsel %vm70, 1, 0
  %v87 = vsel %vm71, 1, 0
  %v88 = vsel %vm72, 1, 0
  %v89 = vsel %vm73, 1, 0
  %v90 = vsel %vm74, 1, 0
  %v91 = vsel %vm75, 1, 0
  %v92 = vcvt.s32.f32 %v76
  %v93 = vcvt.s32.f32 %v77
  %v94 = vcvt.s32.f32 %v78
  %v95 = vcvt.s32.f32 %v79
  %v96 = vcvt.s32.f32 %v80
  %v97 = vcvt.s32.f32 %v81
  %v98 = vcvt.s32.f32 %v82
  %v99 = vcvt.s32.f32 %v83
  %v100 = vcvt.s32.f32 %v84
  %v101 = vcvt.s32.f32 %v85
  %v102 = vcvt.s32.f32 %v86
  %v103 = vcvt.s32.f32 %v87
  %v104 = vcvt.s32.f32 %v88
  %v105 = vcvt.s32.f32 %v89
  %v106 = vcvt.s32.f32 %v90
  %v107 = vcvt.s32.f32 %v91
  %vm108 = vcmp.lt.s32.totalorder %v44, 31
  %vm109 = vcmp.lt.s32.totalorder %v45, 31
  %vm110 = vcmp.lt.s32.totalorder %v46, 31
  %vm111 = vcmp.lt.s32.totalorder %v47, 31
  %vm112 = vcmp.lt.s32.totalorder %v48, 31
  %vm113 = vcmp.lt.s32.totalorder %v49, 31
  %vm114 = vcmp.lt.s32.totalorder %v50, 31
  %vm115 = vcmp.lt.s32.totalorder %v51, 31
  %vm116 = vcmp.lt.s32.totalorder %v52, 31
  %vm117 = vcmp.lt.s32.totalorder %v53, 31
  %vm118 = vcmp.lt.s32.totalorder %v54, 31
  %vm119 = vcmp.lt.s32.totalorder %v55, 31
  %vm120 = vcmp.lt.s32.totalorder %v56, 31
  %vm121 = vcmp.lt.s32.totalorder %v57, 31
  %vm122 = vcmp.lt.s32.totalorder %v58, 31
  %vm123 = vcmp.lt.s32.totalorder %v59, 31
  %v124 = vsel %vm108, 1, 0
  %v125 = vsel %vm109, 1, 0
  %v126 = vsel %vm110, 1, 0
  %v127 = vsel %vm111, 1, 0
  %v128 = vsel %vm112, 1, 0
  %v129 = vsel %vm113, 1, 0
  %v130 = vsel %vm114, 1, 0
  %v131 = vsel %vm115, 1, 0
  %v132 = vsel %vm116, 1, 0
  %v133 = vsel %vm117, 1, 0
  %v134 = vsel %vm118, 1, 0
  %v135 = vsel %vm119, 1, 0
  %v136 = vsel %vm120, 1, 0
  %v137 = vsel %vm121, 1, 0
  %v138 = vsel %vm122, 1, 0
  %v139 = vsel %vm123, 1, 0
  %v140 = vcvt.s32.f32 %v124
  %v141 = vcvt.s32.f32 %v125
  %v142 = vcvt.s32.f32 %v126
  %v143 = vcvt.s32.f32 %v127
  %v144 = vcvt.s32.f32 %v128
  %v145 = vcvt.s32.f32 %v129
  %v146 = vcvt.s32.f32 %v130
  %v147 = vcvt.s32.f32 %v131
  %v148 = vcvt.s32.f32 %v132
  %v149 = vcvt.s32.f32 %v133
  %v150 = vcvt.s32.f32 %v134
  %v151 = vcvt.s32.f32 %v135
  %v152 = vcvt.s32.f32 %v136
  %v153 = vcvt.s32.f32 %v137
  %v154 = vcvt.s32.f32 %v138
  %v155 = vcvt.s32.f32 %v139
  %vm156 = vcmp.ge.s32.totalorder %v44, 2
  %vm157 = vcmp.ge.s32.totalorder %v45, 2
  %vm158 = vcmp.ge.s32.totalorder %v46, 2
  %vm159 = vcmp.ge.s32.totalorder %v47, 2
  %vm160 = vcmp.ge.s32.totalorder %v48, 2
  %vm161 = vcmp.ge.s32.totalorder %v49, 2
  %vm162 = vcmp.ge.s32.totalorder %v50, 2
  %vm163 = vcmp.ge.s32.totalorder %v51, 2
  %vm164 = vcmp.ge.s32.totalorder %v52, 2
  %vm165 = vcmp.ge.s32.totalorder %v53, 2
  %vm166 = vcmp.ge.s32.totalorder %v54, 2
  %vm167 = vcmp.ge.s32.totalorder %v55, 2
  %vm168 = vcmp.ge.s32.totalorder %v56, 2
  %vm169 = vcmp.ge.s32.totalorder %v57, 2
  %vm170 = vcmp.ge.s32.totalorder %v58, 2
  %vm171 = vcmp.ge.s32.totalorder %v59, 2
  %v172 = vsel %vm156, 1, 0
  %v173 = vsel %vm157, 1, 0
  %v174 = vsel %vm158, 1, 0
  %v175 = vsel %vm159, 1, 0
  %v176 = vsel %vm160, 1, 0
  %v177 = vsel %vm161, 1, 0
  %v178 = vsel %vm162, 1, 0
  %v179 = vsel %vm163, 1, 0
  %v180 = vsel %vm164, 1, 0
  %v181 = vsel %vm165, 1, 0
  %v182 = vsel %vm166, 1, 0
  %v183 = vsel %vm167, 1, 0
  %v184 = vsel %vm168, 1, 0
  %v185 = vsel %vm169, 1, 0
  %v186 = vsel %vm170, 1, 0
  %v187 = vsel %vm171, 1, 0
  %v188 = vcvt.s32.f32 %v172
  %v189 = vcvt.s32.f32 %v173
  %v190 = vcvt.s32.f32 %v174
  %v191 = vcvt.s32.f32 %v175
  %v192 = vcvt.s32.f32 %v176
  %v193 = vcvt.s32.f32 %v177
  %v194 = vcvt.s32.f32 %v178
  %v195 = vcvt.s32.f32 %v179
  %v196 = vcvt.s32.f32 %v180
  %v197 = vcvt.s32.f32 %v181
  %v198 = vcvt.s32.f32 %v182
  %v199 = vcvt.s32.f32 %v183
  %v200 = vcvt.s32.f32 %v184
  %v201 = vcvt.s32.f32 %v185
  %v202 = vcvt.s32.f32 %v186
  %v203 = vcvt.s32.f32 %v187
  %vm204 = vcmp.lt.s32.totalorder %v44, 30
  %vm205 = vcmp.lt.s32.totalorder %v45, 30
  %vm206 = vcmp.lt.s32.totalorder %v46, 30
  %vm207 = vcmp.lt.s32.totalorder %v47, 30
  %vm208 = vcmp.lt.s32.totalorder %v48, 30
  %vm209 = vcmp.lt.s32.totalorder %v49, 30
  %vm210 = vcmp.lt.s32.totalorder %v50, 30
  %vm211 = vcmp.lt.s32.totalorder %v51, 30
  %vm212 = vcmp.lt.s32.totalorder %v52, 30
  %vm213 = vcmp.lt.s32.totalorder %v53, 30
  %vm214 = vcmp.lt.s32.totalorder %v54, 30
  %vm215 = vcmp.lt.s32.totalorder %v55, 30
  %vm216 = vcmp.lt.s32.totalorder %v56, 30
  %vm217 = vcmp.lt.s32.totalorder %v57, 30
  %vm218 = vcmp.lt.s32.totalorder %v58, 30
  %vm219 = vcmp.lt.s32.totalorder %v59, 30
  %v220 = vsel %vm204, 1, 0
  %v221 = vsel %vm205, 1, 0
  %v222 = vsel %vm206, 1, 0
  %v223 = vsel %vm207, 1, 0
  %v224 = vsel %vm208, 1, 0
  %v225 = vsel %vm209, 1, 0
  %v226 = vsel %vm210, 1, 0
  %v227 = vsel %vm211, 1, 0
  %v228 = vsel %vm212, 1, 0
  %v229 = vsel %vm213, 1, 0
  %v230 = vsel %vm214, 1, 0
  %v231 = vsel %vm215, 1, 0
  %v232 = vsel %vm216, 1, 0
  %v233 = vsel %vm217, 1, 0
  %v234 = vsel %vm218, 1, 0
  %v235 = vsel %vm219, 1, 0
  %v236 = vcvt.s32.f32 %v220
  %v237 = vcvt.s32.f32 %v221
  %v238 = vcvt.s32.f32 %v222
  %v239 = vcvt.s32.f32 %v223
  %v240 = vcvt.s32.f32 %v224
  %v241 = vcvt.s32.f32 %v225
  %v242 = vcvt.s32.f32 %v226
  %v243 = vcvt.s32.f32 %v227
  %v244 = vcvt.s32.f32 %v228
  %v245 = vcvt.s32.f32 %v229
  %v246 = vcvt.s32.f32 %v230
  %v247 = vcvt.s32.f32 %v231
  %v248 = vcvt.s32.f32 %v232
  %v249 = vcvt.s32.f32 %v233
  %v250 = vcvt.s32.f32 %v234
  %v251 = vcvt.s32.f32 %v235
  %v252 = vand.u32 %v28, 1
  %v253 = vand.u32 %v29, 1
  %v254 = vand.u32 %v30, 1
  %v255 = vand.u32 %v31, 1
  %v256 = vand.u32 %v32, 1
  %v257 = vand.u32 %v33, 1
  %v258 = vand.u32 %v34, 1
  %v259 = vand.u32 %v35, 1
  %v260 = vand.u32 %v36, 1
  %v261 = vand.u32 %v37, 1
  %v262 = vand.u32 %v38, 1
  %v263 = vand.u32 %v39, 1
  %v264 = vand.u32 %v40, 1
  %v265 = vand.u32 %v41, 1
  %v266 = vand.u32 %v42, 1
  %v267 = vand.u32 %v43, 1
  %vm268 = vcmp.eq.s32.totalorder %v252, 0
  %vm269 = vcmp.eq.s32.totalorder %v253, 0
  %vm270 = vcmp.eq.s32.totalorder %v254, 0
  %vm271 = vcmp.eq.s32.totalorder %v255, 0
  %vm272 = vcmp.eq.s32.totalorder %v256, 0
  %vm273 = vcmp.eq.s32.totalorder %v257, 0
  %vm274 = vcmp.eq.s32.totalorder %v258, 0
  %vm275 = vcmp.eq.s32.totalorder %v259, 0
  %vm276 = vcmp.eq.s32.totalorder %v260, 0
  %vm277 = vcmp.eq.s32.totalorder %v261, 0
  %vm278 = vcmp.eq.s32.totalorder %v262, 0
  %vm279 = vcmp.eq.s32.totalorder %v263, 0
  %vm280 = vcmp.eq.s32.totalorder %v264, 0
  %vm281 = vcmp.eq.s32.totalorder %v265, 0
  %vm282 = vcmp.eq.s32.totalorder %v266, 0
  %vm283 = vcmp.eq.s32.totalorder %v267, 0
  %v284 = vsel %vm268, 1, 0
  %v285 = vsel %vm269, 1, 0
  %v286 = vsel %vm270, 1, 0
  %v287 = vsel %vm271, 1, 0
  %v288 = vsel %vm272, 1, 0
  %v289 = vsel %vm273, 1, 0
  %v290 = vsel %vm274, 1, 0
  %v291 = vsel %vm275, 1, 0
  %v292 = vsel %vm276, 1, 0
  %v293 = vsel %vm277, 1, 0
  %v294 = vsel %vm278, 1, 0
  %v295 = vsel %vm279, 1, 0
  %v296 = vsel %vm280, 1, 0
  %v297 = vsel %vm281, 1, 0
  %v298 = vsel %vm282, 1, 0
  %v299 = vsel %vm283, 1, 0
  %v300 = vcvt.s32.f32 %v284
  %v301 = vcvt.s32.f32 %v285
  %v302 = vcvt.s32.f32 %v286
  %v303 = vcvt.s32.f32 %v287
  %v304 = vcvt.s32.f32 %v288
  %v305 = vcvt.s32.f32 %v289
  %v306 = vcvt.s32.f32 %v290
  %v307 = vcvt.s32.f32 %v291
  %v308 = vcvt.s32.f32 %v292
  %v309 = vcvt.s32.f32 %v293
  %v310 = vcvt.s32.f32 %v294
  %v311 = vcvt.s32.f32 %v295
  %v312 = vcvt.s32.f32 %v296
  %v313 = vcvt.s32.f32 %v297
  %v314 = vcvt.s32.f32 %v298
  %v315 = vcvt.s32.f32 %v299
  %v316 = vld [vmem:[%s0] sm:$0xff]
  %v317 = vld [vmem:[%s0 + $0x8] sm:$0xff]
  %v318 = vld [vmem:[%s0 + $0x10] sm:$0xff]
  %v319 = vld [vmem:[%s0 + $0x18] sm:$0xff]
  %v320 = vld [vmem:[%s0 + $0x20] sm:$0xff]
  %v321 = vld [vmem:[%s0 + $0x28] sm:$0xff]
  %v322 = vld [vmem:[%s0 + $0x30] sm:$0xff]
  %v323 = vld [vmem:[%s0 + $0x38] sm:$0xff]
  %v324 = vld [vmem:[%s0 + $0x40] sm:$0xff]
  %v325 = vld [vmem:[%s0 + $0x48] sm:$0xff]
  %v326 = vld [vmem:[%s0 + $0x50] sm:$0xff]
  %v327 = vld [vmem:[%s0 + $0x58] sm:$0xff]
  %v328 = vld [vmem:[%s0 + $0x60] sm:$0xff]
  %v329 = vld [vmem:[%s0 + $0x68] sm:$0xff]
  %v330 = vld [vmem:[%s0 + $0x70] sm:$0xff]
  %v331 = vld [vmem:[%s0 + $0x78] sm:$0xff]
  %v332 = vld [vmem:[%s1] sm:$0xf]
  %v333 = vld [vmem:[%s1 + $0x4] sm:$0xf]
  %v334 = vld [vmem:[%s1 + $0x8] sm:$0xf]
  %v335 = vld [vmem:[%s1 + $0xc] sm:$0xf]
  %v336 = vld [vmem:[%s1 + $0x10] sm:$0xf]
  %v337 = vld [vmem:[%s1 + $0x14] sm:$0xf]
  %v338 = vrot.slane %v316, 7
  %v339 = vrot.slane %v317, 7
  %v340 = vrot.slane %v318, 7
  %v341 = vrot.slane %v319, 7
  %v342 = vrot.slane %v320, 7
  %v343 = vrot.slane %v321, 7
  %v344 = vrot.slane %v322, 7
  %v345 = vrot.slane %v323, 7
  %v346 = vrot.slane %v324, 7
  %v347 = vrot.slane %v325, 7
  %v348 = vrot.slane %v326, 7
  %v349 = vrot.slane %v327, 7
  %v350 = vrot.slane %v328, 7
  %v351 = vrot.slane %v329, 7
  %v352 = vrot.slane %v330, 7
  %v353 = vrot.slane %v331, 7
  %vm354 = vcmp.lt.s32.totalorder %v28, 1
  %v355 = vsel %vm354, %v352, %v353
  %v356 = vsel %vm354, %v351, %v352
  %v357 = vsel %vm354, %v350, %v351
  %v358 = vsel %vm354, %v349, %v350
  %v359 = vsel %vm354, %v348, %v349
  %v360 = vsel %vm354, %v347, %v348
  %v361 = vsel %vm354, %v346, %v347
  %v362 = vsel %vm354, %v345, %v346
  %v363 = vsel %vm354, %v344, %v345
  %v364 = vsel %vm354, %v343, %v344
  %v365 = vsel %vm354, %v342, %v343
  %v366 = vsel %vm354, %v341, %v342
  %v367 = vsel %vm354, %v340, %v341
  %v368 = vsel %vm354, %v339, %v340
  %v369 = vsel %vm354, %v338, %v339
  %v370 = vsel %vm354, %v353, %v338
  %v371 = vmul.f32 %v370, %v92
  %v372 = vmul.f32 %v369, %v93
  %v373 = vmul.f32 %v368, %v94
  %v374 = vmul.f32 %v367, %v95
  %v375 = vmul.f32 %v366, %v96
  %v376 = vmul.f32 %v365, %v97
  %v377 = vmul.f32 %v364, %v98
  %v378 = vmul.f32 %v363, %v99
  %v379 = vmul.f32 %v362, %v100
  %v380 = vmul.f32 %v361, %v101
  %v381 = vmul.f32 %v360, %v102
  %v382 = vmul.f32 %v359, %v103
  %v383 = vmul.f32 %v358, %v104
  %v384 = vmul.f32 %v357, %v105
  %v385 = vmul.f32 %v356, %v106
  %v386 = vmul.f32 %v355, %v107
  %v387 = vrot.slane %v316, 1
  %v388 = vrot.slane %v317, 1
  %v389 = vrot.slane %v318, 1
  %v390 = vrot.slane %v319, 1
  %v391 = vrot.slane %v320, 1
  %v392 = vrot.slane %v321, 1
  %v393 = vrot.slane %v322, 1
  %v394 = vrot.slane %v323, 1
  %v395 = vrot.slane %v324, 1
  %v396 = vrot.slane %v325, 1
  %v397 = vrot.slane %v326, 1
  %v398 = vrot.slane %v327, 1
  %v399 = vrot.slane %v328, 1
  %v400 = vrot.slane %v329, 1
  %v401 = vrot.slane %v330, 1
  %v402 = vrot.slane %v331, 1
  %vm403 = vcmp.lt.s32.totalorder %v28, 7
  %v404 = vsel %vm403, %v401, %v402
  %v405 = vsel %vm403, %v400, %v401
  %v406 = vsel %vm403, %v399, %v400
  %v407 = vsel %vm403, %v398, %v399
  %v408 = vsel %vm403, %v397, %v398
  %v409 = vsel %vm403, %v396, %v397
  %v410 = vsel %vm403, %v395, %v396
  %v411 = vsel %vm403, %v394, %v395
  %v412 = vsel %vm403, %v393, %v394
  %v413 = vsel %vm403, %v392, %v393
  %v414 = vsel %vm403, %v391, %v392
  %v415 = vsel %vm403, %v390, %v391
  %v416 = vsel %vm403, %v389, %v390
  %v417 = vsel %vm403, %v388, %v389
  %v418 = vsel %vm403, %v387, %v388
  %v419 = vsel %vm403, %v402, %v387
  %v420 = vmul.f32 %v418, %v140
  %v421 = vmul.f32 %v417, %v141
  %v422 = vmul.f32 %v416, %v142
  %v423 = vmul.f32 %v415, %v143
  %v424 = vmul.f32 %v414, %v144
  %v425 = vmul.f32 %v413, %v145
  %v426 = vmul.f32 %v412, %v146
  %v427 = vmul.f32 %v411, %v147
  %v428 = vmul.f32 %v410, %v148
  %v429 = vmul.f32 %v409, %v149
  %v430 = vmul.f32 %v408, %v150
  %v431 = vmul.f32 %v407, %v151
  %v432 = vmul.f32 %v406, %v152
  %v433 = vmul.f32 %v405, %v153
  %v434 = vmul.f32 %v404, %v154
  %v435 = vmul.f32 %v419, %v155
  %452 = vrot.lane.b32.xlu0 %v316, 16
  %v453 = vpop.permute.xlu0 %452
  %454 = vrot.lane.b32.xlu0 %v317, 16
  %v455 = vpop.permute.xlu0 %454
  %456 = vrot.lane.b32.xlu0 %v318, 16
  %v457 = vpop.permute.xlu0 %456
  %458 = vrot.lane.b32.xlu0 %v319, 16
  %v459 = vpop.permute.xlu0 %458
  %460 = vrot.lane.b32.xlu0 %v320, 16
  %v461 = vpop.permute.xlu0 %460
  %462 = vrot.lane.b32.xlu0 %v321, 16
  %v463 = vpop.permute.xlu0 %462
  %464 = vrot.lane.b32.xlu0 %v322, 16
  %v465 = vpop.permute.xlu0 %464
  %466 = vrot.lane.b32.xlu0 %v323, 16
  %v467 = vpop.permute.xlu0 %466
  %468 = vrot.lane.b32.xlu0 %v324, 16
  %v469 = vpop.permute.xlu0 %468
  %470 = vrot.lane.b32.xlu0 %v325, 16
  %v471 = vpop.permute.xlu0 %470
  %472 = vrot.lane.b32.xlu0 %v326, 16
  %v473 = vpop.permute.xlu0 %472
  %474 = vrot.lane.b32.xlu0 %v327, 16
  %v475 = vpop.permute.xlu0 %474
  %476 = vrot.lane.b32.xlu0 %v328, 16
  %v477 = vpop.permute.xlu0 %476
  %478 = vrot.lane.b32.xlu0 %v329, 16
  %v479 = vpop.permute.xlu0 %478
  %480 = vrot.lane.b32.xlu0 %v330, 16
  %v481 = vpop.permute.xlu0 %480
  %482 = vrot.lane.b32.xlu0 %v331, 16
  %v483 = vpop.permute.xlu0 %482
  %516 = vrot.lane.b32.xlu0 %v420, 32
  %v517 = vpop.permute.xlu0 %516
  %518 = vrot.lane.b32.xlu0 %v421, 32
  %v519 = vpop.permute.xlu0 %518
  %520 = vrot.lane.b32.xlu0 %v422, 32
  %v521 = vpop.permute.xlu0 %520
  %522 = vrot.lane.b32.xlu0 %v423, 32
  %v523 = vpop.permute.xlu0 %522
  %524 = vrot.lane.b32.xlu0 %v424, 32
  %v525 = vpop.permute.xlu0 %524
  %526 = vrot.lane.b32.xlu0 %v425, 32
  %v527 = vpop.permute.xlu0 %526
  %528 = vrot.lane.b32.xlu0 %v426, 32
  %v529 = vpop.permute.xlu0 %528
  %530 = vrot.lane.b32.xlu0 %v427, 32
  %v531 = vpop.permute.xlu0 %530
  %532 = vrot.lane.b32.xlu0 %v428, 32
  %v533 = vpop.permute.xlu0 %532
  %534 = vrot.lane.b32.xlu0 %v429, 32
  %v535 = vpop.permute.xlu0 %534
  %536 = vrot.lane.b32.xlu0 %v430, 32
  %v537 = vpop.permute.xlu0 %536
  %538 = vrot.lane.b32.xlu0 %v431, 32
  %v539 = vpop.permute.xlu0 %538
  %540 = vrot.lane.b32.xlu0 %v432, 32
  %v541 = vpop.permute.xlu0 %540
  %542 = vrot.lane.b32.xlu0 %v433, 32
  %v543 = vpop.permute.xlu0 %542
  %544 = vrot.lane.b32.xlu0 %v434, 32
  %v545 = vpop.permute.xlu0 %544
  %546 = vrot.lane.b32.xlu0 %v435, 32
  %v547 = vpop.permute.xlu0 %546
  %vm564 = vcmask 130048
  %v565 = vsel %vm564, %v371, %v453
  %v566 = vsel %vm564, %v372, %v455
  %v567 = vsel %vm564, %v373, %v457
  %v568 = vsel %vm564, %v374, %v459
  %v569 = vsel %vm564, %v375, %v461
  %v570 = vsel %vm564, %v376, %v463
  %v571 = vsel %vm564, %v377, %v465
  %v572 = vsel %vm564, %v378, %v467
  %v573 = vsel %vm564, %v379, %v469
  %v574 = vsel %vm564, %v380, %v471
  %v575 = vsel %vm564, %v381, %v473
  %v576 = vsel %vm564, %v382, %v475
  %v577 = vsel %vm564, %v383, %v477
  %v578 = vsel %vm564, %v384, %v479
  %v579 = vsel %vm564, %v385, %v481
  %v580 = vsel %vm564, %v386, %v483
  %vm581 = vcmask 261120
  %v582 = vsel %vm581, %v565, %v517
  %v583 = vsel %vm581, %v566, %v519
  %v584 = vsel %vm581, %v567, %v521
  %v585 = vsel %vm581, %v568, %v523
  %v586 = vsel %vm581, %v569, %v525
  %v587 = vsel %vm581, %v570, %v527
  %v588 = vsel %vm581, %v571, %v529
  %v589 = vsel %vm581, %v572, %v531
  %v590 = vsel %vm581, %v573, %v533
  %v591 = vsel %vm581, %v574, %v535
  %v592 = vsel %vm581, %v575, %v537
  %v593 = vsel %vm581, %v576, %v539
  %v594 = vsel %vm581, %v577, %v541
  %v595 = vsel %vm581, %v578, %v543
  %v596 = vsel %vm581, %v579, %v545
  %v597 = vsel %vm581, %v580, %v547
  %v598 = vpack.c.bf16 %v583, %v582
  %v599 = vpack.c.bf16 %v585, %v584
  %v600 = vpack.c.bf16 %v587, %v586
  %v601 = vpack.c.bf16 %v589, %v588
  %v602 = vpack.c.bf16 %v591, %v590
  %v603 = vpack.c.bf16 %v593, %v592
  %v604 = vpack.c.bf16 %v595, %v594
  %v605 = vpack.c.bf16 %v597, %v596
  %v612 = vunpack.c.l.b16 %v332
  %v613 = vunpack.c.l.b16 %v333
  %v614 = vunpack.c.l.b16 %v334
  %v615 = vunpack.c.l.b16 %v335
  %v616 = vunpack.c.l.b16 %v336
  %v617 = vunpack.c.l.b16 %v337
  %v618 = vpack.c.b16 %v613, %v612
  %v619 = vpack.c.b16 %v615, %v614
  %v620 = vpack.c.b16 %v617, %v616
  %vm624 = vcmask 392192
  %v626 = vsel %vm624, %v598, 0
  %v629 = vsel %vm624, %v599, 0
  %v632 = vsel %vm624, %v600, 0
  %v635 = vsel %vm624, %v601, 0
  %v638 = vsel %vm624, %v602, 0
  %v641 = vsel %vm624, %v603, 0
  %v644 = vsel %vm624, %v604, 0
  %v647 = vsel %vm624, %v605, 0
  %649 = vmatpush.bf16.msra.mxu0 0
  %650 = vmatpush.bf16.msra.mxu0 0
  %651 = vmatpush.bf16.msra.mxu0 0
  %652 = vmatpush.bf16.msra.mxu0 0
  %653 = vmatpush.bf16.msra.mxu0 0
  %654 = vmatpush.bf16.msra.mxu0 %v620
  %655 = vmatpush.bf16.msra.mxu0 %v619
  %656 = vmatpush.bf16.msra.mxu0 %v618
  %657 = vmatmul.bf16.gmra.mxu0 %v626
  %v658 = vpop.f32.mrf.mxu0
  %v659 = vadd.f32 0.0, %v658
  %v660 = vpop.f32.mrf.mxu0
  %v661 = vadd.f32 0.0, %v660
  %662 = vmatmul.bf16.gmra.mxu0 %v629
  %v663 = vpop.f32.mrf.mxu0
  %v664 = vadd.f32 0.0, %v663
  %v665 = vpop.f32.mrf.mxu0
  %v666 = vadd.f32 0.0, %v665
  %667 = vmatmul.bf16.gmra.mxu0 %v632
  %v668 = vpop.f32.mrf.mxu0
  %v669 = vadd.f32 0.0, %v668
  %v670 = vpop.f32.mrf.mxu0
  %v671 = vadd.f32 0.0, %v670
  %672 = vmatmul.bf16.gmra.mxu0 %v635
  %v673 = vpop.f32.mrf.mxu0
  %v674 = vadd.f32 0.0, %v673
  %v675 = vpop.f32.mrf.mxu0
  %v676 = vadd.f32 0.0, %v675
  %677 = vmatmul.bf16.gmra.mxu0 %v638
  %v678 = vpop.f32.mrf.mxu0
  %v679 = vadd.f32 0.0, %v678
  %v680 = vpop.f32.mrf.mxu0
  %v681 = vadd.f32 0.0, %v680
  %682 = vmatmul.bf16.gmra.mxu0 %v641
  %v683 = vpop.f32.mrf.mxu0
  %v684 = vadd.f32 0.0, %v683
  %v685 = vpop.f32.mrf.mxu0
  %v686 = vadd.f32 0.0, %v685
  %687 = vmatmul.bf16.gmra.mxu0 %v644
  %v688 = vpop.f32.mrf.mxu0
  %v689 = vadd.f32 0.0, %v688
  %v690 = vpop.f32.mrf.mxu0
  %v691 = vadd.f32 0.0, %v690
  %692 = vmatmul.bf16.gmra.mxu0 %v647
  %v693 = vpop.f32.mrf.mxu0
  %v694 = vadd.f32 0.0, %v693
  %v695 = vpop.f32.mrf.mxu0
  %v696 = vadd.f32 0.0, %v695
  %697 = vdwg.mxu0
  %v698 = vld [vmem:[%s3] sm:$0x1]
  %v699 = vld [vmem:[%s3 + $0x1] sm:$0x1]
  %v700 = vsel %vm581, %v659, 0.0
  %v701 = vsel %vm581, %v661, 0.0
  %v702 = vadd.f32 %v700, %v701
  %v703 = vsel %vm581, %v664, 0.0
  %v704 = vadd.f32 %v702, %v703
  %v705 = vsel %vm581, %v666, 0.0
  %v706 = vadd.f32 %v704, %v705
  %v707 = vsel %vm581, %v669, 0.0
  %v708 = vadd.f32 %v706, %v707
  %v709 = vsel %vm581, %v671, 0.0
  %v710 = vadd.f32 %v708, %v709
  %v711 = vsel %vm581, %v674, 0.0
  %v712 = vadd.f32 %v710, %v711
  %v713 = vsel %vm581, %v676, 0.0
  %v714 = vadd.f32 %v712, %v713
  %v715 = vsel %vm581, %v679, 0.0
  %v716 = vadd.f32 %v714, %v715
  %v717 = vsel %vm581, %v681, 0.0
  %v718 = vadd.f32 %v716, %v717
  %v719 = vsel %vm581, %v684, 0.0
  %v720 = vadd.f32 %v718, %v719
  %v721 = vsel %vm581, %v686, 0.0
  %v722 = vadd.f32 %v720, %v721
  %v723 = vsel %vm581, %v689, 0.0
  %v724 = vadd.f32 %v722, %v723
  %v725 = vsel %vm581, %v691, 0.0
  %v726 = vadd.f32 %v724, %v725
  %v727 = vsel %vm581, %v694, 0.0
  %v728 = vadd.f32 %v726, %v727
  %v729 = vsel %vm581, %v696, 0.0
  %v730 = vadd.f32 %v728, %v729
  %v731 = vrot.slane %v730, 4
  %v732 = vadd.f32 %v730, %v731
  %v733 = vrot.slane %v732, 2
  %v734 = vadd.f32 %v732, %v733
  %v735 = vrot.slane %v734, 1
  %v736 = vadd.f32 %v734, %v735
  %v737 = vrcp.pop 128.0
  %v738 = vmul.f32 128.0, %v737
  %v739 = vsub.f32 1.0, %v738
  %v740 = vmul.f32 %v737, %v739
  %v741 = vadd.f32 %v737, %v740
  %vm742 = vweird.f32 %v737
  %v743 = vsel %vm742, %v737, %v741
  %v744 = vmul.f32 %v736, %v743
  %v745 = vmul.f32 %v659, %v659
  %v746 = vmul.f32 %v661, %v661
  %v747 = vmul.f32 %v664, %v664
  %v748 = vmul.f32 %v666, %v666
  %v749 = vmul.f32 %v669, %v669
  %v750 = vmul.f32 %v671, %v671
  %v751 = vmul.f32 %v674, %v674
  %v752 = vmul.f32 %v676, %v676
  %v753 = vmul.f32 %v679, %v679
  %v754 = vmul.f32 %v681, %v681
  %v755 = vmul.f32 %v684, %v684
  %v756 = vmul.f32 %v686, %v686
  %v757 = vmul.f32 %v689, %v689
  %v758 = vmul.f32 %v691, %v691
  %v759 = vmul.f32 %v694, %v694
  %v760 = vmul.f32 %v696, %v696
  %v761 = vsel %vm581, %v745, 0.0
  %v762 = vsel %vm581, %v746, 0.0
  %v763 = vadd.f32 %v761, %v762
  %v764 = vsel %vm581, %v747, 0.0
  %v765 = vadd.f32 %v763, %v764
  %v766 = vsel %vm581, %v748, 0.0
  %v767 = vadd.f32 %v765, %v766
  %v768 = vsel %vm581, %v749, 0.0
  %v769 = vadd.f32 %v767, %v768
  %v770 = vsel %vm581, %v750, 0.0
  %v771 = vadd.f32 %v769, %v770
  %v772 = vsel %vm581, %v751, 0.0
  %v773 = vadd.f32 %v771, %v772
  %v774 = vsel %vm581, %v752, 0.0
  %v775 = vadd.f32 %v773, %v774
  %v776 = vsel %vm581, %v753, 0.0
  %v777 = vadd.f32 %v775, %v776
  %v778 = vsel %vm581, %v754, 0.0
  %v779 = vadd.f32 %v777, %v778
  %v780 = vsel %vm581, %v755, 0.0
  %v781 = vadd.f32 %v779, %v780
  %v782 = vsel %vm581, %v756, 0.0
  %v783 = vadd.f32 %v781, %v782
  %v784 = vsel %vm581, %v757, 0.0
  %v785 = vadd.f32 %v783, %v784
  %v786 = vsel %vm581, %v758, 0.0
  %v787 = vadd.f32 %v785, %v786
  %v788 = vsel %vm581, %v759, 0.0
  %v789 = vadd.f32 %v787, %v788
  %v790 = vsel %vm581, %v760, 0.0
  %v791 = vadd.f32 %v789, %v790
  %v792 = vrot.slane %v791, 4
  %v793 = vadd.f32 %v791, %v792
  %v794 = vrot.slane %v793, 2
  %v795 = vadd.f32 %v793, %v794
  %v796 = vrot.slane %v795, 1
  %v797 = vadd.f32 %v795, %v796
  %v798 = vmul.f32 %v797, %v743
  %v799 = vmul.f32 %v744, %v744
  %v800 = vsub.f32 %v798, %v799
  %v801 = vmax.f32 %v800, 0.0
  %v802 = vsub.f32 %v659, %v744
  %v803 = vsub.f32 %v661, %v744
  %v804 = vsub.f32 %v664, %v744
  %v805 = vsub.f32 %v666, %v744
  %v806 = vsub.f32 %v669, %v744
  %v807 = vsub.f32 %v671, %v744
  %v808 = vsub.f32 %v674, %v744
  %v809 = vsub.f32 %v676, %v744
  %v810 = vsub.f32 %v679, %v744
  %v811 = vsub.f32 %v681, %v744
  %v812 = vsub.f32 %v684, %v744
  %v813 = vsub.f32 %v686, %v744
  %v814 = vsub.f32 %v689, %v744
  %v815 = vsub.f32 %v691, %v744
  %v816 = vsub.f32 %v694, %v744
  %v817 = vsub.f32 %v696, %v744
  %v818 = vperm.slane %v698, 0
  %v819 = vmul.f32 %v818, %v802
  %v820 = vmul.f32 %v818, %v803
  %v821 = vmul.f32 %v818, %v804
  %v822 = vmul.f32 %v818, %v805
  %v823 = vmul.f32 %v818, %v806
  %v824 = vmul.f32 %v818, %v807
  %v825 = vmul.f32 %v818, %v808
  %v826 = vmul.f32 %v818, %v809
  %v827 = vmul.f32 %v818, %v810
  %v828 = vmul.f32 %v818, %v811
  %v829 = vmul.f32 %v818, %v812
  %v830 = vmul.f32 %v818, %v813
  %v831 = vmul.f32 %v818, %v814
  %v832 = vmul.f32 %v818, %v815
  %v833 = vmul.f32 %v818, %v816
  %v834 = vmul.f32 %v818, %v817
  %v835 = vadd.f32 %v801, 1e-05
  %v836 = vrsqrt.pop %v835
  %v837 = vmul.f32 %v836, %v835
  %v838 = vmul.f32 %v837, %v836
  %v839 = vmul.f32 0.5, %v838
  %v840 = vsub.f32 1.5, %v839
  %v841 = vmul.f32 %v836, %v840
  %vm842 = vweird.f32 %v835
  %vm843 = vweird.f32 %v836
  %vm844 = vmor %vm842, %vm843
  %v845 = vsel %vm844, %v836, %v841
  %v846 = vmul.f32 %v819, %v845
  %v847 = vmul.f32 %v820, %v845
  %v848 = vmul.f32 %v821, %v845
  %v849 = vmul.f32 %v822, %v845
  %v850 = vmul.f32 %v823, %v845
  %v851 = vmul.f32 %v824, %v845
  %v852 = vmul.f32 %v825, %v845
  %v853 = vmul.f32 %v826, %v845
  %v854 = vmul.f32 %v827, %v845
  %v855 = vmul.f32 %v828, %v845
  %v856 = vmul.f32 %v829, %v845
  %v857 = vmul.f32 %v830, %v845
  %v858 = vmul.f32 %v831, %v845
  %v859 = vmul.f32 %v832, %v845
  %v860 = vmul.f32 %v833, %v845
  %v861 = vmul.f32 %v834, %v845
  %v862 = vperm.slane %v699, 0
  %v863 = vadd.f32 %v846, %v862
  %v864 = vadd.f32 %v847, %v862
  %v865 = vadd.f32 %v848, %v862
  %v866 = vadd.f32 %v849, %v862
  %v867 = vadd.f32 %v850, %v862
  %v868 = vadd.f32 %v851, %v862
  %v869 = vadd.f32 %v852, %v862
  %v870 = vadd.f32 %v853, %v862
  %v871 = vadd.f32 %v854, %v862
  %v872 = vadd.f32 %v855, %v862
  %v873 = vadd.f32 %v856, %v862
  %v874 = vadd.f32 %v857, %v862
  %v875 = vadd.f32 %v858, %v862
  %v876 = vadd.f32 %v859, %v862
  %v877 = vadd.f32 %v860, %v862
  %v878 = vadd.f32 %v861, %v862
  %v879 = vld [vmem:[%s1 + $0x18] sm:$0xf]
  %v880 = vld [vmem:[%s1 + $0x1c] sm:$0xf]
  %v881 = vld [vmem:[%s1 + $0x20] sm:$0xf]
  %v882 = vld [vmem:[%s1 + $0x24] sm:$0xf]
  %v883 = vld [vmem:[%s1 + $0x28] sm:$0xf]
  %v884 = vld [vmem:[%s1 + $0x2c] sm:$0xf]
  %v885 = vld [vmem:[%s1 + $0x30] sm:$0xf]
  %v886 = vld [vmem:[%s1 + $0x34] sm:$0xf]
  %v887 = vld [vmem:[%s1 + $0x38] sm:$0xf]
  %v888 = vld [vmem:[%s1 + $0x3c] sm:$0xf]
  %v889 = vld [vmem:[%s1 + $0x40] sm:$0xf]
  %v890 = vld [vmem:[%s1 + $0x44] sm:$0xf]
  %v891 = vrot.slane %v863, 7
  %v892 = vrot.slane %v864, 7
  %v893 = vrot.slane %v865, 7
  %v894 = vrot.slane %v866, 7
  %v895 = vrot.slane %v867, 7
  %v896 = vrot.slane %v868, 7
  %v897 = vrot.slane %v869, 7
  %v898 = vrot.slane %v870, 7
  %v899 = vrot.slane %v871, 7
  %v900 = vrot.slane %v872, 7
  %v901 = vrot.slane %v873, 7
  %v902 = vrot.slane %v874, 7
  %v903 = vrot.slane %v875, 7
  %v904 = vrot.slane %v876, 7
  %v905 = vrot.slane %v877, 7
  %v906 = vrot.slane %v878, 7
  %v907 = vsel %vm354, %v905, %v906
  %v908 = vsel %vm354, %v904, %v905
  %v909 = vsel %vm354, %v903, %v904
  %v910 = vsel %vm354, %v902, %v903
  %v911 = vsel %vm354, %v901, %v902
  %v912 = vsel %vm354, %v900, %v901
  %v913 = vsel %vm354, %v899, %v900
  %v914 = vsel %vm354, %v898, %v899
  %v915 = vsel %vm354, %v897, %v898
  %v916 = vsel %vm354, %v896, %v897
  %v917 = vsel %vm354, %v895, %v896
  %v918 = vsel %vm354, %v894, %v895
  %v919 = vsel %vm354, %v893, %v894
  %v920 = vsel %vm354, %v892, %v893
  %v921 = vsel %vm354, %v891, %v892
  %v922 = vsel %vm354, %v906, %v891
  %v923 = vmul.f32 %v922, %v92
  %v924 = vmul.f32 %v921, %v93
  %v925 = vmul.f32 %v920, %v94
  %v926 = vmul.f32 %v919, %v95
  %v927 = vmul.f32 %v918, %v96
  %v928 = vmul.f32 %v917, %v97
  %v929 = vmul.f32 %v916, %v98
  %v930 = vmul.f32 %v915, %v99
  %v931 = vmul.f32 %v914, %v100
  %v932 = vmul.f32 %v913, %v101
  %v933 = vmul.f32 %v912, %v102
  %v934 = vmul.f32 %v911, %v103
  %v935 = vmul.f32 %v910, %v104
  %v936 = vmul.f32 %v909, %v105
  %v937 = vmul.f32 %v908, %v106
  %v938 = vmul.f32 %v907, %v107
  %v939 = vrot.slane %v863, 1
  %v940 = vrot.slane %v864, 1
  %v941 = vrot.slane %v865, 1
  %v942 = vrot.slane %v866, 1
  %v943 = vrot.slane %v867, 1
  %v944 = vrot.slane %v868, 1
  %v945 = vrot.slane %v869, 1
  %v946 = vrot.slane %v870, 1
  %v947 = vrot.slane %v871, 1
  %v948 = vrot.slane %v872, 1
  %v949 = vrot.slane %v873, 1
  %v950 = vrot.slane %v874, 1
  %v951 = vrot.slane %v875, 1
  %v952 = vrot.slane %v876, 1
  %v953 = vrot.slane %v877, 1
  %v954 = vrot.slane %v878, 1
  %v955 = vsel %vm403, %v953, %v954
  %v956 = vsel %vm403, %v952, %v953
  %v957 = vsel %vm403, %v951, %v952
  %v958 = vsel %vm403, %v950, %v951
  %v959 = vsel %vm403, %v949, %v950
  %v960 = vsel %vm403, %v948, %v949
  %v961 = vsel %vm403, %v947, %v948
  %v962 = vsel %vm403, %v946, %v947
  %v963 = vsel %vm403, %v945, %v946
  %v964 = vsel %vm403, %v944, %v945
  %v965 = vsel %vm403, %v943, %v944
  %v966 = vsel %vm403, %v942, %v943
  %v967 = vsel %vm403, %v941, %v942
  %v968 = vsel %vm403, %v940, %v941
  %v969 = vsel %vm403, %v939, %v940
  %v970 = vsel %vm403, %v954, %v939
  %v971 = vmul.f32 %v969, %v140
  %v972 = vmul.f32 %v968, %v141
  %v973 = vmul.f32 %v967, %v142
  %v974 = vmul.f32 %v966, %v143
  %v975 = vmul.f32 %v965, %v144
  %v976 = vmul.f32 %v964, %v145
  %v977 = vmul.f32 %v963, %v146
  %v978 = vmul.f32 %v962, %v147
  %v979 = vmul.f32 %v961, %v148
  %v980 = vmul.f32 %v960, %v149
  %v981 = vmul.f32 %v959, %v150
  %v982 = vmul.f32 %v958, %v151
  %v983 = vmul.f32 %v957, %v152
  %v984 = vmul.f32 %v956, %v153
  %v985 = vmul.f32 %v955, %v154
  %v986 = vmul.f32 %v970, %v155
  %1003 = vrot.lane.b32.xlu0 %v863, 32
  %v1004 = vpop.permute.xlu0 %1003
  %1005 = vrot.lane.b32.xlu0 %v864, 32
  %v1006 = vpop.permute.xlu0 %1005
  %1007 = vrot.lane.b32.xlu0 %v865, 32
  %v1008 = vpop.permute.xlu0 %1007
  %1009 = vrot.lane.b32.xlu0 %v866, 32
  %v1010 = vpop.permute.xlu0 %1009
  %1011 = vrot.lane.b32.xlu0 %v867, 32
  %v1012 = vpop.permute.xlu0 %1011
  %1013 = vrot.lane.b32.xlu0 %v868, 32
  %v1014 = vpop.permute.xlu0 %1013
  %1015 = vrot.lane.b32.xlu0 %v869, 32
  %v1016 = vpop.permute.xlu0 %1015
  %1017 = vrot.lane.b32.xlu0 %v870, 32
  %v1018 = vpop.permute.xlu0 %1017
  %1019 = vrot.lane.b32.xlu0 %v871, 32
  %v1020 = vpop.permute.xlu0 %1019
  %1021 = vrot.lane.b32.xlu0 %v872, 32
  %v1022 = vpop.permute.xlu0 %1021
  %1023 = vrot.lane.b32.xlu0 %v873, 32
  %v1024 = vpop.permute.xlu0 %1023
  %1025 = vrot.lane.b32.xlu0 %v874, 32
  %v1026 = vpop.permute.xlu0 %1025
  %1027 = vrot.lane.b32.xlu0 %v875, 32
  %v1028 = vpop.permute.xlu0 %1027
  %1029 = vrot.lane.b32.xlu0 %v876, 32
  %v1030 = vpop.permute.xlu0 %1029
  %1031 = vrot.lane.b32.xlu0 %v877, 32
  %v1032 = vpop.permute.xlu0 %1031
  %1033 = vrot.lane.b32.xlu0 %v878, 32
  %v1034 = vpop.permute.xlu0 %1033
  %1067 = vrot.lane.b32.xlu0 %v971, 64
  %v1068 = vpop.permute.xlu0 %1067
  %1069 = vrot.lane.b32.xlu0 %v972, 64
  %v1070 = vpop.permute.xlu0 %1069
  %1071 = vrot.lane.b32.xlu0 %v973, 64
  %v1072 = vpop.permute.xlu0 %1071
  %1073 = vrot.lane.b32.xlu0 %v974, 64
  %v1074 = vpop.permute.xlu0 %1073
  %1075 = vrot.lane.b32.xlu0 %v975, 64
  %v1076 = vpop.permute.xlu0 %1075
  %1077 = vrot.lane.b32.xlu0 %v976, 64
  %v1078 = vpop.permute.xlu0 %1077
  %1079 = vrot.lane.b32.xlu0 %v977, 64
  %v1080 = vpop.permute.xlu0 %1079
  %1081 = vrot.lane.b32.xlu0 %v978, 64
  %v1082 = vpop.permute.xlu0 %1081
  %1083 = vrot.lane.b32.xlu0 %v979, 64
  %v1084 = vpop.permute.xlu0 %1083
  %1085 = vrot.lane.b32.xlu0 %v980, 64
  %v1086 = vpop.permute.xlu0 %1085
  %1087 = vrot.lane.b32.xlu0 %v981, 64
  %v1088 = vpop.permute.xlu0 %1087
  %1089 = vrot.lane.b32.xlu0 %v982, 64
  %v1090 = vpop.permute.xlu0 %1089
  %1091 = vrot.lane.b32.xlu0 %v983, 64
  %v1092 = vpop.permute.xlu0 %1091
  %1093 = vrot.lane.b32.xlu0 %v984, 64
  %v1094 = vpop.permute.xlu0 %1093
  %1095 = vrot.lane.b32.xlu0 %v985, 64
  %v1096 = vpop.permute.xlu0 %1095
  %1097 = vrot.lane.b32.xlu0 %v986, 64
  %v1098 = vpop.permute.xlu0 %1097
  %v1115 = vsel %vm581, %v923, %v1004
  %v1116 = vsel %vm581, %v924, %v1006
  %v1117 = vsel %vm581, %v925, %v1008
  %v1118 = vsel %vm581, %v926, %v1010
  %v1119 = vsel %vm581, %v927, %v1012
  %v1120 = vsel %vm581, %v928, %v1014
  %v1121 = vsel %vm581, %v929, %v1016
  %v1122 = vsel %vm581, %v930, %v1018
  %v1123 = vsel %vm581, %v931, %v1020
  %v1124 = vsel %vm581, %v932, %v1022
  %v1125 = vsel %vm581, %v933, %v1024
  %v1126 = vsel %vm581, %v934, %v1026
  %v1127 = vsel %vm581, %v935, %v1028
  %v1128 = vsel %vm581, %v936, %v1030
  %v1129 = vsel %vm581, %v937, %v1032
  %v1130 = vsel %vm581, %v938, %v1034
  %vm1131 = vcmask 523264
  %v1132 = vsel %vm1131, %v1115, %v1068
  %v1133 = vsel %vm1131, %v1116, %v1070
  %v1134 = vsel %vm1131, %v1117, %v1072
  %v1135 = vsel %vm1131, %v1118, %v1074
  %v1136 = vsel %vm1131, %v1119, %v1076
  %v1137 = vsel %vm1131, %v1120, %v1078
  %v1138 = vsel %vm1131, %v1121, %v1080
  %v1139 = vsel %vm1131, %v1122, %v1082
  %v1140 = vsel %vm1131, %v1123, %v1084
  %v1141 = vsel %vm1131, %v1124, %v1086
  %v1142 = vsel %vm1131, %v1125, %v1088
  %v1143 = vsel %vm1131, %v1126, %v1090
  %v1144 = vsel %vm1131, %v1127, %v1092
  %v1145 = vsel %vm1131, %v1128, %v1094
  %v1146 = vsel %vm1131, %v1129, %v1096
  %v1147 = vsel %vm1131, %v1130, %v1098
  %v1148 = vpack.c.bf16 %v1133, %v1132
  %v1149 = vpack.c.bf16 %v1135, %v1134
  %v1150 = vpack.c.bf16 %v1137, %v1136
  %v1151 = vpack.c.bf16 %v1139, %v1138
  %v1152 = vpack.c.bf16 %v1141, %v1140
  %v1153 = vpack.c.bf16 %v1143, %v1142
  %v1154 = vpack.c.bf16 %v1145, %v1144
  %v1155 = vpack.c.bf16 %v1147, %v1146
  %v1168 = vunpack.c.l.b16 %v879
  %v1169 = vunpack.c.l.b16 %v880
  %v1170 = vunpack.c.l.b16 %v881
  %v1171 = vunpack.c.l.b16 %v882
  %v1172 = vunpack.c.l.b16 %v883
  %v1173 = vunpack.c.l.b16 %v884
  %v1174 = vunpack.c.l.b16 %v885
  %v1175 = vunpack.c.l.b16 %v886
  %v1176 = vunpack.c.l.b16 %v887
  %v1177 = vunpack.c.l.b16 %v888
  %v1178 = vunpack.c.l.b16 %v889
  %v1179 = vunpack.c.l.b16 %v890
  %v1180 = vpack.c.b16 %v1169, %v1168
  %v1181 = vpack.c.b16 %v1171, %v1170
  %v1182 = vpack.c.b16 %v1173, %v1172
  %v1183 = vpack.c.b16 %v1175, %v1174
  %v1184 = vpack.c.b16 %v1177, %v1176
  %v1185 = vpack.c.b16 %v1179, %v1178
  %vm1192 = vcmask 785408
  %v1194 = vsel %vm1192, %v1148, 0
  %v1197 = vsel %vm1192, %v1149, 0
  %v1200 = vsel %vm1192, %v1150, 0
  %v1203 = vsel %vm1192, %v1151, 0
  %v1206 = vsel %vm1192, %v1152, 0
  %v1209 = vsel %vm1192, %v1153, 0
  %v1212 = vsel %vm1192, %v1154, 0
  %v1215 = vsel %vm1192, %v1155, 0
  %1217 = vmatpush.bf16.msra.mxu0 0
  %1218 = vmatpush.bf16.msra.mxu0 0
  %1219 = vmatpush.bf16.msra.mxu0 %v1185
  %1220 = vmatpush.bf16.msra.mxu0 %v1184
  %1221 = vmatpush.bf16.msra.mxu0 %v1183
  %1222 = vmatpush.bf16.msra.mxu0 %v1182
  %1223 = vmatpush.bf16.msra.mxu0 %v1181
  %1224 = vmatpush.bf16.msra.mxu0 %v1180
  %1225 = vmatmul.bf16.gmra.mxu0 %v1194
  %v1226 = vpop.f32.mrf.mxu0
  %v1227 = vadd.f32 0.0, %v1226
  %v1228 = vpop.f32.mrf.mxu0
  %v1229 = vadd.f32 0.0, %v1228
  %1230 = vmatmul.bf16.gmra.mxu0 %v1197
  %v1231 = vpop.f32.mrf.mxu0
  %v1232 = vadd.f32 0.0, %v1231
  %v1233 = vpop.f32.mrf.mxu0
  %v1234 = vadd.f32 0.0, %v1233
  %1235 = vmatmul.bf16.gmra.mxu0 %v1200
  %v1236 = vpop.f32.mrf.mxu0
  %v1237 = vadd.f32 0.0, %v1236
  %v1238 = vpop.f32.mrf.mxu0
  %v1239 = vadd.f32 0.0, %v1238
  %1240 = vmatmul.bf16.gmra.mxu0 %v1203
  %v1241 = vpop.f32.mrf.mxu0
  %v1242 = vadd.f32 0.0, %v1241
  %v1243 = vpop.f32.mrf.mxu0
  %v1244 = vadd.f32 0.0, %v1243
  %1245 = vmatmul.bf16.gmra.mxu0 %v1206
  %v1246 = vpop.f32.mrf.mxu0
  %v1247 = vadd.f32 0.0, %v1246
  %v1248 = vpop.f32.mrf.mxu0
  %v1249 = vadd.f32 0.0, %v1248
  %1250 = vmatmul.bf16.gmra.mxu0 %v1209
  %v1251 = vpop.f32.mrf.mxu0
  %v1252 = vadd.f32 0.0, %v1251
  %v1253 = vpop.f32.mrf.mxu0
  %v1254 = vadd.f32 0.0, %v1253
  %1255 = vmatmul.bf16.gmra.mxu0 %v1212
  %v1256 = vpop.f32.mrf.mxu0
  %v1257 = vadd.f32 0.0, %v1256
  %v1258 = vpop.f32.mrf.mxu0
  %v1259 = vadd.f32 0.0, %v1258
  %1260 = vmatmul.bf16.gmra.mxu0 %v1215
  %v1261 = vpop.f32.mrf.mxu0
  %v1262 = vadd.f32 0.0, %v1261
  %v1263 = vpop.f32.mrf.mxu0
  %v1264 = vadd.f32 0.0, %v1263
  %1265 = vdwg.mxu0
  %v1266 = vld [vmem:[%s3 + $0x2] sm:$0x1]
  %v1267 = vld [vmem:[%s3 + $0x3] sm:$0x1]
  %v1268 = vsel %vm581, %v1227, 0.0
  %v1269 = vsel %vm581, %v1229, 0.0
  %v1270 = vadd.f32 %v1268, %v1269
  %v1271 = vsel %vm581, %v1232, 0.0
  %v1272 = vadd.f32 %v1270, %v1271
  %v1273 = vsel %vm581, %v1234, 0.0
  %v1274 = vadd.f32 %v1272, %v1273
  %v1275 = vsel %vm581, %v1237, 0.0
  %v1276 = vadd.f32 %v1274, %v1275
  %v1277 = vsel %vm581, %v1239, 0.0
  %v1278 = vadd.f32 %v1276, %v1277
  %v1279 = vsel %vm581, %v1242, 0.0
  %v1280 = vadd.f32 %v1278, %v1279
  %v1281 = vsel %vm581, %v1244, 0.0
  %v1282 = vadd.f32 %v1280, %v1281
  %v1283 = vsel %vm581, %v1247, 0.0
  %v1284 = vadd.f32 %v1282, %v1283
  %v1285 = vsel %vm581, %v1249, 0.0
  %v1286 = vadd.f32 %v1284, %v1285
  %v1287 = vsel %vm581, %v1252, 0.0
  %v1288 = vadd.f32 %v1286, %v1287
  %v1289 = vsel %vm581, %v1254, 0.0
  %v1290 = vadd.f32 %v1288, %v1289
  %v1291 = vsel %vm581, %v1257, 0.0
  %v1292 = vadd.f32 %v1290, %v1291
  %v1293 = vsel %vm581, %v1259, 0.0
  %v1294 = vadd.f32 %v1292, %v1293
  %v1295 = vsel %vm581, %v1262, 0.0
  %v1296 = vadd.f32 %v1294, %v1295
  %v1297 = vsel %vm581, %v1264, 0.0
  %v1298 = vadd.f32 %v1296, %v1297
  %v1299 = vrot.slane %v1298, 4
  %v1300 = vadd.f32 %v1298, %v1299
  %v1301 = vrot.slane %v1300, 2
  %v1302 = vadd.f32 %v1300, %v1301
  %v1303 = vrot.slane %v1302, 1
  %v1304 = vadd.f32 %v1302, %v1303
  %v1305 = vmul.f32 %v1304, %v743
  %v1306 = vmul.f32 %v1227, %v1227
  %v1307 = vmul.f32 %v1229, %v1229
  %v1308 = vmul.f32 %v1232, %v1232
  %v1309 = vmul.f32 %v1234, %v1234
  %v1310 = vmul.f32 %v1237, %v1237
  %v1311 = vmul.f32 %v1239, %v1239
  %v1312 = vmul.f32 %v1242, %v1242
  %v1313 = vmul.f32 %v1244, %v1244
  %v1314 = vmul.f32 %v1247, %v1247
  %v1315 = vmul.f32 %v1249, %v1249
  %v1316 = vmul.f32 %v1252, %v1252
  %v1317 = vmul.f32 %v1254, %v1254
  %v1318 = vmul.f32 %v1257, %v1257
  %v1319 = vmul.f32 %v1259, %v1259
  %v1320 = vmul.f32 %v1262, %v1262
  %v1321 = vmul.f32 %v1264, %v1264
  %v1322 = vsel %vm581, %v1306, 0.0
  %v1323 = vsel %vm581, %v1307, 0.0
  %v1324 = vadd.f32 %v1322, %v1323
  %v1325 = vsel %vm581, %v1308, 0.0
  %v1326 = vadd.f32 %v1324, %v1325
  %v1327 = vsel %vm581, %v1309, 0.0
  %v1328 = vadd.f32 %v1326, %v1327
  %v1329 = vsel %vm581, %v1310, 0.0
  %v1330 = vadd.f32 %v1328, %v1329
  %v1331 = vsel %vm581, %v1311, 0.0
  %v1332 = vadd.f32 %v1330, %v1331
  %v1333 = vsel %vm581, %v1312, 0.0
  %v1334 = vadd.f32 %v1332, %v1333
  %v1335 = vsel %vm581, %v1313, 0.0
  %v1336 = vadd.f32 %v1334, %v1335
  %v1337 = vsel %vm581, %v1314, 0.0
  %v1338 = vadd.f32 %v1336, %v1337
  %v1339 = vsel %vm581, %v1315, 0.0
  %v1340 = vadd.f32 %v1338, %v1339
  %v1341 = vsel %vm581, %v1316, 0.0
  %v1342 = vadd.f32 %v1340, %v1341
  %v1343 = vsel %vm581, %v1317, 0.0
  %v1344 = vadd.f32 %v1342, %v1343
  %v1345 = vsel %vm581, %v1318, 0.0
  %v1346 = vadd.f32 %v1344, %v1345
  %v1347 = vsel %vm581, %v1319, 0.0
  %v1348 = vadd.f32 %v1346, %v1347
  %v1349 = vsel %vm581, %v1320, 0.0
  %v1350 = vadd.f32 %v1348, %v1349
  %v1351 = vsel %vm581, %v1321, 0.0
  %v1352 = vadd.f32 %v1350, %v1351
  %v1353 = vrot.slane %v1352, 4
  %v1354 = vadd.f32 %v1352, %v1353
  %v1355 = vrot.slane %v1354, 2
  %v1356 = vadd.f32 %v1354, %v1355
  %v1357 = vrot.slane %v1356, 1
  %v1358 = vadd.f32 %v1356, %v1357
  %v1359 = vmul.f32 %v1358, %v743
  %v1360 = vmul.f32 %v1305, %v1305
  %v1361 = vsub.f32 %v1359, %v1360
  %v1362 = vmax.f32 %v1361, 0.0
  %v1363 = vsub.f32 %v1227, %v1305
  %v1364 = vsub.f32 %v1229, %v1305
  %v1365 = vsub.f32 %v1232, %v1305
  %v1366 = vsub.f32 %v1234, %v1305
  %v1367 = vsub.f32 %v1237, %v1305
  %v1368 = vsub.f32 %v1239, %v1305
  %v1369 = vsub.f32 %v1242, %v1305
  %v1370 = vsub.f32 %v1244, %v1305
  %v1371 = vsub.f32 %v1247, %v1305
  %v1372 = vsub.f32 %v1249, %v1305
  %v1373 = vsub.f32 %v1252, %v1305
  %v1374 = vsub.f32 %v1254, %v1305
  %v1375 = vsub.f32 %v1257, %v1305
  %v1376 = vsub.f32 %v1259, %v1305
  %v1377 = vsub.f32 %v1262, %v1305
  %v1378 = vsub.f32 %v1264, %v1305
  %v1379 = vperm.slane %v1266, 0
  %v1380 = vmul.f32 %v1379, %v1363
  %v1381 = vmul.f32 %v1379, %v1364
  %v1382 = vmul.f32 %v1379, %v1365
  %v1383 = vmul.f32 %v1379, %v1366
  %v1384 = vmul.f32 %v1379, %v1367
  %v1385 = vmul.f32 %v1379, %v1368
  %v1386 = vmul.f32 %v1379, %v1369
  %v1387 = vmul.f32 %v1379, %v1370
  %v1388 = vmul.f32 %v1379, %v1371
  %v1389 = vmul.f32 %v1379, %v1372
  %v1390 = vmul.f32 %v1379, %v1373
  %v1391 = vmul.f32 %v1379, %v1374
  %v1392 = vmul.f32 %v1379, %v1375
  %v1393 = vmul.f32 %v1379, %v1376
  %v1394 = vmul.f32 %v1379, %v1377
  %v1395 = vmul.f32 %v1379, %v1378
  %v1396 = vadd.f32 %v1362, 1e-05
  %v1397 = vrsqrt.pop %v1396
  %v1398 = vmul.f32 %v1397, %v1396
  %v1399 = vmul.f32 %v1398, %v1397
  %v1400 = vmul.f32 0.5, %v1399
  %v1401 = vsub.f32 1.5, %v1400
  %v1402 = vmul.f32 %v1397, %v1401
  %vm1403 = vweird.f32 %v1396
  %vm1404 = vweird.f32 %v1397
  %vm1405 = vmor %vm1403, %vm1404
  %v1406 = vsel %vm1405, %v1397, %v1402
  %v1407 = vmul.f32 %v1380, %v1406
  %v1408 = vmul.f32 %v1381, %v1406
  %v1409 = vmul.f32 %v1382, %v1406
  %v1410 = vmul.f32 %v1383, %v1406
  %v1411 = vmul.f32 %v1384, %v1406
  %v1412 = vmul.f32 %v1385, %v1406
  %v1413 = vmul.f32 %v1386, %v1406
  %v1414 = vmul.f32 %v1387, %v1406
  %v1415 = vmul.f32 %v1388, %v1406
  %v1416 = vmul.f32 %v1389, %v1406
  %v1417 = vmul.f32 %v1390, %v1406
  %v1418 = vmul.f32 %v1391, %v1406
  %v1419 = vmul.f32 %v1392, %v1406
  %v1420 = vmul.f32 %v1393, %v1406
  %v1421 = vmul.f32 %v1394, %v1406
  %v1422 = vmul.f32 %v1395, %v1406
  %v1423 = vperm.slane %v1267, 0
  %v1424 = vadd.f32 %v1407, %v1423
  %v1425 = vadd.f32 %v1408, %v1423
  %v1426 = vadd.f32 %v1409, %v1423
  %v1427 = vadd.f32 %v1410, %v1423
  %v1428 = vadd.f32 %v1411, %v1423
  %v1429 = vadd.f32 %v1412, %v1423
  %v1430 = vadd.f32 %v1413, %v1423
  %v1431 = vadd.f32 %v1414, %v1423
  %v1432 = vadd.f32 %v1415, %v1423
  %v1433 = vadd.f32 %v1416, %v1423
  %v1434 = vadd.f32 %v1417, %v1423
  %v1435 = vadd.f32 %v1418, %v1423
  %v1436 = vadd.f32 %v1419, %v1423
  %v1437 = vadd.f32 %v1420, %v1423
  %v1438 = vadd.f32 %v1421, %v1423
  %v1439 = vadd.f32 %v1422, %v1423
  %v1440 = vrot.slane %v1424, 1
  %v1441 = vrot.slane %v1425, 1
  %v1442 = vrot.slane %v1426, 1
  %v1443 = vrot.slane %v1427, 1
  %v1444 = vrot.slane %v1428, 1
  %v1445 = vrot.slane %v1429, 1
  %v1446 = vrot.slane %v1430, 1
  %v1447 = vrot.slane %v1431, 1
  %v1448 = vrot.slane %v1432, 1
  %v1449 = vrot.slane %v1433, 1
  %v1450 = vrot.slane %v1434, 1
  %v1451 = vrot.slane %v1435, 1
  %v1452 = vrot.slane %v1436, 1
  %v1453 = vrot.slane %v1437, 1
  %v1454 = vrot.slane %v1438, 1
  %v1455 = vrot.slane %v1439, 1
  %v1456 = vsel %vm403, %v1454, %v1455
  %v1457 = vsel %vm403, %v1453, %v1454
  %v1458 = vsel %vm403, %v1452, %v1453
  %v1459 = vsel %vm403, %v1451, %v1452
  %v1460 = vsel %vm403, %v1450, %v1451
  %v1461 = vsel %vm403, %v1449, %v1450
  %v1462 = vsel %vm403, %v1448, %v1449
  %v1463 = vsel %vm403, %v1447, %v1448
  %v1464 = vsel %vm403, %v1446, %v1447
  %v1465 = vsel %vm403, %v1445, %v1446
  %v1466 = vsel %vm403, %v1444, %v1445
  %v1467 = vsel %vm403, %v1443, %v1444
  %v1468 = vsel %vm403, %v1442, %v1443
  %v1469 = vsel %vm403, %v1441, %v1442
  %v1470 = vsel %vm403, %v1440, %v1441
  %v1471 = vsel %vm403, %v1455, %v1440
  %v1472 = vmax.f32 %v1424, %v1470
  %v1473 = vmax.f32 %v1425, %v1469
  %v1474 = vmax.f32 %v1426, %v1468
  %v1475 = vmax.f32 %v1427, %v1467
  %v1476 = vmax.f32 %v1428, %v1466
  %v1477 = vmax.f32 %v1429, %v1465
  %v1478 = vmax.f32 %v1430, %v1464
  %v1479 = vmax.f32 %v1431, %v1463
  %v1480 = vmax.f32 %v1432, %v1462
  %v1481 = vmax.f32 %v1433, %v1461
  %v1482 = vmax.f32 %v1434, %v1460
  %v1483 = vmax.f32 %v1435, %v1459
  %v1484 = vmax.f32 %v1436, %v1458
  %v1485 = vmax.f32 %v1437, %v1457
  %v1486 = vmax.f32 %v1438, %v1456
  %v1487 = vmax.f32 %v1439, %v1471
  %v1488 = vld [vmem:[%s2] sm:$0xf]
  %v1489 = vld [vmem:[%s2 + $0x4] sm:$0xf]
  %v1490 = vld [vmem:[%s2 + $0x8] sm:$0xf]
  %v1491 = vld [vmem:[%s2 + $0xc] sm:$0xf]
  %v1492 = vld [vmem:[%s2 + $0x10] sm:$0xf]
  %v1493 = vld [vmem:[%s2 + $0x14] sm:$0xf]
  %v1494 = vld [vmem:[%s2 + $0x18] sm:$0xf]
  %v1495 = vld [vmem:[%s2 + $0x1c] sm:$0xf]
  %v1496 = vld [vmem:[%s2 + $0x20] sm:$0xf]
  %v1497 = vld [vmem:[%s2 + $0x24] sm:$0xf]
  %v1498 = vld [vmem:[%s2 + $0x28] sm:$0xf]
  %v1499 = vld [vmem:[%s2 + $0x2c] sm:$0xf]
  %v1500 = vrot.slane %v1472, 6
  %v1501 = vrot.slane %v1473, 6
  %v1502 = vrot.slane %v1474, 6
  %v1503 = vrot.slane %v1475, 6
  %v1504 = vrot.slane %v1476, 6
  %v1505 = vrot.slane %v1477, 6
  %v1506 = vrot.slane %v1478, 6
  %v1507 = vrot.slane %v1479, 6
  %v1508 = vrot.slane %v1480, 6
  %v1509 = vrot.slane %v1481, 6
  %v1510 = vrot.slane %v1482, 6
  %v1511 = vrot.slane %v1483, 6
  %v1512 = vrot.slane %v1484, 6
  %v1513 = vrot.slane %v1485, 6
  %v1514 = vrot.slane %v1486, 6
  %v1515 = vrot.slane %v1487, 6
  %vm1516 = vcmp.lt.s32.totalorder %v28, 2
  %v1517 = vsel %vm1516, %v1514, %v1515
  %v1518 = vsel %vm1516, %v1513, %v1514
  %v1519 = vsel %vm1516, %v1512, %v1513
  %v1520 = vsel %vm1516, %v1511, %v1512
  %v1521 = vsel %vm1516, %v1510, %v1511
  %v1522 = vsel %vm1516, %v1509, %v1510
  %v1523 = vsel %vm1516, %v1508, %v1509
  %v1524 = vsel %vm1516, %v1507, %v1508
  %v1525 = vsel %vm1516, %v1506, %v1507
  %v1526 = vsel %vm1516, %v1505, %v1506
  %v1527 = vsel %vm1516, %v1504, %v1505
  %v1528 = vsel %vm1516, %v1503, %v1504
  %v1529 = vsel %vm1516, %v1502, %v1503
  %v1530 = vsel %vm1516, %v1501, %v1502
  %v1531 = vsel %vm1516, %v1500, %v1501
  %v1532 = vsel %vm1516, %v1515, %v1500
  %v1533 = vmul.f32 %v1532, %v188
  %v1534 = vmul.f32 %v1531, %v189
  %v1535 = vmul.f32 %v1530, %v190
  %v1536 = vmul.f32 %v1529, %v191
  %v1537 = vmul.f32 %v1528, %v192
  %v1538 = vmul.f32 %v1527, %v193
  %v1539 = vmul.f32 %v1526, %v194
  %v1540 = vmul.f32 %v1525, %v195
  %v1541 = vmul.f32 %v1524, %v196
  %v1542 = vmul.f32 %v1523, %v197
  %v1543 = vmul.f32 %v1522, %v198
  %v1544 = vmul.f32 %v1521, %v199
  %v1545 = vmul.f32 %v1520, %v200
  %v1546 = vmul.f32 %v1519, %v201
  %v1547 = vmul.f32 %v1518, %v202
  %v1548 = vmul.f32 %v1517, %v203
  %v1549 = vrot.slane %v1472, 2
  %v1550 = vrot.slane %v1473, 2
  %v1551 = vrot.slane %v1474, 2
  %v1552 = vrot.slane %v1475, 2
  %v1553 = vrot.slane %v1476, 2
  %v1554 = vrot.slane %v1477, 2
  %v1555 = vrot.slane %v1478, 2
  %v1556 = vrot.slane %v1479, 2
  %v1557 = vrot.slane %v1480, 2
  %v1558 = vrot.slane %v1481, 2
  %v1559 = vrot.slane %v1482, 2
  %v1560 = vrot.slane %v1483, 2
  %v1561 = vrot.slane %v1484, 2
  %v1562 = vrot.slane %v1485, 2
  %v1563 = vrot.slane %v1486, 2
  %v1564 = vrot.slane %v1487, 2
  %vm1565 = vcmp.lt.s32.totalorder %v28, 6
  %v1566 = vsel %vm1565, %v1563, %v1564
  %v1567 = vsel %vm1565, %v1562, %v1563
  %v1568 = vsel %vm1565, %v1561, %v1562
  %v1569 = vsel %vm1565, %v1560, %v1561
  %v1570 = vsel %vm1565, %v1559, %v1560
  %v1571 = vsel %vm1565, %v1558, %v1559
  %v1572 = vsel %vm1565, %v1557, %v1558
  %v1573 = vsel %vm1565, %v1556, %v1557
  %v1574 = vsel %vm1565, %v1555, %v1556
  %v1575 = vsel %vm1565, %v1554, %v1555
  %v1576 = vsel %vm1565, %v1553, %v1554
  %v1577 = vsel %vm1565, %v1552, %v1553
  %v1578 = vsel %vm1565, %v1551, %v1552
  %v1579 = vsel %vm1565, %v1550, %v1551
  %v1580 = vsel %vm1565, %v1549, %v1550
  %v1581 = vsel %vm1565, %v1564, %v1549
  %v1582 = vmul.f32 %v1580, %v236
  %v1583 = vmul.f32 %v1579, %v237
  %v1584 = vmul.f32 %v1578, %v238
  %v1585 = vmul.f32 %v1577, %v239
  %v1586 = vmul.f32 %v1576, %v240
  %v1587 = vmul.f32 %v1575, %v241
  %v1588 = vmul.f32 %v1574, %v242
  %v1589 = vmul.f32 %v1573, %v243
  %v1590 = vmul.f32 %v1572, %v244
  %v1591 = vmul.f32 %v1571, %v245
  %v1592 = vmul.f32 %v1570, %v246
  %v1593 = vmul.f32 %v1569, %v247
  %v1594 = vmul.f32 %v1568, %v248
  %v1595 = vmul.f32 %v1567, %v249
  %v1596 = vmul.f32 %v1566, %v250
  %v1597 = vmul.f32 %v1581, %v251
  %1614 = vrot.lane.b32.xlu0 %v1472, 32
  %v1615 = vpop.permute.xlu0 %1614
  %1616 = vrot.lane.b32.xlu0 %v1473, 32
  %v1617 = vpop.permute.xlu0 %1616
  %1618 = vrot.lane.b32.xlu0 %v1474, 32
  %v1619 = vpop.permute.xlu0 %1618
  %1620 = vrot.lane.b32.xlu0 %v1475, 32
  %v1621 = vpop.permute.xlu0 %1620
  %1622 = vrot.lane.b32.xlu0 %v1476, 32
  %v1623 = vpop.permute.xlu0 %1622
  %1624 = vrot.lane.b32.xlu0 %v1477, 32
  %v1625 = vpop.permute.xlu0 %1624
  %1626 = vrot.lane.b32.xlu0 %v1478, 32
  %v1627 = vpop.permute.xlu0 %1626
  %1628 = vrot.lane.b32.xlu0 %v1479, 32
  %v1629 = vpop.permute.xlu0 %1628
  %1630 = vrot.lane.b32.xlu0 %v1480, 32
  %v1631 = vpop.permute.xlu0 %1630
  %1632 = vrot.lane.b32.xlu0 %v1481, 32
  %v1633 = vpop.permute.xlu0 %1632
  %1634 = vrot.lane.b32.xlu0 %v1482, 32
  %v1635 = vpop.permute.xlu0 %1634
  %1636 = vrot.lane.b32.xlu0 %v1483, 32
  %v1637 = vpop.permute.xlu0 %1636
  %1638 = vrot.lane.b32.xlu0 %v1484, 32
  %v1639 = vpop.permute.xlu0 %1638
  %1640 = vrot.lane.b32.xlu0 %v1485, 32
  %v1641 = vpop.permute.xlu0 %1640
  %1642 = vrot.lane.b32.xlu0 %v1486, 32
  %v1643 = vpop.permute.xlu0 %1642
  %1644 = vrot.lane.b32.xlu0 %v1487, 32
  %v1645 = vpop.permute.xlu0 %1644
  %1678 = vrot.lane.b32.xlu0 %v1582, 64
  %v1679 = vpop.permute.xlu0 %1678
  %1680 = vrot.lane.b32.xlu0 %v1583, 64
  %v1681 = vpop.permute.xlu0 %1680
  %1682 = vrot.lane.b32.xlu0 %v1584, 64
  %v1683 = vpop.permute.xlu0 %1682
  %1684 = vrot.lane.b32.xlu0 %v1585, 64
  %v1685 = vpop.permute.xlu0 %1684
  %1686 = vrot.lane.b32.xlu0 %v1586, 64
  %v1687 = vpop.permute.xlu0 %1686
  %1688 = vrot.lane.b32.xlu0 %v1587, 64
  %v1689 = vpop.permute.xlu0 %1688
  %1690 = vrot.lane.b32.xlu0 %v1588, 64
  %v1691 = vpop.permute.xlu0 %1690
  %1692 = vrot.lane.b32.xlu0 %v1589, 64
  %v1693 = vpop.permute.xlu0 %1692
  %1694 = vrot.lane.b32.xlu0 %v1590, 64
  %v1695 = vpop.permute.xlu0 %1694
  %1696 = vrot.lane.b32.xlu0 %v1591, 64
  %v1697 = vpop.permute.xlu0 %1696
  %1698 = vrot.lane.b32.xlu0 %v1592, 64
  %v1699 = vpop.permute.xlu0 %1698
  %1700 = vrot.lane.b32.xlu0 %v1593, 64
  %v1701 = vpop.permute.xlu0 %1700
  %1702 = vrot.lane.b32.xlu0 %v1594, 64
  %v1703 = vpop.permute.xlu0 %1702
  %1704 = vrot.lane.b32.xlu0 %v1595, 64
  %v1705 = vpop.permute.xlu0 %1704
  %1706 = vrot.lane.b32.xlu0 %v1596, 64
  %v1707 = vpop.permute.xlu0 %1706
  %1708 = vrot.lane.b32.xlu0 %v1597, 64
  %v1709 = vpop.permute.xlu0 %1708
  %v1726 = vsel %vm581, %v1533, %v1615
  %v1727 = vsel %vm581, %v1534, %v1617
  %v1728 = vsel %vm581, %v1535, %v1619
  %v1729 = vsel %vm581, %v1536, %v1621
  %v1730 = vsel %vm581, %v1537, %v1623
  %v1731 = vsel %vm581, %v1538, %v1625
  %v1732 = vsel %vm581, %v1539, %v1627
  %v1733 = vsel %vm581, %v1540, %v1629
  %v1734 = vsel %vm581, %v1541, %v1631
  %v1735 = vsel %vm581, %v1542, %v1633
  %v1736 = vsel %vm581, %v1543, %v1635
  %v1737 = vsel %vm581, %v1544, %v1637
  %v1738 = vsel %vm581, %v1545, %v1639
  %v1739 = vsel %vm581, %v1546, %v1641
  %v1740 = vsel %vm581, %v1547, %v1643
  %v1741 = vsel %vm581, %v1548, %v1645
  %v1742 = vsel %vm1131, %v1726, %v1679
  %v1743 = vsel %vm1131, %v1727, %v1681
  %v1744 = vsel %vm1131, %v1728, %v1683
  %v1745 = vsel %vm1131, %v1729, %v1685
  %v1746 = vsel %vm1131, %v1730, %v1687
  %v1747 = vsel %vm1131, %v1731, %v1689
  %v1748 = vsel %vm1131, %v1732, %v1691
  %v1749 = vsel %vm1131, %v1733, %v1693
  %v1750 = vsel %vm1131, %v1734, %v1695
  %v1751 = vsel %vm1131, %v1735, %v1697
  %v1752 = vsel %vm1131, %v1736, %v1699
  %v1753 = vsel %vm1131, %v1737, %v1701
  %v1754 = vsel %vm1131, %v1738, %v1703
  %v1755 = vsel %vm1131, %v1739, %v1705
  %v1756 = vsel %vm1131, %v1740, %v1707
  %v1757 = vsel %vm1131, %v1741, %v1709
  %v1758 = vpack.c.bf16 %v1743, %v1742
  %v1759 = vpack.c.bf16 %v1745, %v1744
  %v1760 = vpack.c.bf16 %v1747, %v1746
  %v1761 = vpack.c.bf16 %v1749, %v1748
  %v1762 = vpack.c.bf16 %v1751, %v1750
  %v1763 = vpack.c.bf16 %v1753, %v1752
  %v1764 = vpack.c.bf16 %v1755, %v1754
  %v1765 = vpack.c.bf16 %v1757, %v1756
  %v1778 = vunpack.c.l.b16 %v1488
  %v1779 = vunpack.c.l.b16 %v1489
  %v1780 = vunpack.c.l.b16 %v1490
  %v1781 = vunpack.c.l.b16 %v1491
  %v1782 = vunpack.c.l.b16 %v1492
  %v1783 = vunpack.c.l.b16 %v1493
  %v1784 = vunpack.c.l.b16 %v1494
  %v1785 = vunpack.c.l.b16 %v1495
  %v1786 = vunpack.c.l.b16 %v1496
  %v1787 = vunpack.c.l.b16 %v1497
  %v1788 = vunpack.c.l.b16 %v1498
  %v1789 = vunpack.c.l.b16 %v1499
  %v1790 = vpack.c.b16 %v1779, %v1778
  %v1791 = vpack.c.b16 %v1781, %v1780
  %v1792 = vpack.c.b16 %v1783, %v1782
  %v1793 = vpack.c.b16 %v1785, %v1784
  %v1794 = vpack.c.b16 %v1787, %v1786
  %v1795 = vpack.c.b16 %v1789, %v1788
  %v1803 = vsel %vm1192, %v1758, 0
  %v1806 = vsel %vm1192, %v1759, 0
  %v1809 = vsel %vm1192, %v1760, 0
  %v1812 = vsel %vm1192, %v1761, 0
  %v1815 = vsel %vm1192, %v1762, 0
  %v1818 = vsel %vm1192, %v1763, 0
  %v1821 = vsel %vm1192, %v1764, 0
  %v1824 = vsel %vm1192, %v1765, 0
  %1826 = vmatpush.bf16.msra.mxu0 0
  %1827 = vmatpush.bf16.msra.mxu0 0
  %1828 = vmatpush.bf16.msra.mxu0 %v1795
  %1829 = vmatpush.bf16.msra.mxu0 %v1794
  %1830 = vmatpush.bf16.msra.mxu0 %v1793
  %1831 = vmatpush.bf16.msra.mxu0 %v1792
  %1832 = vmatpush.bf16.msra.mxu0 %v1791
  %1833 = vmatpush.bf16.msra.mxu0 %v1790
  %1834 = vmatmul.bf16.gmra.mxu0 %v1803
  %v1835 = vpop.f32.mrf.mxu0
  %v1836 = vadd.f32 0.0, %v1835
  %v1837 = vpop.f32.mrf.mxu0
  %v1838 = vadd.f32 0.0, %v1837
  %1839 = vmatmul.bf16.gmra.mxu0 %v1806
  %v1840 = vpop.f32.mrf.mxu0
  %v1841 = vadd.f32 0.0, %v1840
  %v1842 = vpop.f32.mrf.mxu0
  %v1843 = vadd.f32 0.0, %v1842
  %1844 = vmatmul.bf16.gmra.mxu0 %v1809
  %v1845 = vpop.f32.mrf.mxu0
  %v1846 = vadd.f32 0.0, %v1845
  %v1847 = vpop.f32.mrf.mxu0
  %v1848 = vadd.f32 0.0, %v1847
  %1849 = vmatmul.bf16.gmra.mxu0 %v1812
  %v1850 = vpop.f32.mrf.mxu0
  %v1851 = vadd.f32 0.0, %v1850
  %v1852 = vpop.f32.mrf.mxu0
  %v1853 = vadd.f32 0.0, %v1852
  %1854 = vmatmul.bf16.gmra.mxu0 %v1815
  %v1855 = vpop.f32.mrf.mxu0
  %v1856 = vadd.f32 0.0, %v1855
  %v1857 = vpop.f32.mrf.mxu0
  %v1858 = vadd.f32 0.0, %v1857
  %1859 = vmatmul.bf16.gmra.mxu0 %v1818
  %v1860 = vpop.f32.mrf.mxu0
  %v1861 = vadd.f32 0.0, %v1860
  %v1862 = vpop.f32.mrf.mxu0
  %v1863 = vadd.f32 0.0, %v1862
  %1864 = vmatmul.bf16.gmra.mxu0 %v1821
  %v1865 = vpop.f32.mrf.mxu0
  %v1866 = vadd.f32 0.0, %v1865
  %v1867 = vpop.f32.mrf.mxu0
  %v1868 = vadd.f32 0.0, %v1867
  %1869 = vmatmul.bf16.gmra.mxu0 %v1824
  %v1870 = vpop.f32.mrf.mxu0
  %v1871 = vadd.f32 0.0, %v1870
  %v1872 = vpop.f32.mrf.mxu0
  %v1873 = vadd.f32 0.0, %v1872
  %1874 = vdwg.mxu0
  %v1875 = vld [vmem:[%s4] sm:$0x1]
  %v1876 = vld [vmem:[%s4 + $0x1] sm:$0x1]
  %v1877 = vmul.f32 %v1836, %v300
  %v1878 = vmul.f32 %v1838, %v301
  %v1879 = vmul.f32 %v1841, %v302
  %v1880 = vmul.f32 %v1843, %v303
  %v1881 = vmul.f32 %v1846, %v304
  %v1882 = vmul.f32 %v1848, %v305
  %v1883 = vmul.f32 %v1851, %v306
  %v1884 = vmul.f32 %v1853, %v307
  %v1885 = vmul.f32 %v1856, %v308
  %v1886 = vmul.f32 %v1858, %v309
  %v1887 = vmul.f32 %v1861, %v310
  %v1888 = vmul.f32 %v1863, %v311
  %v1889 = vmul.f32 %v1866, %v312
  %v1890 = vmul.f32 %v1868, %v313
  %v1891 = vmul.f32 %v1871, %v314
  %v1892 = vmul.f32 %v1873, %v315
  %v1893 = vsel %vm1131, %v1877, 0.0
  %v1894 = vsel %vm1131, %v1878, 0.0
  %v1895 = vadd.f32 %v1893, %v1894
  %v1896 = vsel %vm1131, %v1879, 0.0
  %v1897 = vadd.f32 %v1895, %v1896
  %v1898 = vsel %vm1131, %v1880, 0.0
  %v1899 = vadd.f32 %v1897, %v1898
  %v1900 = vsel %vm1131, %v1881, 0.0
  %v1901 = vadd.f32 %v1899, %v1900
  %v1902 = vsel %vm1131, %v1882, 0.0
  %v1903 = vadd.f32 %v1901, %v1902
  %v1904 = vsel %vm1131, %v1883, 0.0
  %v1905 = vadd.f32 %v1903, %v1904
  %v1906 = vsel %vm1131, %v1884, 0.0
  %v1907 = vadd.f32 %v1905, %v1906
  %v1908 = vsel %vm1131, %v1885, 0.0
  %v1909 = vadd.f32 %v1907, %v1908
  %v1910 = vsel %vm1131, %v1886, 0.0
  %v1911 = vadd.f32 %v1909, %v1910
  %v1912 = vsel %vm1131, %v1887, 0.0
  %v1913 = vadd.f32 %v1911, %v1912
  %v1914 = vsel %vm1131, %v1888, 0.0
  %v1915 = vadd.f32 %v1913, %v1914
  %v1916 = vsel %vm1131, %v1889, 0.0
  %v1917 = vadd.f32 %v1915, %v1916
  %v1918 = vsel %vm1131, %v1890, 0.0
  %v1919 = vadd.f32 %v1917, %v1918
  %v1920 = vsel %vm1131, %v1891, 0.0
  %v1921 = vadd.f32 %v1919, %v1920
  %v1922 = vsel %vm1131, %v1892, 0.0
  %v1923 = vadd.f32 %v1921, %v1922
  %v1924 = vrot.slane %v1923, 4
  %v1925 = vadd.f32 %v1923, %v1924
  %v1926 = vrot.slane %v1925, 2
  %v1927 = vadd.f32 %v1925, %v1926
  %v1928 = vrot.slane %v1927, 1
  %v1929 = vadd.f32 %v1927, %v1928
  %v1930 = vmul.f32 %v1929, 0.015625
  %v1931 = vmul.f32 %v1836, %v1836
  %v1932 = vmul.f32 %v1838, %v1838
  %v1933 = vmul.f32 %v1841, %v1841
  %v1934 = vmul.f32 %v1843, %v1843
  %v1935 = vmul.f32 %v1846, %v1846
  %v1936 = vmul.f32 %v1848, %v1848
  %v1937 = vmul.f32 %v1851, %v1851
  %v1938 = vmul.f32 %v1853, %v1853
  %v1939 = vmul.f32 %v1856, %v1856
  %v1940 = vmul.f32 %v1858, %v1858
  %v1941 = vmul.f32 %v1861, %v1861
  %v1942 = vmul.f32 %v1863, %v1863
  %v1943 = vmul.f32 %v1866, %v1866
  %v1944 = vmul.f32 %v1868, %v1868
  %v1945 = vmul.f32 %v1871, %v1871
  %v1946 = vmul.f32 %v1873, %v1873
  %v1947 = vmul.f32 %v1931, %v300
  %v1948 = vmul.f32 %v1932, %v301
  %v1949 = vmul.f32 %v1933, %v302
  %v1950 = vmul.f32 %v1934, %v303
  %v1951 = vmul.f32 %v1935, %v304
  %v1952 = vmul.f32 %v1936, %v305
  %v1953 = vmul.f32 %v1937, %v306
  %v1954 = vmul.f32 %v1938, %v307
  %v1955 = vmul.f32 %v1939, %v308
  %v1956 = vmul.f32 %v1940, %v309
  %v1957 = vmul.f32 %v1941, %v310
  %v1958 = vmul.f32 %v1942, %v311
  %v1959 = vmul.f32 %v1943, %v312
  %v1960 = vmul.f32 %v1944, %v313
  %v1961 = vmul.f32 %v1945, %v314
  %v1962 = vmul.f32 %v1946, %v315
  %v1963 = vsel %vm1131, %v1947, 0.0
  %v1964 = vsel %vm1131, %v1948, 0.0
  %v1965 = vadd.f32 %v1963, %v1964
  %v1966 = vsel %vm1131, %v1949, 0.0
  %v1967 = vadd.f32 %v1965, %v1966
  %v1968 = vsel %vm1131, %v1950, 0.0
  %v1969 = vadd.f32 %v1967, %v1968
  %v1970 = vsel %vm1131, %v1951, 0.0
  %v1971 = vadd.f32 %v1969, %v1970
  %v1972 = vsel %vm1131, %v1952, 0.0
  %v1973 = vadd.f32 %v1971, %v1972
  %v1974 = vsel %vm1131, %v1953, 0.0
  %v1975 = vadd.f32 %v1973, %v1974
  %v1976 = vsel %vm1131, %v1954, 0.0
  %v1977 = vadd.f32 %v1975, %v1976
  %v1978 = vsel %vm1131, %v1955, 0.0
  %v1979 = vadd.f32 %v1977, %v1978
  %v1980 = vsel %vm1131, %v1956, 0.0
  %v1981 = vadd.f32 %v1979, %v1980
  %v1982 = vsel %vm1131, %v1957, 0.0
  %v1983 = vadd.f32 %v1981, %v1982
  %v1984 = vsel %vm1131, %v1958, 0.0
  %v1985 = vadd.f32 %v1983, %v1984
  %v1986 = vsel %vm1131, %v1959, 0.0
  %v1987 = vadd.f32 %v1985, %v1986
  %v1988 = vsel %vm1131, %v1960, 0.0
  %v1989 = vadd.f32 %v1987, %v1988
  %v1990 = vsel %vm1131, %v1961, 0.0
  %v1991 = vadd.f32 %v1989, %v1990
  %v1992 = vsel %vm1131, %v1962, 0.0
  %v1993 = vadd.f32 %v1991, %v1992
  %v1994 = vrot.slane %v1993, 4
  %v1995 = vadd.f32 %v1993, %v1994
  %v1996 = vrot.slane %v1995, 2
  %v1997 = vadd.f32 %v1995, %v1996
  %v1998 = vrot.slane %v1997, 1
  %v1999 = vadd.f32 %v1997, %v1998
  %v2000 = vmul.f32 %v1999, 0.015625
  %v2001 = vmul.f32 %v1930, %v1930
  %v2002 = vsub.f32 %v2000, %v2001
  %v2003 = vmax.f32 %v2002, 0.0
  %v2004 = vsub.f32 %v1836, %v1930
  %v2005 = vsub.f32 %v1838, %v1930
  %v2006 = vsub.f32 %v1841, %v1930
  %v2007 = vsub.f32 %v1843, %v1930
  %v2008 = vsub.f32 %v1846, %v1930
  %v2009 = vsub.f32 %v1848, %v1930
  %v2010 = vsub.f32 %v1851, %v1930
  %v2011 = vsub.f32 %v1853, %v1930
  %v2012 = vsub.f32 %v1856, %v1930
  %v2013 = vsub.f32 %v1858, %v1930
  %v2014 = vsub.f32 %v1861, %v1930
  %v2015 = vsub.f32 %v1863, %v1930
  %v2016 = vsub.f32 %v1866, %v1930
  %v2017 = vsub.f32 %v1868, %v1930
  %v2018 = vsub.f32 %v1871, %v1930
  %v2019 = vsub.f32 %v1873, %v1930
  %v2020 = vperm.slane %v1875, 0
  %v2021 = vmul.f32 %v2020, %v2004
  %v2022 = vmul.f32 %v2020, %v2005
  %v2023 = vmul.f32 %v2020, %v2006
  %v2024 = vmul.f32 %v2020, %v2007
  %v2025 = vmul.f32 %v2020, %v2008
  %v2026 = vmul.f32 %v2020, %v2009
  %v2027 = vmul.f32 %v2020, %v2010
  %v2028 = vmul.f32 %v2020, %v2011
  %v2029 = vmul.f32 %v2020, %v2012
  %v2030 = vmul.f32 %v2020, %v2013
  %v2031 = vmul.f32 %v2020, %v2014
  %v2032 = vmul.f32 %v2020, %v2015
  %v2033 = vmul.f32 %v2020, %v2016
  %v2034 = vmul.f32 %v2020, %v2017
  %v2035 = vmul.f32 %v2020, %v2018
  %v2036 = vmul.f32 %v2020, %v2019
  %v2037 = vadd.f32 %v2003, 1e-05
  %v2038 = vrsqrt.pop %v2037
  %v2039 = vmul.f32 %v2038, %v2037
  %v2040 = vmul.f32 %v2039, %v2038
  %v2041 = vmul.f32 0.5, %v2040
  %v2042 = vsub.f32 1.5, %v2041
  %v2043 = vmul.f32 %v2038, %v2042
  %vm2044 = vweird.f32 %v2037
  %vm2045 = vweird.f32 %v2038
  %vm2046 = vmor %vm2044, %vm2045
  %v2047 = vsel %vm2046, %v2038, %v2043
  %v2048 = vmul.f32 %v2021, %v2047
  %v2049 = vmul.f32 %v2022, %v2047
  %v2050 = vmul.f32 %v2023, %v2047
  %v2051 = vmul.f32 %v2024, %v2047
  %v2052 = vmul.f32 %v2025, %v2047
  %v2053 = vmul.f32 %v2026, %v2047
  %v2054 = vmul.f32 %v2027, %v2047
  %v2055 = vmul.f32 %v2028, %v2047
  %v2056 = vmul.f32 %v2029, %v2047
  %v2057 = vmul.f32 %v2030, %v2047
  %v2058 = vmul.f32 %v2031, %v2047
  %v2059 = vmul.f32 %v2032, %v2047
  %v2060 = vmul.f32 %v2033, %v2047
  %v2061 = vmul.f32 %v2034, %v2047
  %v2062 = vmul.f32 %v2035, %v2047
  %v2063 = vmul.f32 %v2036, %v2047
  %v2064 = vperm.slane %v1876, 0
  %v2065 = vadd.f32 %v2048, %v2064
  %v2066 = vadd.f32 %v2049, %v2064
  %v2067 = vadd.f32 %v2050, %v2064
  %v2068 = vadd.f32 %v2051, %v2064
  %v2069 = vadd.f32 %v2052, %v2064
  %v2070 = vadd.f32 %v2053, %v2064
  %v2071 = vadd.f32 %v2054, %v2064
  %v2072 = vadd.f32 %v2055, %v2064
  %v2073 = vadd.f32 %v2056, %v2064
  %v2074 = vadd.f32 %v2057, %v2064
  %v2075 = vadd.f32 %v2058, %v2064
  %v2076 = vadd.f32 %v2059, %v2064
  %v2077 = vadd.f32 %v2060, %v2064
  %v2078 = vadd.f32 %v2061, %v2064
  %v2079 = vadd.f32 %v2062, %v2064
  %v2080 = vadd.f32 %v2063, %v2064
  %v2081 = vld [vmem:[%s2 + $0x30] sm:$0xf]
  %v2082 = vld [vmem:[%s2 + $0x34] sm:$0xf]
  %v2083 = vld [vmem:[%s2 + $0x38] sm:$0xf]
  %v2084 = vld [vmem:[%s2 + $0x3c] sm:$0xf]
  %v2085 = vld [vmem:[%s2 + $0x40] sm:$0xf]
  %v2086 = vld [vmem:[%s2 + $0x44] sm:$0xf]
  %v2087 = vld [vmem:[%s2 + $0x48] sm:$0xf]
  %v2088 = vld [vmem:[%s2 + $0x4c] sm:$0xf]
  %v2089 = vld [vmem:[%s2 + $0x50] sm:$0xf]
  %v2090 = vld [vmem:[%s2 + $0x54] sm:$0xf]
  %v2091 = vld [vmem:[%s2 + $0x58] sm:$0xf]
  %v2092 = vld [vmem:[%s2 + $0x5c] sm:$0xf]
  %v2093 = vld [vmem:[%s2 + $0x60] sm:$0xf]
  %v2094 = vld [vmem:[%s2 + $0x64] sm:$0xf]
  %v2095 = vld [vmem:[%s2 + $0x68] sm:$0xf]
  %v2096 = vld [vmem:[%s2 + $0x6c] sm:$0xf]
  %v2097 = vld [vmem:[%s2 + $0x70] sm:$0xf]
  %v2098 = vld [vmem:[%s2 + $0x74] sm:$0xf]
  %v2099 = vld [vmem:[%s2 + $0x78] sm:$0xf]
  %v2100 = vld [vmem:[%s2 + $0x7c] sm:$0xf]
  %v2101 = vld [vmem:[%s2 + $0x80] sm:$0xf]
  %v2102 = vld [vmem:[%s2 + $0x84] sm:$0xf]
  %v2103 = vld [vmem:[%s2 + $0x88] sm:$0xf]
  %v2104 = vld [vmem:[%s2 + $0x8c] sm:$0xf]
  %v2105 = vrot.slane %v2065, 6
  %v2106 = vrot.slane %v2066, 6
  %v2107 = vrot.slane %v2067, 6
  %v2108 = vrot.slane %v2068, 6
  %v2109 = vrot.slane %v2069, 6
  %v2110 = vrot.slane %v2070, 6
  %v2111 = vrot.slane %v2071, 6
  %v2112 = vrot.slane %v2072, 6
  %v2113 = vrot.slane %v2073, 6
  %v2114 = vrot.slane %v2074, 6
  %v2115 = vrot.slane %v2075, 6
  %v2116 = vrot.slane %v2076, 6
  %v2117 = vrot.slane %v2077, 6
  %v2118 = vrot.slane %v2078, 6
  %v2119 = vrot.slane %v2079, 6
  %v2120 = vrot.slane %v2080, 6
  %v2121 = vsel %vm1516, %v2119, %v2120
  %v2122 = vsel %vm1516, %v2118, %v2119
  %v2123 = vsel %vm1516, %v2117, %v2118
  %v2124 = vsel %vm1516, %v2116, %v2117
  %v2125 = vsel %vm1516, %v2115, %v2116
  %v2126 = vsel %vm1516, %v2114, %v2115
  %v2127 = vsel %vm1516, %v2113, %v2114
  %v2128 = vsel %vm1516, %v2112, %v2113
  %v2129 = vsel %vm1516, %v2111, %v2112
  %v2130 = vsel %vm1516, %v2110, %v2111
  %v2131 = vsel %vm1516, %v2109, %v2110
  %v2132 = vsel %vm1516, %v2108, %v2109
  %v2133 = vsel %vm1516, %v2107, %v2108
  %v2134 = vsel %vm1516, %v2106, %v2107
  %v2135 = vsel %vm1516, %v2105, %v2106
  %v2136 = vsel %vm1516, %v2120, %v2105
  %v2137 = vmul.f32 %v2136, %v188
  %v2138 = vmul.f32 %v2135, %v189
  %v2139 = vmul.f32 %v2134, %v190
  %v2140 = vmul.f32 %v2133, %v191
  %v2141 = vmul.f32 %v2132, %v192
  %v2142 = vmul.f32 %v2131, %v193
  %v2143 = vmul.f32 %v2130, %v194
  %v2144 = vmul.f32 %v2129, %v195
  %v2145 = vmul.f32 %v2128, %v196
  %v2146 = vmul.f32 %v2127, %v197
  %v2147 = vmul.f32 %v2126, %v198
  %v2148 = vmul.f32 %v2125, %v199
  %v2149 = vmul.f32 %v2124, %v200
  %v2150 = vmul.f32 %v2123, %v201
  %v2151 = vmul.f32 %v2122, %v202
  %v2152 = vmul.f32 %v2121, %v203
  %v2153 = vrot.slane %v2065, 2
  %v2154 = vrot.slane %v2066, 2
  %v2155 = vrot.slane %v2067, 2
  %v2156 = vrot.slane %v2068, 2
  %v2157 = vrot.slane %v2069, 2
  %v2158 = vrot.slane %v2070, 2
  %v2159 = vrot.slane %v2071, 2
  %v2160 = vrot.slane %v2072, 2
  %v2161 = vrot.slane %v2073, 2
  %v2162 = vrot.slane %v2074, 2
  %v2163 = vrot.slane %v2075, 2
  %v2164 = vrot.slane %v2076, 2
  %v2165 = vrot.slane %v2077, 2
  %v2166 = vrot.slane %v2078, 2
  %v2167 = vrot.slane %v2079, 2
  %v2168 = vrot.slane %v2080, 2
  %v2169 = vsel %vm1565, %v2167, %v2168
  %v2170 = vsel %vm1565, %v2166, %v2167
  %v2171 = vsel %vm1565, %v2165, %v2166
  %v2172 = vsel %vm1565, %v2164, %v2165
  %v2173 = vsel %vm1565, %v2163, %v2164
  %v2174 = vsel %vm1565, %v2162, %v2163
  %v2175 = vsel %vm1565, %v2161, %v2162
  %v2176 = vsel %vm1565, %v2160, %v2161
  %v2177 = vsel %vm1565, %v2159, %v2160
  %v2178 = vsel %vm1565, %v2158, %v2159
  %v2179 = vsel %vm1565, %v2157, %v2158
  %v2180 = vsel %vm1565, %v2156, %v2157
  %v2181 = vsel %vm1565, %v2155, %v2156
  %v2182 = vsel %vm1565, %v2154, %v2155
  %v2183 = vsel %vm1565, %v2153, %v2154
  %v2184 = vsel %vm1565, %v2168, %v2153
  %v2185 = vmul.f32 %v2183, %v236
  %v2186 = vmul.f32 %v2182, %v237
  %v2187 = vmul.f32 %v2181, %v238
  %v2188 = vmul.f32 %v2180, %v239
  %v2189 = vmul.f32 %v2179, %v240
  %v2190 = vmul.f32 %v2178, %v241
  %v2191 = vmul.f32 %v2177, %v242
  %v2192 = vmul.f32 %v2176, %v243
  %v2193 = vmul.f32 %v2175, %v244
  %v2194 = vmul.f32 %v2174, %v245
  %v2195 = vmul.f32 %v2173, %v246
  %v2196 = vmul.f32 %v2172, %v247
  %v2197 = vmul.f32 %v2171, %v248
  %v2198 = vmul.f32 %v2170, %v249
  %v2199 = vmul.f32 %v2169, %v250
  %v2200 = vmul.f32 %v2184, %v251
  %2217 = vrot.lane.b32.xlu0 %v2065, 64
  %v2218 = vpop.permute.xlu0 %2217
  %2219 = vrot.lane.b32.xlu0 %v2066, 64
  %v2220 = vpop.permute.xlu0 %2219
  %2221 = vrot.lane.b32.xlu0 %v2067, 64
  %v2222 = vpop.permute.xlu0 %2221
  %2223 = vrot.lane.b32.xlu0 %v2068, 64
  %v2224 = vpop.permute.xlu0 %2223
  %2225 = vrot.lane.b32.xlu0 %v2069, 64
  %v2226 = vpop.permute.xlu0 %2225
  %2227 = vrot.lane.b32.xlu0 %v2070, 64
  %v2228 = vpop.permute.xlu0 %2227
  %2229 = vrot.lane.b32.xlu0 %v2071, 64
  %v2230 = vpop.permute.xlu0 %2229
  %2231 = vrot.lane.b32.xlu0 %v2072, 64
  %v2232 = vpop.permute.xlu0 %2231
  %2233 = vrot.lane.b32.xlu0 %v2073, 64
  %v2234 = vpop.permute.xlu0 %2233
  %2235 = vrot.lane.b32.xlu0 %v2074, 64
  %v2236 = vpop.permute.xlu0 %2235
  %2237 = vrot.lane.b32.xlu0 %v2075, 64
  %v2238 = vpop.permute.xlu0 %2237
  %2239 = vrot.lane.b32.xlu0 %v2076, 64
  %v2240 = vpop.permute.xlu0 %2239
  %2241 = vrot.lane.b32.xlu0 %v2077, 64
  %v2242 = vpop.permute.xlu0 %2241
  %2243 = vrot.lane.b32.xlu0 %v2078, 64
  %v2244 = vpop.permute.xlu0 %2243
  %2245 = vrot.lane.b32.xlu0 %v2079, 64
  %v2246 = vpop.permute.xlu0 %2245
  %2247 = vrot.lane.b32.xlu0 %v2080, 64
  %v2248 = vpop.permute.xlu0 %2247
  %v2265 = vsel %vm1131, %v2137, %v2218
  %v2266 = vsel %vm1131, %v2138, %v2220
  %v2267 = vsel %vm1131, %v2139, %v2222
  %v2268 = vsel %vm1131, %v2140, %v2224
  %v2269 = vsel %vm1131, %v2141, %v2226
  %v2270 = vsel %vm1131, %v2142, %v2228
  %v2271 = vsel %vm1131, %v2143, %v2230
  %v2272 = vsel %vm1131, %v2144, %v2232
  %v2273 = vsel %vm1131, %v2145, %v2234
  %v2274 = vsel %vm1131, %v2146, %v2236
  %v2275 = vsel %vm1131, %v2147, %v2238
  %v2276 = vsel %vm1131, %v2148, %v2240
  %v2277 = vsel %vm1131, %v2149, %v2242
  %v2278 = vsel %vm1131, %v2150, %v2244
  %v2279 = vsel %vm1131, %v2151, %v2246
  %v2280 = vsel %vm1131, %v2152, %v2248
  %v2281 = vpack.c.bf16 %v2266, %v2265
  %v2282 = vpack.c.bf16 %v2186, %v2185
  %v2283 = vpack.c.bf16 %v2268, %v2267
  %v2284 = vpack.c.bf16 %v2188, %v2187
  %v2285 = vpack.c.bf16 %v2270, %v2269
  %v2286 = vpack.c.bf16 %v2190, %v2189
  %v2287 = vpack.c.bf16 %v2272, %v2271
  %v2288 = vpack.c.bf16 %v2192, %v2191
  %v2289 = vpack.c.bf16 %v2274, %v2273
  %v2290 = vpack.c.bf16 %v2194, %v2193
  %v2291 = vpack.c.bf16 %v2276, %v2275
  %v2292 = vpack.c.bf16 %v2196, %v2195
  %v2293 = vpack.c.bf16 %v2278, %v2277
  %v2294 = vpack.c.bf16 %v2198, %v2197
  %v2295 = vpack.c.bf16 %v2280, %v2279
  %v2296 = vpack.c.bf16 %v2200, %v2199
  %v2321 = vunpack.c.l.b16 %v2081
  %v2322 = vunpack.c.l.b16 %v2082
  %v2323 = vunpack.c.l.b16 %v2083
  %v2324 = vunpack.c.l.b16 %v2084
  %v2325 = vunpack.c.l.b16 %v2085
  %v2326 = vunpack.c.l.b16 %v2086
  %v2327 = vunpack.c.l.b16 %v2087
  %v2328 = vunpack.c.l.b16 %v2088
  %v2329 = vunpack.c.l.b16 %v2089
  %v2330 = vunpack.c.l.b16 %v2090
  %v2331 = vunpack.c.l.b16 %v2091
  %v2332 = vunpack.c.l.b16 %v2092
  %v2333 = vunpack.c.l.b16 %v2093
  %v2334 = vunpack.c.l.b16 %v2094
  %v2335 = vunpack.c.l.b16 %v2095
  %v2336 = vunpack.c.l.b16 %v2096
  %v2337 = vunpack.c.l.b16 %v2097
  %v2338 = vunpack.c.l.b16 %v2098
  %v2339 = vunpack.c.l.b16 %v2099
  %v2340 = vunpack.c.l.b16 %v2100
  %v2341 = vunpack.c.l.b16 %v2101
  %v2342 = vunpack.c.l.b16 %v2102
  %v2343 = vunpack.c.l.b16 %v2103
  %v2344 = vunpack.c.l.b16 %v2104
  %v2345 = vpack.c.b16 %v2322, %v2321
  %v2346 = vpack.c.b16 %v2324, %v2323
  %v2347 = vpack.c.b16 %v2326, %v2325
  %v2348 = vpack.c.b16 %v2328, %v2327
  %v2349 = vpack.c.b16 %v2330, %v2329
  %v2350 = vpack.c.b16 %v2332, %v2331
  %v2351 = vpack.c.b16 %v2334, %v2333
  %v2352 = vpack.c.b16 %v2336, %v2335
  %v2353 = vpack.c.b16 %v2338, %v2337
  %v2354 = vpack.c.b16 %v2340, %v2339
  %v2355 = vpack.c.b16 %v2342, %v2341
  %v2356 = vpack.c.b16 %v2344, %v2343
  %v2370 = vsel %vm1131, %v2282, 0
  %v2373 = vsel %vm1131, %v2284, 0
  %v2376 = vsel %vm1131, %v2286, 0
  %v2379 = vsel %vm1131, %v2288, 0
  %v2382 = vsel %vm1131, %v2290, 0
  %v2385 = vsel %vm1131, %v2292, 0
  %v2388 = vsel %vm1131, %v2294, 0
  %v2391 = vsel %vm1131, %v2296, 0
  %2393 = vmatpush.bf16.msra.mxu0 %v2352
  %2394 = vmatpush.bf16.msra.mxu0 %v2351
  %2395 = vmatpush.bf16.msra.mxu0 %v2350
  %2396 = vmatpush.bf16.msra.mxu0 %v2349
  %2397 = vmatpush.bf16.msra.mxu0 %v2348
  %2398 = vmatpush.bf16.msra.mxu0 %v2347
  %2399 = vmatpush.bf16.msra.mxu0 %v2346
  %2400 = vmatpush.bf16.msra.mxu0 %v2345
  %2401 = vmatmul.bf16.gmra.mxu0 %v2281
  %v2402 = vpop.f32.mrf.mxu0
  %v2403 = vadd.f32 0.0, %v2402
  %v2404 = vpop.f32.mrf.mxu0
  %v2405 = vadd.f32 0.0, %v2404
  %2406 = vmatmul.bf16.gmra.mxu0 %v2283
  %v2407 = vpop.f32.mrf.mxu0
  %v2408 = vadd.f32 0.0, %v2407
  %v2409 = vpop.f32.mrf.mxu0
  %v2410 = vadd.f32 0.0, %v2409
  %2411 = vmatmul.bf16.gmra.mxu0 %v2285
  %v2412 = vpop.f32.mrf.mxu0
  %v2413 = vadd.f32 0.0, %v2412
  %v2414 = vpop.f32.mrf.mxu0
  %v2415 = vadd.f32 0.0, %v2414
  %2416 = vmatmul.bf16.gmra.mxu0 %v2287
  %v2417 = vpop.f32.mrf.mxu0
  %v2418 = vadd.f32 0.0, %v2417
  %v2419 = vpop.f32.mrf.mxu0
  %v2420 = vadd.f32 0.0, %v2419
  %2421 = vmatmul.bf16.gmra.mxu0 %v2289
  %v2422 = vpop.f32.mrf.mxu0
  %v2423 = vadd.f32 0.0, %v2422
  %v2424 = vpop.f32.mrf.mxu0
  %v2425 = vadd.f32 0.0, %v2424
  %2426 = vmatmul.bf16.gmra.mxu0 %v2291
  %v2427 = vpop.f32.mrf.mxu0
  %v2428 = vadd.f32 0.0, %v2427
  %v2429 = vpop.f32.mrf.mxu0
  %v2430 = vadd.f32 0.0, %v2429
  %2431 = vmatmul.bf16.gmra.mxu0 %v2293
  %v2432 = vpop.f32.mrf.mxu0
  %v2433 = vadd.f32 0.0, %v2432
  %v2434 = vpop.f32.mrf.mxu0
  %v2435 = vadd.f32 0.0, %v2434
  %2436 = vmatmul.bf16.gmra.mxu0 %v2295
  %v2437 = vpop.f32.mrf.mxu0
  %v2438 = vadd.f32 0.0, %v2437
  %v2439 = vpop.f32.mrf.mxu0
  %v2440 = vadd.f32 0.0, %v2439
  %2441 = vdwg.mxu0
  %2442 = vmatpush.bf16.msra.mxu0 0
  %2443 = vmatpush.bf16.msra.mxu0 0
  %2444 = vmatpush.bf16.msra.mxu0 0
  %2445 = vmatpush.bf16.msra.mxu0 0
  %2446 = vmatpush.bf16.msra.mxu0 %v2356
  %2447 = vmatpush.bf16.msra.mxu0 %v2355
  %2448 = vmatpush.bf16.msra.mxu0 %v2354
  %2449 = vmatpush.bf16.msra.mxu0 %v2353
  %2450 = vmatmul.bf16.gmra.mxu0 %v2370
  %v2451 = vpop.f32.mrf.mxu0
  %v2452 = vadd.f32 %v2403, %v2451
  %v2453 = vpop.f32.mrf.mxu0
  %v2454 = vadd.f32 %v2405, %v2453
  %2455 = vmatmul.bf16.gmra.mxu0 %v2373
  %v2456 = vpop.f32.mrf.mxu0
  %v2457 = vadd.f32 %v2408, %v2456
  %v2458 = vpop.f32.mrf.mxu0
  %v2459 = vadd.f32 %v2410, %v2458
  %2460 = vmatmul.bf16.gmra.mxu0 %v2376
  %v2461 = vpop.f32.mrf.mxu0
  %v2462 = vadd.f32 %v2413, %v2461
  %v2463 = vpop.f32.mrf.mxu0
  %v2464 = vadd.f32 %v2415, %v2463
  %2465 = vmatmul.bf16.gmra.mxu0 %v2379
  %v2466 = vpop.f32.mrf.mxu0
  %v2467 = vadd.f32 %v2418, %v2466
  %v2468 = vpop.f32.mrf.mxu0
  %v2469 = vadd.f32 %v2420, %v2468
  %2470 = vmatmul.bf16.gmra.mxu0 %v2382
  %v2471 = vpop.f32.mrf.mxu0
  %v2472 = vadd.f32 %v2423, %v2471
  %v2473 = vpop.f32.mrf.mxu0
  %v2474 = vadd.f32 %v2425, %v2473
  %2475 = vmatmul.bf16.gmra.mxu0 %v2385
  %v2476 = vpop.f32.mrf.mxu0
  %v2477 = vadd.f32 %v2428, %v2476
  %v2478 = vpop.f32.mrf.mxu0
  %v2479 = vadd.f32 %v2430, %v2478
  %2480 = vmatmul.bf16.gmra.mxu0 %v2388
  %v2481 = vpop.f32.mrf.mxu0
  %v2482 = vadd.f32 %v2433, %v2481
  %v2483 = vpop.f32.mrf.mxu0
  %v2484 = vadd.f32 %v2435, %v2483
  %2485 = vmatmul.bf16.gmra.mxu0 %v2391
  %v2486 = vpop.f32.mrf.mxu0
  %v2487 = vadd.f32 %v2438, %v2486
  %v2488 = vpop.f32.mrf.mxu0
  %v2489 = vadd.f32 %v2440, %v2488
  %2490 = vdwg.mxu0
  %v2491 = vld [vmem:[%s4 + $0x2] sm:$0x1]
  %v2492 = vld [vmem:[%s4 + $0x3] sm:$0x1]
  %v2493 = vmul.f32 %v2452, %v300
  %v2494 = vmul.f32 %v2454, %v301
  %v2495 = vmul.f32 %v2457, %v302
  %v2496 = vmul.f32 %v2459, %v303
  %v2497 = vmul.f32 %v2462, %v304
  %v2498 = vmul.f32 %v2464, %v305
  %v2499 = vmul.f32 %v2467, %v306
  %v2500 = vmul.f32 %v2469, %v307
  %v2501 = vmul.f32 %v2472, %v308
  %v2502 = vmul.f32 %v2474, %v309
  %v2503 = vmul.f32 %v2477, %v310
  %v2504 = vmul.f32 %v2479, %v311
  %v2505 = vmul.f32 %v2482, %v312
  %v2506 = vmul.f32 %v2484, %v313
  %v2507 = vmul.f32 %v2487, %v314
  %v2508 = vmul.f32 %v2489, %v315
  %v2509 = vsel %vm1131, %v2493, 0.0
  %v2510 = vsel %vm1131, %v2494, 0.0
  %v2511 = vadd.f32 %v2509, %v2510
  %v2512 = vsel %vm1131, %v2495, 0.0
  %v2513 = vadd.f32 %v2511, %v2512
  %v2514 = vsel %vm1131, %v2496, 0.0
  %v2515 = vadd.f32 %v2513, %v2514
  %v2516 = vsel %vm1131, %v2497, 0.0
  %v2517 = vadd.f32 %v2515, %v2516
  %v2518 = vsel %vm1131, %v2498, 0.0
  %v2519 = vadd.f32 %v2517, %v2518
  %v2520 = vsel %vm1131, %v2499, 0.0
  %v2521 = vadd.f32 %v2519, %v2520
  %v2522 = vsel %vm1131, %v2500, 0.0
  %v2523 = vadd.f32 %v2521, %v2522
  %v2524 = vsel %vm1131, %v2501, 0.0
  %v2525 = vadd.f32 %v2523, %v2524
  %v2526 = vsel %vm1131, %v2502, 0.0
  %v2527 = vadd.f32 %v2525, %v2526
  %v2528 = vsel %vm1131, %v2503, 0.0
  %v2529 = vadd.f32 %v2527, %v2528
  %v2530 = vsel %vm1131, %v2504, 0.0
  %v2531 = vadd.f32 %v2529, %v2530
  %v2532 = vsel %vm1131, %v2505, 0.0
  %v2533 = vadd.f32 %v2531, %v2532
  %v2534 = vsel %vm1131, %v2506, 0.0
  %v2535 = vadd.f32 %v2533, %v2534
  %v2536 = vsel %vm1131, %v2507, 0.0
  %v2537 = vadd.f32 %v2535, %v2536
  %v2538 = vsel %vm1131, %v2508, 0.0
  %v2539 = vadd.f32 %v2537, %v2538
  %v2540 = vrot.slane %v2539, 4
  %v2541 = vadd.f32 %v2539, %v2540
  %v2542 = vrot.slane %v2541, 2
  %v2543 = vadd.f32 %v2541, %v2542
  %v2544 = vrot.slane %v2543, 1
  %v2545 = vadd.f32 %v2543, %v2544
  %v2546 = vmul.f32 %v2545, 0.015625
  %v2547 = vmul.f32 %v2452, %v2452
  %v2548 = vmul.f32 %v2454, %v2454
  %v2549 = vmul.f32 %v2457, %v2457
  %v2550 = vmul.f32 %v2459, %v2459
  %v2551 = vmul.f32 %v2462, %v2462
  %v2552 = vmul.f32 %v2464, %v2464
  %v2553 = vmul.f32 %v2467, %v2467
  %v2554 = vmul.f32 %v2469, %v2469
  %v2555 = vmul.f32 %v2472, %v2472
  %v2556 = vmul.f32 %v2474, %v2474
  %v2557 = vmul.f32 %v2477, %v2477
  %v2558 = vmul.f32 %v2479, %v2479
  %v2559 = vmul.f32 %v2482, %v2482
  %v2560 = vmul.f32 %v2484, %v2484
  %v2561 = vmul.f32 %v2487, %v2487
  %v2562 = vmul.f32 %v2489, %v2489
  %v2563 = vmul.f32 %v2547, %v300
  %v2564 = vmul.f32 %v2548, %v301
  %v2565 = vmul.f32 %v2549, %v302
  %v2566 = vmul.f32 %v2550, %v303
  %v2567 = vmul.f32 %v2551, %v304
  %v2568 = vmul.f32 %v2552, %v305
  %v2569 = vmul.f32 %v2553, %v306
  %v2570 = vmul.f32 %v2554, %v307
  %v2571 = vmul.f32 %v2555, %v308
  %v2572 = vmul.f32 %v2556, %v309
  %v2573 = vmul.f32 %v2557, %v310
  %v2574 = vmul.f32 %v2558, %v311
  %v2575 = vmul.f32 %v2559, %v312
  %v2576 = vmul.f32 %v2560, %v313
  %v2577 = vmul.f32 %v2561, %v314
  %v2578 = vmul.f32 %v2562, %v315
  %v2579 = vsel %vm1131, %v2563, 0.0
  %v2580 = vsel %vm1131, %v2564, 0.0
  %v2581 = vadd.f32 %v2579, %v2580
  %v2582 = vsel %vm1131, %v2565, 0.0
  %v2583 = vadd.f32 %v2581, %v2582
  %v2584 = vsel %vm1131, %v2566, 0.0
  %v2585 = vadd.f32 %v2583, %v2584
  %v2586 = vsel %vm1131, %v2567, 0.0
  %v2587 = vadd.f32 %v2585, %v2586
  %v2588 = vsel %vm1131, %v2568, 0.0
  %v2589 = vadd.f32 %v2587, %v2588
  %v2590 = vsel %vm1131, %v2569, 0.0
  %v2591 = vadd.f32 %v2589, %v2590
  %v2592 = vsel %vm1131, %v2570, 0.0
  %v2593 = vadd.f32 %v2591, %v2592
  %v2594 = vsel %vm1131, %v2571, 0.0
  %v2595 = vadd.f32 %v2593, %v2594
  %v2596 = vsel %vm1131, %v2572, 0.0
  %v2597 = vadd.f32 %v2595, %v2596
  %v2598 = vsel %vm1131, %v2573, 0.0
  %v2599 = vadd.f32 %v2597, %v2598
  %v2600 = vsel %vm1131, %v2574, 0.0
  %v2601 = vadd.f32 %v2599, %v2600
  %v2602 = vsel %vm1131, %v2575, 0.0
  %v2603 = vadd.f32 %v2601, %v2602
  %v2604 = vsel %vm1131, %v2576, 0.0
  %v2605 = vadd.f32 %v2603, %v2604
  %v2606 = vsel %vm1131, %v2577, 0.0
  %v2607 = vadd.f32 %v2605, %v2606
  %v2608 = vsel %vm1131, %v2578, 0.0
  %v2609 = vadd.f32 %v2607, %v2608
  %v2610 = vrot.slane %v2609, 4
  %v2611 = vadd.f32 %v2609, %v2610
  %v2612 = vrot.slane %v2611, 2
  %v2613 = vadd.f32 %v2611, %v2612
  %v2614 = vrot.slane %v2613, 1
  %v2615 = vadd.f32 %v2613, %v2614
  %v2616 = vmul.f32 %v2615, 0.015625
  %v2617 = vmul.f32 %v2546, %v2546
  %v2618 = vsub.f32 %v2616, %v2617
  %v2619 = vmax.f32 %v2618, 0.0
  %v2620 = vsub.f32 %v2452, %v2546
  %v2621 = vsub.f32 %v2454, %v2546
  %v2622 = vsub.f32 %v2457, %v2546
  %v2623 = vsub.f32 %v2459, %v2546
  %v2624 = vsub.f32 %v2462, %v2546
  %v2625 = vsub.f32 %v2464, %v2546
  %v2626 = vsub.f32 %v2467, %v2546
  %v2627 = vsub.f32 %v2469, %v2546
  %v2628 = vsub.f32 %v2472, %v2546
  %v2629 = vsub.f32 %v2474, %v2546
  %v2630 = vsub.f32 %v2477, %v2546
  %v2631 = vsub.f32 %v2479, %v2546
  %v2632 = vsub.f32 %v2482, %v2546
  %v2633 = vsub.f32 %v2484, %v2546
  %v2634 = vsub.f32 %v2487, %v2546
  %v2635 = vsub.f32 %v2489, %v2546
  %v2636 = vperm.slane %v2491, 0
  %v2637 = vmul.f32 %v2636, %v2620
  %v2638 = vmul.f32 %v2636, %v2621
  %v2639 = vmul.f32 %v2636, %v2622
  %v2640 = vmul.f32 %v2636, %v2623
  %v2641 = vmul.f32 %v2636, %v2624
  %v2642 = vmul.f32 %v2636, %v2625
  %v2643 = vmul.f32 %v2636, %v2626
  %v2644 = vmul.f32 %v2636, %v2627
  %v2645 = vmul.f32 %v2636, %v2628
  %v2646 = vmul.f32 %v2636, %v2629
  %v2647 = vmul.f32 %v2636, %v2630
  %v2648 = vmul.f32 %v2636, %v2631
  %v2649 = vmul.f32 %v2636, %v2632
  %v2650 = vmul.f32 %v2636, %v2633
  %v2651 = vmul.f32 %v2636, %v2634
  %v2652 = vmul.f32 %v2636, %v2635
  %v2653 = vadd.f32 %v2619, 1e-05
  %v2654 = vrsqrt.pop %v2653
  %v2655 = vmul.f32 %v2654, %v2653
  %v2656 = vmul.f32 %v2655, %v2654
  %v2657 = vmul.f32 0.5, %v2656
  %v2658 = vsub.f32 1.5, %v2657
  %v2659 = vmul.f32 %v2654, %v2658
  %vm2660 = vweird.f32 %v2653
  %vm2661 = vweird.f32 %v2654
  %vm2662 = vmor %vm2660, %vm2661
  %v2663 = vsel %vm2662, %v2654, %v2659
  %v2664 = vmul.f32 %v2637, %v2663
  %v2665 = vmul.f32 %v2638, %v2663
  %v2666 = vmul.f32 %v2639, %v2663
  %v2667 = vmul.f32 %v2640, %v2663
  %v2668 = vmul.f32 %v2641, %v2663
  %v2669 = vmul.f32 %v2642, %v2663
  %v2670 = vmul.f32 %v2643, %v2663
  %v2671 = vmul.f32 %v2644, %v2663
  %v2672 = vmul.f32 %v2645, %v2663
  %v2673 = vmul.f32 %v2646, %v2663
  %v2674 = vmul.f32 %v2647, %v2663
  %v2675 = vmul.f32 %v2648, %v2663
  %v2676 = vmul.f32 %v2649, %v2663
  %v2677 = vmul.f32 %v2650, %v2663
  %v2678 = vmul.f32 %v2651, %v2663
  %v2679 = vmul.f32 %v2652, %v2663
  %v2680 = vperm.slane %v2492, 0
  %v2681 = vadd.f32 %v2664, %v2680
  %v2682 = vadd.f32 %v2665, %v2680
  %v2683 = vadd.f32 %v2666, %v2680
  %v2684 = vadd.f32 %v2667, %v2680
  %v2685 = vadd.f32 %v2668, %v2680
  %v2686 = vadd.f32 %v2669, %v2680
  %v2687 = vadd.f32 %v2670, %v2680
  %v2688 = vadd.f32 %v2671, %v2680
  %v2689 = vadd.f32 %v2672, %v2680
  %v2690 = vadd.f32 %v2673, %v2680
  %v2691 = vadd.f32 %v2674, %v2680
  %v2692 = vadd.f32 %v2675, %v2680
  %v2693 = vadd.f32 %v2676, %v2680
  %v2694 = vadd.f32 %v2677, %v2680
  %v2695 = vadd.f32 %v2678, %v2680
  %v2696 = vadd.f32 %v2679, %v2680
  %v2697 = vpack.c.bf16 %v2682, %v2681
  %v2698 = vpack.c.bf16 %v2684, %v2683
  %v2699 = vpack.c.bf16 %v2686, %v2685
  %v2700 = vpack.c.bf16 %v2688, %v2687
  %v2701 = vpack.c.bf16 %v2690, %v2689
  %v2702 = vpack.c.bf16 %v2692, %v2691
  %v2703 = vpack.c.bf16 %v2694, %v2693
  %v2704 = vpack.c.bf16 %v2696, %v2695
  %v2705 = vld [vmem:[%s2 + $0x90] sm:$0xf]
  %v2706 = vld [vmem:[%s2 + $0x94] sm:$0xf]
  %v2707 = vld [vmem:[%s2 + $0x98] sm:$0xf]
  %v2708 = vld [vmem:[%s2 + $0x9c] sm:$0xf]
  %v2709 = vld [vmem:[%s2 + $0xa0] sm:$0xf]
  %v2710 = vld [vmem:[%s2 + $0xa4] sm:$0xf]
  %v2711 = vld [vmem:[%s2 + $0xa8] sm:$0xf]
  %v2712 = vld [vmem:[%s2 + $0xac] sm:$0xf]
  %v2721 = vunpack.c.l.b16 %v2705
  %v2722 = vunpack.c.l.b16 %v2706
  %v2723 = vunpack.c.l.b16 %v2707
  %v2724 = vunpack.c.l.b16 %v2708
  %v2725 = vunpack.c.l.b16 %v2709
  %v2726 = vunpack.c.l.b16 %v2710
  %v2727 = vunpack.c.l.b16 %v2711
  %v2728 = vunpack.c.l.b16 %v2712
  %v2729 = vpack.c.b16 %v2722, %v2721
  %v2730 = vpack.c.b16 %v2724, %v2723
  %v2731 = vpack.c.b16 %v2726, %v2725
  %v2732 = vpack.c.b16 %v2728, %v2727
  %v2738 = vsel %vm1131, %v2697, 0
  %v2741 = vsel %vm1131, %v2698, 0
  %v2744 = vsel %vm1131, %v2699, 0
  %v2747 = vsel %vm1131, %v2700, 0
  %v2750 = vsel %vm1131, %v2701, 0
  %v2753 = vsel %vm1131, %v2702, 0
  %v2756 = vsel %vm1131, %v2703, 0
  %v2759 = vsel %vm1131, %v2704, 0
  %2761 = vmatpush.bf16.msra.mxu0 0
  %2762 = vmatpush.bf16.msra.mxu0 0
  %2763 = vmatpush.bf16.msra.mxu0 0
  %2764 = vmatpush.bf16.msra.mxu0 0
  %2765 = vmatpush.bf16.msra.mxu0 %v2732
  %2766 = vmatpush.bf16.msra.mxu0 %v2731
  %2767 = vmatpush.bf16.msra.mxu0 %v2730
  %2768 = vmatpush.bf16.msra.mxu0 %v2729
  %2769 = vmatmul.bf16.gmra.mxu0 %v2738
  %v2770 = vpop.f32.mrf.mxu0
  %v2771 = vadd.f32 0.0, %v2770
  %v2772 = vpop.f32.mrf.mxu0
  %v2773 = vadd.f32 0.0, %v2772
  %2774 = vmatmul.bf16.gmra.mxu0 %v2741
  %v2775 = vpop.f32.mrf.mxu0
  %v2776 = vadd.f32 0.0, %v2775
  %v2777 = vpop.f32.mrf.mxu0
  %v2778 = vadd.f32 0.0, %v2777
  %2779 = vmatmul.bf16.gmra.mxu0 %v2744
  %v2780 = vpop.f32.mrf.mxu0
  %v2781 = vadd.f32 0.0, %v2780
  %v2782 = vpop.f32.mrf.mxu0
  %v2783 = vadd.f32 0.0, %v2782
  %2784 = vmatmul.bf16.gmra.mxu0 %v2747
  %v2785 = vpop.f32.mrf.mxu0
  %v2786 = vadd.f32 0.0, %v2785
  %v2787 = vpop.f32.mrf.mxu0
  %v2788 = vadd.f32 0.0, %v2787
  %2789 = vmatmul.bf16.gmra.mxu0 %v2750
  %v2790 = vpop.f32.mrf.mxu0
  %v2791 = vadd.f32 0.0, %v2790
  %v2792 = vpop.f32.mrf.mxu0
  %v2793 = vadd.f32 0.0, %v2792
  %2794 = vmatmul.bf16.gmra.mxu0 %v2753
  %v2795 = vpop.f32.mrf.mxu0
  %v2796 = vadd.f32 0.0, %v2795
  %v2797 = vpop.f32.mrf.mxu0
  %v2798 = vadd.f32 0.0, %v2797
  %2799 = vmatmul.bf16.gmra.mxu0 %v2756
  %v2800 = vpop.f32.mrf.mxu0
  %v2801 = vadd.f32 0.0, %v2800
  %v2802 = vpop.f32.mrf.mxu0
  %v2803 = vadd.f32 0.0, %v2802
  %2804 = vmatmul.bf16.gmra.mxu0 %v2759
  %v2805 = vpop.f32.mrf.mxu0
  %v2806 = vadd.f32 0.0, %v2805
  %v2807 = vpop.f32.mrf.mxu0
  %v2808 = vadd.f32 0.0, %v2807
  %2809 = vdwg.mxu0
  %v2810 = vmul.f32 %v300, %v2771
  %v2811 = vmul.f32 %v301, %v2773
  %v2812 = vmul.f32 %v302, %v2776
  %v2813 = vmul.f32 %v303, %v2778
  %v2814 = vmul.f32 %v304, %v2781
  %v2815 = vmul.f32 %v305, %v2783
  %v2816 = vmul.f32 %v306, %v2786
  %v2817 = vmul.f32 %v307, %v2788
  %v2818 = vmul.f32 %v308, %v2791
  %v2819 = vmul.f32 %v309, %v2793
  %v2820 = vmul.f32 %v310, %v2796
  %v2821 = vmul.f32 %v311, %v2798
  %v2822 = vmul.f32 %v312, %v2801
  %v2823 = vmul.f32 %v313, %v2803
  %v2824 = vmul.f32 %v314, %v2806
  %v2825 = vmul.f32 %v315, %v2808
  %v2826 = vsub.f32 1.0, %v300
  %v2827 = vsub.f32 1.0, %v301
  %v2828 = vsub.f32 1.0, %v302
  %v2829 = vsub.f32 1.0, %v303
  %v2830 = vsub.f32 1.0, %v304
  %v2831 = vsub.f32 1.0, %v305
  %v2832 = vsub.f32 1.0, %v306
  %v2833 = vsub.f32 1.0, %v307
  %v2834 = vsub.f32 1.0, %v308
  %v2835 = vsub.f32 1.0, %v309
  %v2836 = vsub.f32 1.0, %v310
  %v2837 = vsub.f32 1.0, %v311
  %v2838 = vsub.f32 1.0, %v312
  %v2839 = vsub.f32 1.0, %v313
  %v2840 = vsub.f32 1.0, %v314
  %v2841 = vsub.f32 1.0, %v315
  %2858 = vrot.lane.b32.xlu0 %v2771, 96
  %v2859 = vpop.permute.xlu0 %2858
  %2860 = vrot.lane.b32.xlu0 %v2773, 96
  %v2861 = vpop.permute.xlu0 %2860
  %2862 = vrot.lane.b32.xlu0 %v2776, 96
  %v2863 = vpop.permute.xlu0 %2862
  %2864 = vrot.lane.b32.xlu0 %v2778, 96
  %v2865 = vpop.permute.xlu0 %2864
  %2866 = vrot.lane.b32.xlu0 %v2781, 96
  %v2867 = vpop.permute.xlu0 %2866
  %2868 = vrot.lane.b32.xlu0 %v2783, 96
  %v2869 = vpop.permute.xlu0 %2868
  %2870 = vrot.lane.b32.xlu0 %v2786, 96
  %v2871 = vpop.permute.xlu0 %2870
  %2872 = vrot.lane.b32.xlu0 %v2788, 96
  %v2873 = vpop.permute.xlu0 %2872
  %2874 = vrot.lane.b32.xlu0 %v2791, 96
  %v2875 = vpop.permute.xlu0 %2874
  %2876 = vrot.lane.b32.xlu0 %v2793, 96
  %v2877 = vpop.permute.xlu0 %2876
  %2878 = vrot.lane.b32.xlu0 %v2796, 96
  %v2879 = vpop.permute.xlu0 %2878
  %2880 = vrot.lane.b32.xlu0 %v2798, 96
  %v2881 = vpop.permute.xlu0 %2880
  %2882 = vrot.lane.b32.xlu0 %v2801, 96
  %v2883 = vpop.permute.xlu0 %2882
  %2884 = vrot.lane.b32.xlu0 %v2803, 96
  %v2885 = vpop.permute.xlu0 %2884
  %2886 = vrot.lane.b32.xlu0 %v2806, 96
  %v2887 = vpop.permute.xlu0 %2886
  %2888 = vrot.lane.b32.xlu0 %v2808, 96
  %v2889 = vpop.permute.xlu0 %2888
  %v2906 = vrot.slane %v2859, 7
  %v2907 = vrot.slane %v2861, 7
  %v2908 = vrot.slane %v2863, 7
  %v2909 = vrot.slane %v2865, 7
  %v2910 = vrot.slane %v2867, 7
  %v2911 = vrot.slane %v2869, 7
  %v2912 = vrot.slane %v2871, 7
  %v2913 = vrot.slane %v2873, 7
  %v2914 = vrot.slane %v2875, 7
  %v2915 = vrot.slane %v2877, 7
  %v2916 = vrot.slane %v2879, 7
  %v2917 = vrot.slane %v2881, 7
  %v2918 = vrot.slane %v2883, 7
  %v2919 = vrot.slane %v2885, 7
  %v2920 = vrot.slane %v2887, 7
  %v2921 = vrot.slane %v2889, 7
  %v2922 = vsel %vm354, %v2920, %v2921
  %v2923 = vsel %vm354, %v2919, %v2920
  %v2924 = vsel %vm354, %v2918, %v2919
  %v2925 = vsel %vm354, %v2917, %v2918
  %v2926 = vsel %vm354, %v2916, %v2917
  %v2927 = vsel %vm354, %v2915, %v2916
  %v2928 = vsel %vm354, %v2914, %v2915
  %v2929 = vsel %vm354, %v2913, %v2914
  %v2930 = vsel %vm354, %v2912, %v2913
  %v2931 = vsel %vm354, %v2911, %v2912
  %v2932 = vsel %vm354, %v2910, %v2911
  %v2933 = vsel %vm354, %v2909, %v2910
  %v2934 = vsel %vm354, %v2908, %v2909
  %v2935 = vsel %vm354, %v2907, %v2908
  %v2936 = vsel %vm354, %v2906, %v2907
  %v2937 = vsel %vm354, %v2921, %v2906
  %v2938 = vmul.f32 %v2826, %v2937
  %v2939 = vmul.f32 %v2827, %v2936
  %v2940 = vmul.f32 %v2828, %v2935
  %v2941 = vmul.f32 %v2829, %v2934
  %v2942 = vmul.f32 %v2830, %v2933
  %v2943 = vmul.f32 %v2831, %v2932
  %v2944 = vmul.f32 %v2832, %v2931
  %v2945 = vmul.f32 %v2833, %v2930
  %v2946 = vmul.f32 %v2834, %v2929
  %v2947 = vmul.f32 %v2835, %v2928
  %v2948 = vmul.f32 %v2836, %v2927
  %v2949 = vmul.f32 %v2837, %v2926
  %v2950 = vmul.f32 %v2838, %v2925
  %v2951 = vmul.f32 %v2839, %v2924
  %v2952 = vmul.f32 %v2840, %v2923
  %v2953 = vmul.f32 %v2841, %v2922
  %v2954 = vadd.f32 %v2810, %v2938
  %v2955 = vadd.f32 %v2811, %v2939
  %v2956 = vadd.f32 %v2812, %v2940
  %v2957 = vadd.f32 %v2813, %v2941
  %v2958 = vadd.f32 %v2814, %v2942
  %v2959 = vadd.f32 %v2815, %v2943
  %v2960 = vadd.f32 %v2816, %v2944
  %v2961 = vadd.f32 %v2817, %v2945
  %v2962 = vadd.f32 %v2818, %v2946
  %v2963 = vadd.f32 %v2819, %v2947
  %v2964 = vadd.f32 %v2820, %v2948
  %v2965 = vadd.f32 %v2821, %v2949
  %v2966 = vadd.f32 %v2822, %v2950
  %v2967 = vadd.f32 %v2823, %v2951
  %v2968 = vadd.f32 %v2824, %v2952
  %v2969 = vadd.f32 %v2825, %v2953
  %v2970 = vld [vmem:[%s3 + $0x4] sm:$0x1]
  %v2971 = vld [vmem:[%s3 + $0x5] sm:$0x1]
  %v2972 = vsel %vm581, %v2954, 0.0
  %v2973 = vsel %vm581, %v2955, 0.0
  %v2974 = vadd.f32 %v2972, %v2973
  %v2975 = vsel %vm581, %v2956, 0.0
  %v2976 = vadd.f32 %v2974, %v2975
  %v2977 = vsel %vm581, %v2957, 0.0
  %v2978 = vadd.f32 %v2976, %v2977
  %v2979 = vsel %vm581, %v2958, 0.0
  %v2980 = vadd.f32 %v2978, %v2979
  %v2981 = vsel %vm581, %v2959, 0.0
  %v2982 = vadd.f32 %v2980, %v2981
  %v2983 = vsel %vm581, %v2960, 0.0
  %v2984 = vadd.f32 %v2982, %v2983
  %v2985 = vsel %vm581, %v2961, 0.0
  %v2986 = vadd.f32 %v2984, %v2985
  %v2987 = vsel %vm581, %v2962, 0.0
  %v2988 = vadd.f32 %v2986, %v2987
  %v2989 = vsel %vm581, %v2963, 0.0
  %v2990 = vadd.f32 %v2988, %v2989
  %v2991 = vsel %vm581, %v2964, 0.0
  %v2992 = vadd.f32 %v2990, %v2991
  %v2993 = vsel %vm581, %v2965, 0.0
  %v2994 = vadd.f32 %v2992, %v2993
  %v2995 = vsel %vm581, %v2966, 0.0
  %v2996 = vadd.f32 %v2994, %v2995
  %v2997 = vsel %vm581, %v2967, 0.0
  %v2998 = vadd.f32 %v2996, %v2997
  %v2999 = vsel %vm581, %v2968, 0.0
  %v3000 = vadd.f32 %v2998, %v2999
  %v3001 = vsel %vm581, %v2969, 0.0
  %v3002 = vadd.f32 %v3000, %v3001
  %v3003 = vrot.slane %v3002, 4
  %v3004 = vadd.f32 %v3002, %v3003
  %v3005 = vrot.slane %v3004, 2
  %v3006 = vadd.f32 %v3004, %v3005
  %v3007 = vrot.slane %v3006, 1
  %v3008 = vadd.f32 %v3006, %v3007
  %v3009 = vmul.f32 %v3008, %v743
  %v3010 = vmul.f32 %v2954, %v2954
  %v3011 = vmul.f32 %v2955, %v2955
  %v3012 = vmul.f32 %v2956, %v2956
  %v3013 = vmul.f32 %v2957, %v2957
  %v3014 = vmul.f32 %v2958, %v2958
  %v3015 = vmul.f32 %v2959, %v2959
  %v3016 = vmul.f32 %v2960, %v2960
  %v3017 = vmul.f32 %v2961, %v2961
  %v3018 = vmul.f32 %v2962, %v2962
  %v3019 = vmul.f32 %v2963, %v2963
  %v3020 = vmul.f32 %v2964, %v2964
  %v3021 = vmul.f32 %v2965, %v2965
  %v3022 = vmul.f32 %v2966, %v2966
  %v3023 = vmul.f32 %v2967, %v2967
  %v3024 = vmul.f32 %v2968, %v2968
  %v3025 = vmul.f32 %v2969, %v2969
  %v3026 = vsel %vm581, %v3010, 0.0
  %v3027 = vsel %vm581, %v3011, 0.0
  %v3028 = vadd.f32 %v3026, %v3027
  %v3029 = vsel %vm581, %v3012, 0.0
  %v3030 = vadd.f32 %v3028, %v3029
  %v3031 = vsel %vm581, %v3013, 0.0
  %v3032 = vadd.f32 %v3030, %v3031
  %v3033 = vsel %vm581, %v3014, 0.0
  %v3034 = vadd.f32 %v3032, %v3033
  %v3035 = vsel %vm581, %v3015, 0.0
  %v3036 = vadd.f32 %v3034, %v3035
  %v3037 = vsel %vm581, %v3016, 0.0
  %v3038 = vadd.f32 %v3036, %v3037
  %v3039 = vsel %vm581, %v3017, 0.0
  %v3040 = vadd.f32 %v3038, %v3039
  %v3041 = vsel %vm581, %v3018, 0.0
  %v3042 = vadd.f32 %v3040, %v3041
  %v3043 = vsel %vm581, %v3019, 0.0
  %v3044 = vadd.f32 %v3042, %v3043
  %v3045 = vsel %vm581, %v3020, 0.0
  %v3046 = vadd.f32 %v3044, %v3045
  %v3047 = vsel %vm581, %v3021, 0.0
  %v3048 = vadd.f32 %v3046, %v3047
  %v3049 = vsel %vm581, %v3022, 0.0
  %v3050 = vadd.f32 %v3048, %v3049
  %v3051 = vsel %vm581, %v3023, 0.0
  %v3052 = vadd.f32 %v3050, %v3051
  %v3053 = vsel %vm581, %v3024, 0.0
  %v3054 = vadd.f32 %v3052, %v3053
  %v3055 = vsel %vm581, %v3025, 0.0
  %v3056 = vadd.f32 %v3054, %v3055
  %v3057 = vrot.slane %v3056, 4
  %v3058 = vadd.f32 %v3056, %v3057
  %v3059 = vrot.slane %v3058, 2
  %v3060 = vadd.f32 %v3058, %v3059
  %v3061 = vrot.slane %v3060, 1
  %v3062 = vadd.f32 %v3060, %v3061
  %v3063 = vmul.f32 %v3062, %v743
  %v3064 = vmul.f32 %v3009, %v3009
  %v3065 = vsub.f32 %v3063, %v3064
  %v3066 = vmax.f32 %v3065, 0.0
  %v3067 = vsub.f32 %v2954, %v3009
  %v3068 = vsub.f32 %v2955, %v3009
  %v3069 = vsub.f32 %v2956, %v3009
  %v3070 = vsub.f32 %v2957, %v3009
  %v3071 = vsub.f32 %v2958, %v3009
  %v3072 = vsub.f32 %v2959, %v3009
  %v3073 = vsub.f32 %v2960, %v3009
  %v3074 = vsub.f32 %v2961, %v3009
  %v3075 = vsub.f32 %v2962, %v3009
  %v3076 = vsub.f32 %v2963, %v3009
  %v3077 = vsub.f32 %v2964, %v3009
  %v3078 = vsub.f32 %v2965, %v3009
  %v3079 = vsub.f32 %v2966, %v3009
  %v3080 = vsub.f32 %v2967, %v3009
  %v3081 = vsub.f32 %v2968, %v3009
  %v3082 = vsub.f32 %v2969, %v3009
  %v3083 = vperm.slane %v2970, 0
  %v3084 = vmul.f32 %v3083, %v3067
  %v3085 = vmul.f32 %v3083, %v3068
  %v3086 = vmul.f32 %v3083, %v3069
  %v3087 = vmul.f32 %v3083, %v3070
  %v3088 = vmul.f32 %v3083, %v3071
  %v3089 = vmul.f32 %v3083, %v3072
  %v3090 = vmul.f32 %v3083, %v3073
  %v3091 = vmul.f32 %v3083, %v3074
  %v3092 = vmul.f32 %v3083, %v3075
  %v3093 = vmul.f32 %v3083, %v3076
  %v3094 = vmul.f32 %v3083, %v3077
  %v3095 = vmul.f32 %v3083, %v3078
  %v3096 = vmul.f32 %v3083, %v3079
  %v3097 = vmul.f32 %v3083, %v3080
  %v3098 = vmul.f32 %v3083, %v3081
  %v3099 = vmul.f32 %v3083, %v3082
  %v3100 = vadd.f32 %v3066, 1e-05
  %v3101 = vrsqrt.pop %v3100
  %v3102 = vmul.f32 %v3101, %v3100
  %v3103 = vmul.f32 %v3102, %v3101
  %v3104 = vmul.f32 0.5, %v3103
  %v3105 = vsub.f32 1.5, %v3104
  %v3106 = vmul.f32 %v3101, %v3105
  %vm3107 = vweird.f32 %v3100
  %vm3108 = vweird.f32 %v3101
  %vm3109 = vmor %vm3107, %vm3108
  %v3110 = vsel %vm3109, %v3101, %v3106
  %v3111 = vmul.f32 %v3084, %v3110
  %v3112 = vmul.f32 %v3085, %v3110
  %v3113 = vmul.f32 %v3086, %v3110
  %v3114 = vmul.f32 %v3087, %v3110
  %v3115 = vmul.f32 %v3088, %v3110
  %v3116 = vmul.f32 %v3089, %v3110
  %v3117 = vmul.f32 %v3090, %v3110
  %v3118 = vmul.f32 %v3091, %v3110
  %v3119 = vmul.f32 %v3092, %v3110
  %v3120 = vmul.f32 %v3093, %v3110
  %v3121 = vmul.f32 %v3094, %v3110
  %v3122 = vmul.f32 %v3095, %v3110
  %v3123 = vmul.f32 %v3096, %v3110
  %v3124 = vmul.f32 %v3097, %v3110
  %v3125 = vmul.f32 %v3098, %v3110
  %v3126 = vmul.f32 %v3099, %v3110
  %v3127 = vperm.slane %v2971, 0
  %v3128 = vadd.f32 %v3111, %v3127
  %v3129 = vadd.f32 %v3112, %v3127
  %v3130 = vadd.f32 %v3113, %v3127
  %v3131 = vadd.f32 %v3114, %v3127
  %v3132 = vadd.f32 %v3115, %v3127
  %v3133 = vadd.f32 %v3116, %v3127
  %v3134 = vadd.f32 %v3117, %v3127
  %v3135 = vadd.f32 %v3118, %v3127
  %v3136 = vadd.f32 %v3119, %v3127
  %v3137 = vadd.f32 %v3120, %v3127
  %v3138 = vadd.f32 %v3121, %v3127
  %v3139 = vadd.f32 %v3122, %v3127
  %v3140 = vadd.f32 %v3123, %v3127
  %v3141 = vadd.f32 %v3124, %v3127
  %v3142 = vadd.f32 %v3125, %v3127
  %v3143 = vadd.f32 %v3126, %v3127
  %3160 = vrot.lane.b32.xlu0 %v1424, 32
  %v3161 = vpop.permute.xlu0 %3160
  %3162 = vrot.lane.b32.xlu0 %v1425, 32
  %v3163 = vpop.permute.xlu0 %3162
  %3164 = vrot.lane.b32.xlu0 %v1426, 32
  %v3165 = vpop.permute.xlu0 %3164
  %3166 = vrot.lane.b32.xlu0 %v1427, 32
  %v3167 = vpop.permute.xlu0 %3166
  %3168 = vrot.lane.b32.xlu0 %v1428, 32
  %v3169 = vpop.permute.xlu0 %3168
  %3170 = vrot.lane.b32.xlu0 %v1429, 32
  %v3171 = vpop.permute.xlu0 %3170
  %3172 = vrot.lane.b32.xlu0 %v1430, 32
  %v3173 = vpop.permute.xlu0 %3172
  %3174 = vrot.lane.b32.xlu0 %v1431, 32
  %v3175 = vpop.permute.xlu0 %3174
  %3176 = vrot.lane.b32.xlu0 %v1432, 32
  %v3177 = vpop.permute.xlu0 %3176
  %3178 = vrot.lane.b32.xlu0 %v1433, 32
  %v3179 = vpop.permute.xlu0 %3178
  %3180 = vrot.lane.b32.xlu0 %v1434, 32
  %v3181 = vpop.permute.xlu0 %3180
  %3182 = vrot.lane.b32.xlu0 %v1435, 32
  %v3183 = vpop.permute.xlu0 %3182
  %3184 = vrot.lane.b32.xlu0 %v1436, 32
  %v3185 = vpop.permute.xlu0 %3184
  %3186 = vrot.lane.b32.xlu0 %v1437, 32
  %v3187 = vpop.permute.xlu0 %3186
  %3188 = vrot.lane.b32.xlu0 %v1438, 32
  %v3189 = vpop.permute.xlu0 %3188
  %3190 = vrot.lane.b32.xlu0 %v1439, 32
  %v3191 = vpop.permute.xlu0 %3190
  %v3208 = vsel %vm581, %v3128, %v3161
  %v3209 = vsel %vm581, %v3129, %v3163
  %v3210 = vsel %vm581, %v3130, %v3165
  %v3211 = vsel %vm581, %v3131, %v3167
  %v3212 = vsel %vm581, %v3132, %v3169
  %v3213 = vsel %vm581, %v3133, %v3171
  %v3214 = vsel %vm581, %v3134, %v3173
  %v3215 = vsel %vm581, %v3135, %v3175
  %v3216 = vsel %vm581, %v3136, %v3177
  %v3217 = vsel %vm581, %v3137, %v3179
  %v3218 = vsel %vm581, %v3138, %v3181
  %v3219 = vsel %vm581, %v3139, %v3183
  %v3220 = vsel %vm581, %v3140, %v3185
  %v3221 = vsel %vm581, %v3141, %v3187
  %v3222 = vsel %vm581, %v3142, %v3189
  %v3223 = vsel %vm581, %v3143, %v3191
  %v3224 = vld [vmem:[%s1 + $0x48] sm:$0xf]
  %v3225 = vld [vmem:[%s1 + $0x4c] sm:$0xf]
  %v3226 = vld [vmem:[%s1 + $0x50] sm:$0xf]
  %v3227 = vld [vmem:[%s1 + $0x54] sm:$0xf]
  %v3228 = vld [vmem:[%s1 + $0x58] sm:$0xf]
  %v3229 = vld [vmem:[%s1 + $0x5c] sm:$0xf]
  %v3230 = vld [vmem:[%s1 + $0x60] sm:$0xf]
  %v3231 = vld [vmem:[%s1 + $0x64] sm:$0xf]
  %v3232 = vld [vmem:[%s1 + $0x68] sm:$0xf]
  %v3233 = vld [vmem:[%s1 + $0x6c] sm:$0xf]
  %v3234 = vld [vmem:[%s1 + $0x70] sm:$0xf]
  %v3235 = vld [vmem:[%s1 + $0x74] sm:$0xf]
  %v3236 = vld [vmem:[%s1 + $0x78] sm:$0xf]
  %v3237 = vld [vmem:[%s1 + $0x7c] sm:$0xf]
  %v3238 = vld [vmem:[%s1 + $0x80] sm:$0xf]
  %v3239 = vld [vmem:[%s1 + $0x84] sm:$0xf]
  %v3240 = vld [vmem:[%s1 + $0x88] sm:$0xf]
  %v3241 = vld [vmem:[%s1 + $0x8c] sm:$0xf]
  %v3242 = vld [vmem:[%s1 + $0x90] sm:$0xf]
  %v3243 = vld [vmem:[%s1 + $0x94] sm:$0xf]
  %v3244 = vld [vmem:[%s1 + $0x98] sm:$0xf]
  %v3245 = vld [vmem:[%s1 + $0x9c] sm:$0xf]
  %v3246 = vld [vmem:[%s1 + $0xa0] sm:$0xf]
  %v3247 = vld [vmem:[%s1 + $0xa4] sm:$0xf]
  %v3248 = vrot.slane %v3208, 7
  %v3249 = vrot.slane %v3209, 7
  %v3250 = vrot.slane %v3210, 7
  %v3251 = vrot.slane %v3211, 7
  %v3252 = vrot.slane %v3212, 7
  %v3253 = vrot.slane %v3213, 7
  %v3254 = vrot.slane %v3214, 7
  %v3255 = vrot.slane %v3215, 7
  %v3256 = vrot.slane %v3216, 7
  %v3257 = vrot.slane %v3217, 7
  %v3258 = vrot.slane %v3218, 7
  %v3259 = vrot.slane %v3219, 7
  %v3260 = vrot.slane %v3220, 7
  %v3261 = vrot.slane %v3221, 7
  %v3262 = vrot.slane %v3222, 7
  %v3263 = vrot.slane %v3223, 7
  %v3264 = vsel %vm354, %v3262, %v3263
  %v3265 = vsel %vm354, %v3261, %v3262
  %v3266 = vsel %vm354, %v3260, %v3261
  %v3267 = vsel %vm354, %v3259, %v3260
  %v3268 = vsel %vm354, %v3258, %v3259
  %v3269 = vsel %vm354, %v3257, %v3258
  %v3270 = vsel %vm354, %v3256, %v3257
  %v3271 = vsel %vm354, %v3255, %v3256
  %v3272 = vsel %vm354, %v3254, %v3255
  %v3273 = vsel %vm354, %v3253, %v3254
  %v3274 = vsel %vm354, %v3252, %v3253
  %v3275 = vsel %vm354, %v3251, %v3252
  %v3276 = vsel %vm354, %v3250, %v3251
  %v3277 = vsel %vm354, %v3249, %v3250
  %v3278 = vsel %vm354, %v3248, %v3249
  %v3279 = vsel %vm354, %v3263, %v3248
  %v3280 = vmul.f32 %v3279, %v92
  %v3281 = vmul.f32 %v3278, %v93
  %v3282 = vmul.f32 %v3277, %v94
  %v3283 = vmul.f32 %v3276, %v95
  %v3284 = vmul.f32 %v3275, %v96
  %v3285 = vmul.f32 %v3274, %v97
  %v3286 = vmul.f32 %v3273, %v98
  %v3287 = vmul.f32 %v3272, %v99
  %v3288 = vmul.f32 %v3271, %v100
  %v3289 = vmul.f32 %v3270, %v101
  %v3290 = vmul.f32 %v3269, %v102
  %v3291 = vmul.f32 %v3268, %v103
  %v3292 = vmul.f32 %v3267, %v104
  %v3293 = vmul.f32 %v3266, %v105
  %v3294 = vmul.f32 %v3265, %v106
  %v3295 = vmul.f32 %v3264, %v107
  %v3296 = vrot.slane %v3208, 1
  %v3297 = vrot.slane %v3209, 1
  %v3298 = vrot.slane %v3210, 1
  %v3299 = vrot.slane %v3211, 1
  %v3300 = vrot.slane %v3212, 1
  %v3301 = vrot.slane %v3213, 1
  %v3302 = vrot.slane %v3214, 1
  %v3303 = vrot.slane %v3215, 1
  %v3304 = vrot.slane %v3216, 1
  %v3305 = vrot.slane %v3217, 1
  %v3306 = vrot.slane %v3218, 1
  %v3307 = vrot.slane %v3219, 1
  %v3308 = vrot.slane %v3220, 1
  %v3309 = vrot.slane %v3221, 1
  %v3310 = vrot.slane %v3222, 1
  %v3311 = vrot.slane %v3223, 1
  %v3312 = vsel %vm403, %v3310, %v3311
  %v3313 = vsel %vm403, %v3309, %v3310
  %v3314 = vsel %vm403, %v3308, %v3309
  %v3315 = vsel %vm403, %v3307, %v3308
  %v3316 = vsel %vm403, %v3306, %v3307
  %v3317 = vsel %vm403, %v3305, %v3306
  %v3318 = vsel %vm403, %v3304, %v3305
  %v3319 = vsel %vm403, %v3303, %v3304
  %v3320 = vsel %vm403, %v3302, %v3303
  %v3321 = vsel %vm403, %v3301, %v3302
  %v3322 = vsel %vm403, %v3300, %v3301
  %v3323 = vsel %vm403, %v3299, %v3300
  %v3324 = vsel %vm403, %v3298, %v3299
  %v3325 = vsel %vm403, %v3297, %v3298
  %v3326 = vsel %vm403, %v3296, %v3297
  %v3327 = vsel %vm403, %v3311, %v3296
  %v3328 = vmul.f32 %v3326, %v140
  %v3329 = vmul.f32 %v3325, %v141
  %v3330 = vmul.f32 %v3324, %v142
  %v3331 = vmul.f32 %v3323, %v143
  %v3332 = vmul.f32 %v3322, %v144
  %v3333 = vmul.f32 %v3321, %v145
  %v3334 = vmul.f32 %v3320, %v146
  %v3335 = vmul.f32 %v3319, %v147
  %v3336 = vmul.f32 %v3318, %v148
  %v3337 = vmul.f32 %v3317, %v149
  %v3338 = vmul.f32 %v3316, %v150
  %v3339 = vmul.f32 %v3315, %v151
  %v3340 = vmul.f32 %v3314, %v152
  %v3341 = vmul.f32 %v3313, %v153
  %v3342 = vmul.f32 %v3312, %v154
  %v3343 = vmul.f32 %v3327, %v155
  %3360 = vrot.lane.b32.xlu0 %v3208, 64
  %v3361 = vpop.permute.xlu0 %3360
  %3362 = vrot.lane.b32.xlu0 %v3209, 64
  %v3363 = vpop.permute.xlu0 %3362
  %3364 = vrot.lane.b32.xlu0 %v3210, 64
  %v3365 = vpop.permute.xlu0 %3364
  %3366 = vrot.lane.b32.xlu0 %v3211, 64
  %v3367 = vpop.permute.xlu0 %3366
  %3368 = vrot.lane.b32.xlu0 %v3212, 64
  %v3369 = vpop.permute.xlu0 %3368
  %3370 = vrot.lane.b32.xlu0 %v3213, 64
  %v3371 = vpop.permute.xlu0 %3370
  %3372 = vrot.lane.b32.xlu0 %v3214, 64
  %v3373 = vpop.permute.xlu0 %3372
  %3374 = vrot.lane.b32.xlu0 %v3215, 64
  %v3375 = vpop.permute.xlu0 %3374
  %3376 = vrot.lane.b32.xlu0 %v3216, 64
  %v3377 = vpop.permute.xlu0 %3376
  %3378 = vrot.lane.b32.xlu0 %v3217, 64
  %v3379 = vpop.permute.xlu0 %3378
  %3380 = vrot.lane.b32.xlu0 %v3218, 64
  %v3381 = vpop.permute.xlu0 %3380
  %3382 = vrot.lane.b32.xlu0 %v3219, 64
  %v3383 = vpop.permute.xlu0 %3382
  %3384 = vrot.lane.b32.xlu0 %v3220, 64
  %v3385 = vpop.permute.xlu0 %3384
  %3386 = vrot.lane.b32.xlu0 %v3221, 64
  %v3387 = vpop.permute.xlu0 %3386
  %3388 = vrot.lane.b32.xlu0 %v3222, 64
  %v3389 = vpop.permute.xlu0 %3388
  %3390 = vrot.lane.b32.xlu0 %v3223, 64
  %v3391 = vpop.permute.xlu0 %3390
  %v3408 = vsel %vm1131, %v3280, %v3361
  %v3409 = vsel %vm1131, %v3281, %v3363
  %v3410 = vsel %vm1131, %v3282, %v3365
  %v3411 = vsel %vm1131, %v3283, %v3367
  %v3412 = vsel %vm1131, %v3284, %v3369
  %v3413 = vsel %vm1131, %v3285, %v3371
  %v3414 = vsel %vm1131, %v3286, %v3373
  %v3415 = vsel %vm1131, %v3287, %v3375
  %v3416 = vsel %vm1131, %v3288, %v3377
  %v3417 = vsel %vm1131, %v3289, %v3379
  %v3418 = vsel %vm1131, %v3290, %v3381
  %v3419 = vsel %vm1131, %v3291, %v3383
  %v3420 = vsel %vm1131, %v3292, %v3385
  %v3421 = vsel %vm1131, %v3293, %v3387
  %v3422 = vsel %vm1131, %v3294, %v3389
  %v3423 = vsel %vm1131, %v3295, %v3391
  %v3424 = vpack.c.bf16 %v3409, %v3408
  %v3425 = vpack.c.bf16 %v3329, %v3328
  %v3426 = vpack.c.bf16 %v3411, %v3410
  %v3427 = vpack.c.bf16 %v3331, %v3330
  %v3428 = vpack.c.bf16 %v3413, %v3412
  %v3429 = vpack.c.bf16 %v3333, %v3332
  %v3430 = vpack.c.bf16 %v3415, %v3414
  %v3431 = vpack.c.bf16 %v3335, %v3334
  %v3432 = vpack.c.bf16 %v3417, %v3416
  %v3433 = vpack.c.bf16 %v3337, %v3336
  %v3434 = vpack.c.bf16 %v3419, %v3418
  %v3435 = vpack.c.bf16 %v3339, %v3338
  %v3436 = vpack.c.bf16 %v3421, %v3420
  %v3437 = vpack.c.bf16 %v3341, %v3340
  %v3438 = vpack.c.bf16 %v3423, %v3422
  %v3439 = vpack.c.bf16 %v3343, %v3342
  %v3464 = vunpack.c.l.b16 %v3224
  %v3465 = vunpack.c.l.b16 %v3225
  %v3466 = vunpack.c.l.b16 %v3226
  %v3467 = vunpack.c.l.b16 %v3227
  %v3468 = vunpack.c.l.b16 %v3228
  %v3469 = vunpack.c.l.b16 %v3229
  %v3470 = vunpack.c.l.b16 %v3230
  %v3471 = vunpack.c.l.b16 %v3231
  %v3472 = vunpack.c.l.b16 %v3232
  %v3473 = vunpack.c.l.b16 %v3233
  %v3474 = vunpack.c.l.b16 %v3234
  %v3475 = vunpack.c.l.b16 %v3235
  %v3476 = vunpack.c.l.b16 %v3236
  %v3477 = vunpack.c.l.b16 %v3237
  %v3478 = vunpack.c.l.b16 %v3238
  %v3479 = vunpack.c.l.b16 %v3239
  %v3480 = vunpack.c.l.b16 %v3240
  %v3481 = vunpack.c.l.b16 %v3241
  %v3482 = vunpack.c.l.b16 %v3242
  %v3483 = vunpack.c.l.b16 %v3243
  %v3484 = vunpack.c.l.b16 %v3244
  %v3485 = vunpack.c.l.b16 %v3245
  %v3486 = vunpack.c.l.b16 %v3246
  %v3487 = vunpack.c.l.b16 %v3247
  %v3488 = vpack.c.b16 %v3465, %v3464
  %v3489 = vpack.c.b16 %v3467, %v3466
  %v3490 = vpack.c.b16 %v3469, %v3468
  %v3491 = vpack.c.b16 %v3471, %v3470
  %v3492 = vpack.c.b16 %v3473, %v3472
  %v3493 = vpack.c.b16 %v3475, %v3474
  %v3494 = vpack.c.b16 %v3477, %v3476
  %v3495 = vpack.c.b16 %v3479, %v3478
  %v3496 = vpack.c.b16 %v3481, %v3480
  %v3497 = vpack.c.b16 %v3483, %v3482
  %v3498 = vpack.c.b16 %v3485, %v3484
  %v3499 = vpack.c.b16 %v3487, %v3486
  %v3513 = vsel %vm1131, %v3425, 0
  %v3516 = vsel %vm1131, %v3427, 0
  %v3519 = vsel %vm1131, %v3429, 0
  %v3522 = vsel %vm1131, %v3431, 0
  %v3525 = vsel %vm1131, %v3433, 0
  %v3528 = vsel %vm1131, %v3435, 0
  %v3531 = vsel %vm1131, %v3437, 0
  %v3534 = vsel %vm1131, %v3439, 0
  %3536 = vmatpush.bf16.msra.mxu0 %v3495
  %3537 = vmatpush.bf16.msra.mxu0 %v3494
  %3538 = vmatpush.bf16.msra.mxu0 %v3493
  %3539 = vmatpush.bf16.msra.mxu0 %v3492
  %3540 = vmatpush.bf16.msra.mxu0 %v3491
  %3541 = vmatpush.bf16.msra.mxu0 %v3490
  %3542 = vmatpush.bf16.msra.mxu0 %v3489
  %3543 = vmatpush.bf16.msra.mxu0 %v3488
  %3544 = vmatmul.bf16.gmra.mxu0 %v3424
  %v3545 = vpop.f32.mrf.mxu0
  %v3546 = vadd.f32 0.0, %v3545
  %v3547 = vpop.f32.mrf.mxu0
  %v3548 = vadd.f32 0.0, %v3547
  %3549 = vmatmul.bf16.gmra.mxu0 %v3426
  %v3550 = vpop.f32.mrf.mxu0
  %v3551 = vadd.f32 0.0, %v3550
  %v3552 = vpop.f32.mrf.mxu0
  %v3553 = vadd.f32 0.0, %v3552
  %3554 = vmatmul.bf16.gmra.mxu0 %v3428
  %v3555 = vpop.f32.mrf.mxu0
  %v3556 = vadd.f32 0.0, %v3555
  %v3557 = vpop.f32.mrf.mxu0
  %v3558 = vadd.f32 0.0, %v3557
  %3559 = vmatmul.bf16.gmra.mxu0 %v3430
  %v3560 = vpop.f32.mrf.mxu0
  %v3561 = vadd.f32 0.0, %v3560
  %v3562 = vpop.f32.mrf.mxu0
  %v3563 = vadd.f32 0.0, %v3562
  %3564 = vmatmul.bf16.gmra.mxu0 %v3432
  %v3565 = vpop.f32.mrf.mxu0
  %v3566 = vadd.f32 0.0, %v3565
  %v3567 = vpop.f32.mrf.mxu0
  %v3568 = vadd.f32 0.0, %v3567
  %3569 = vmatmul.bf16.gmra.mxu0 %v3434
  %v3570 = vpop.f32.mrf.mxu0
  %v3571 = vadd.f32 0.0, %v3570
  %v3572 = vpop.f32.mrf.mxu0
  %v3573 = vadd.f32 0.0, %v3572
  %3574 = vmatmul.bf16.gmra.mxu0 %v3436
  %v3575 = vpop.f32.mrf.mxu0
  %v3576 = vadd.f32 0.0, %v3575
  %v3577 = vpop.f32.mrf.mxu0
  %v3578 = vadd.f32 0.0, %v3577
  %3579 = vmatmul.bf16.gmra.mxu0 %v3438
  %v3580 = vpop.f32.mrf.mxu0
  %v3581 = vadd.f32 0.0, %v3580
  %v3582 = vpop.f32.mrf.mxu0
  %v3583 = vadd.f32 0.0, %v3582
  %3584 = vdwg.mxu0
  %3585 = vmatpush.bf16.msra.mxu0 0
  %3586 = vmatpush.bf16.msra.mxu0 0
  %3587 = vmatpush.bf16.msra.mxu0 0
  %3588 = vmatpush.bf16.msra.mxu0 0
  %3589 = vmatpush.bf16.msra.mxu0 %v3499
  %3590 = vmatpush.bf16.msra.mxu0 %v3498
  %3591 = vmatpush.bf16.msra.mxu0 %v3497
  %3592 = vmatpush.bf16.msra.mxu0 %v3496
  %3593 = vmatmul.bf16.gmra.mxu0 %v3513
  %v3594 = vpop.f32.mrf.mxu0
  %v3595 = vadd.f32 %v3546, %v3594
  %v3596 = vpop.f32.mrf.mxu0
  %v3597 = vadd.f32 %v3548, %v3596
  %3598 = vmatmul.bf16.gmra.mxu0 %v3516
  %v3599 = vpop.f32.mrf.mxu0
  %v3600 = vadd.f32 %v3551, %v3599
  %v3601 = vpop.f32.mrf.mxu0
  %v3602 = vadd.f32 %v3553, %v3601
  %3603 = vmatmul.bf16.gmra.mxu0 %v3519
  %v3604 = vpop.f32.mrf.mxu0
  %v3605 = vadd.f32 %v3556, %v3604
  %v3606 = vpop.f32.mrf.mxu0
  %v3607 = vadd.f32 %v3558, %v3606
  %3608 = vmatmul.bf16.gmra.mxu0 %v3522
  %v3609 = vpop.f32.mrf.mxu0
  %v3610 = vadd.f32 %v3561, %v3609
  %v3611 = vpop.f32.mrf.mxu0
  %v3612 = vadd.f32 %v3563, %v3611
  %3613 = vmatmul.bf16.gmra.mxu0 %v3525
  %v3614 = vpop.f32.mrf.mxu0
  %v3615 = vadd.f32 %v3566, %v3614
  %v3616 = vpop.f32.mrf.mxu0
  %v3617 = vadd.f32 %v3568, %v3616
  %3618 = vmatmul.bf16.gmra.mxu0 %v3528
  %v3619 = vpop.f32.mrf.mxu0
  %v3620 = vadd.f32 %v3571, %v3619
  %v3621 = vpop.f32.mrf.mxu0
  %v3622 = vadd.f32 %v3573, %v3621
  %3623 = vmatmul.bf16.gmra.mxu0 %v3531
  %v3624 = vpop.f32.mrf.mxu0
  %v3625 = vadd.f32 %v3576, %v3624
  %v3626 = vpop.f32.mrf.mxu0
  %v3627 = vadd.f32 %v3578, %v3626
  %3628 = vmatmul.bf16.gmra.mxu0 %v3534
  %v3629 = vpop.f32.mrf.mxu0
  %v3630 = vadd.f32 %v3581, %v3629
  %v3631 = vpop.f32.mrf.mxu0
  %v3632 = vadd.f32 %v3583, %v3631
  %3633 = vdwg.mxu0
  %v3634 = vld [vmem:[%s3 + $0x6] sm:$0x1]
  %v3635 = vld [vmem:[%s3 + $0x7] sm:$0x1]
  %v3636 = vsel %vm581, %v3595, 0.0
  %v3637 = vsel %vm581, %v3597, 0.0
  %v3638 = vadd.f32 %v3636, %v3637
  %v3639 = vsel %vm581, %v3600, 0.0
  %v3640 = vadd.f32 %v3638, %v3639
  %v3641 = vsel %vm581, %v3602, 0.0
  %v3642 = vadd.f32 %v3640, %v3641
  %v3643 = vsel %vm581, %v3605, 0.0
  %v3644 = vadd.f32 %v3642, %v3643
  %v3645 = vsel %vm581, %v3607, 0.0
  %v3646 = vadd.f32 %v3644, %v3645
  %v3647 = vsel %vm581, %v3610, 0.0
  %v3648 = vadd.f32 %v3646, %v3647
  %v3649 = vsel %vm581, %v3612, 0.0
  %v3650 = vadd.f32 %v3648, %v3649
  %v3651 = vsel %vm581, %v3615, 0.0
  %v3652 = vadd.f32 %v3650, %v3651
  %v3653 = vsel %vm581, %v3617, 0.0
  %v3654 = vadd.f32 %v3652, %v3653
  %v3655 = vsel %vm581, %v3620, 0.0
  %v3656 = vadd.f32 %v3654, %v3655
  %v3657 = vsel %vm581, %v3622, 0.0
  %v3658 = vadd.f32 %v3656, %v3657
  %v3659 = vsel %vm581, %v3625, 0.0
  %v3660 = vadd.f32 %v3658, %v3659
  %v3661 = vsel %vm581, %v3627, 0.0
  %v3662 = vadd.f32 %v3660, %v3661
  %v3663 = vsel %vm581, %v3630, 0.0
  %v3664 = vadd.f32 %v3662, %v3663
  %v3665 = vsel %vm581, %v3632, 0.0
  %v3666 = vadd.f32 %v3664, %v3665
  %v3667 = vrot.slane %v3666, 4
  %v3668 = vadd.f32 %v3666, %v3667
  %v3669 = vrot.slane %v3668, 2
  %v3670 = vadd.f32 %v3668, %v3669
  %v3671 = vrot.slane %v3670, 1
  %v3672 = vadd.f32 %v3670, %v3671
  %v3673 = vmul.f32 %v3672, %v743
  %v3674 = vmul.f32 %v3595, %v3595
  %v3675 = vmul.f32 %v3597, %v3597
  %v3676 = vmul.f32 %v3600, %v3600
  %v3677 = vmul.f32 %v3602, %v3602
  %v3678 = vmul.f32 %v3605, %v3605
  %v3679 = vmul.f32 %v3607, %v3607
  %v3680 = vmul.f32 %v3610, %v3610
  %v3681 = vmul.f32 %v3612, %v3612
  %v3682 = vmul.f32 %v3615, %v3615
  %v3683 = vmul.f32 %v3617, %v3617
  %v3684 = vmul.f32 %v3620, %v3620
  %v3685 = vmul.f32 %v3622, %v3622
  %v3686 = vmul.f32 %v3625, %v3625
  %v3687 = vmul.f32 %v3627, %v3627
  %v3688 = vmul.f32 %v3630, %v3630
  %v3689 = vmul.f32 %v3632, %v3632
  %v3690 = vsel %vm581, %v3674, 0.0
  %v3691 = vsel %vm581, %v3675, 0.0
  %v3692 = vadd.f32 %v3690, %v3691
  %v3693 = vsel %vm581, %v3676, 0.0
  %v3694 = vadd.f32 %v3692, %v3693
  %v3695 = vsel %vm581, %v3677, 0.0
  %v3696 = vadd.f32 %v3694, %v3695
  %v3697 = vsel %vm581, %v3678, 0.0
  %v3698 = vadd.f32 %v3696, %v3697
  %v3699 = vsel %vm581, %v3679, 0.0
  %v3700 = vadd.f32 %v3698, %v3699
  %v3701 = vsel %vm581, %v3680, 0.0
  %v3702 = vadd.f32 %v3700, %v3701
  %v3703 = vsel %vm581, %v3681, 0.0
  %v3704 = vadd.f32 %v3702, %v3703
  %v3705 = vsel %vm581, %v3682, 0.0
  %v3706 = vadd.f32 %v3704, %v3705
  %v3707 = vsel %vm581, %v3683, 0.0
  %v3708 = vadd.f32 %v3706, %v3707
  %v3709 = vsel %vm581, %v3684, 0.0
  %v3710 = vadd.f32 %v3708, %v3709
  %v3711 = vsel %vm581, %v3685, 0.0
  %v3712 = vadd.f32 %v3710, %v3711
  %v3713 = vsel %vm581, %v3686, 0.0
  %v3714 = vadd.f32 %v3712, %v3713
  %v3715 = vsel %vm581, %v3687, 0.0
  %v3716 = vadd.f32 %v3714, %v3715
  %v3717 = vsel %vm581, %v3688, 0.0
  %v3718 = vadd.f32 %v3716, %v3717
  %v3719 = vsel %vm581, %v3689, 0.0
  %v3720 = vadd.f32 %v3718, %v3719
  %v3721 = vrot.slane %v3720, 4
  %v3722 = vadd.f32 %v3720, %v3721
  %v3723 = vrot.slane %v3722, 2
  %v3724 = vadd.f32 %v3722, %v3723
  %v3725 = vrot.slane %v3724, 1
  %v3726 = vadd.f32 %v3724, %v3725
  %v3727 = vmul.f32 %v3726, %v743
  %v3728 = vmul.f32 %v3673, %v3673
  %v3729 = vsub.f32 %v3727, %v3728
  %v3730 = vmax.f32 %v3729, 0.0
  %v3731 = vsub.f32 %v3595, %v3673
  %v3732 = vsub.f32 %v3597, %v3673
  %v3733 = vsub.f32 %v3600, %v3673
  %v3734 = vsub.f32 %v3602, %v3673
  %v3735 = vsub.f32 %v3605, %v3673
  %v3736 = vsub.f32 %v3607, %v3673
  %v3737 = vsub.f32 %v3610, %v3673
  %v3738 = vsub.f32 %v3612, %v3673
  %v3739 = vsub.f32 %v3615, %v3673
  %v3740 = vsub.f32 %v3617, %v3673
  %v3741 = vsub.f32 %v3620, %v3673
  %v3742 = vsub.f32 %v3622, %v3673
  %v3743 = vsub.f32 %v3625, %v3673
  %v3744 = vsub.f32 %v3627, %v3673
  %v3745 = vsub.f32 %v3630, %v3673
  %v3746 = vsub.f32 %v3632, %v3673
  %v3747 = vperm.slane %v3634, 0
  %v3748 = vmul.f32 %v3747, %v3731
  %v3749 = vmul.f32 %v3747, %v3732
  %v3750 = vmul.f32 %v3747, %v3733
  %v3751 = vmul.f32 %v3747, %v3734
  %v3752 = vmul.f32 %v3747, %v3735
  %v3753 = vmul.f32 %v3747, %v3736
  %v3754 = vmul.f32 %v3747, %v3737
  %v3755 = vmul.f32 %v3747, %v3738
  %v3756 = vmul.f32 %v3747, %v3739
  %v3757 = vmul.f32 %v3747, %v3740
  %v3758 = vmul.f32 %v3747, %v3741
  %v3759 = vmul.f32 %v3747, %v3742
  %v3760 = vmul.f32 %v3747, %v3743
  %v3761 = vmul.f32 %v3747, %v3744
  %v3762 = vmul.f32 %v3747, %v3745
  %v3763 = vmul.f32 %v3747, %v3746
  %v3764 = vadd.f32 %v3730, 1e-05
  %v3765 = vrsqrt.pop %v3764
  %v3766 = vmul.f32 %v3765, %v3764
  %v3767 = vmul.f32 %v3766, %v3765
  %v3768 = vmul.f32 0.5, %v3767
  %v3769 = vsub.f32 1.5, %v3768
  %v3770 = vmul.f32 %v3765, %v3769
  %vm3771 = vweird.f32 %v3764
  %vm3772 = vweird.f32 %v3765
  %vm3773 = vmor %vm3771, %vm3772
  %v3774 = vsel %vm3773, %v3765, %v3770
  %v3775 = vmul.f32 %v3748, %v3774
  %v3776 = vmul.f32 %v3749, %v3774
  %v3777 = vmul.f32 %v3750, %v3774
  %v3778 = vmul.f32 %v3751, %v3774
  %v3779 = vmul.f32 %v3752, %v3774
  %v3780 = vmul.f32 %v3753, %v3774
  %v3781 = vmul.f32 %v3754, %v3774
  %v3782 = vmul.f32 %v3755, %v3774
  %v3783 = vmul.f32 %v3756, %v3774
  %v3784 = vmul.f32 %v3757, %v3774
  %v3785 = vmul.f32 %v3758, %v3774
  %v3786 = vmul.f32 %v3759, %v3774
  %v3787 = vmul.f32 %v3760, %v3774
  %v3788 = vmul.f32 %v3761, %v3774
  %v3789 = vmul.f32 %v3762, %v3774
  %v3790 = vmul.f32 %v3763, %v3774
  %v3791 = vperm.slane %v3635, 0
  %v3792 = vadd.f32 %v3775, %v3791
  %v3793 = vadd.f32 %v3776, %v3791
  %v3794 = vadd.f32 %v3777, %v3791
  %v3795 = vadd.f32 %v3778, %v3791
  %v3796 = vadd.f32 %v3779, %v3791
  %v3797 = vadd.f32 %v3780, %v3791
  %v3798 = vadd.f32 %v3781, %v3791
  %v3799 = vadd.f32 %v3782, %v3791
  %v3800 = vadd.f32 %v3783, %v3791
  %v3801 = vadd.f32 %v3784, %v3791
  %v3802 = vadd.f32 %v3785, %v3791
  %v3803 = vadd.f32 %v3786, %v3791
  %v3804 = vadd.f32 %v3787, %v3791
  %v3805 = vadd.f32 %v3788, %v3791
  %v3806 = vadd.f32 %v3789, %v3791
  %v3807 = vadd.f32 %v3790, %v3791
  %v3808 = vld [vmem:[%s1 + $0xa8] sm:$0xf]
  %v3809 = vld [vmem:[%s1 + $0xac] sm:$0xf]
  %v3810 = vld [vmem:[%s1 + $0xb0] sm:$0xf]
  %v3811 = vld [vmem:[%s1 + $0xb4] sm:$0xf]
  %v3812 = vld [vmem:[%s1 + $0xb8] sm:$0xf]
  %v3813 = vld [vmem:[%s1 + $0xbc] sm:$0xf]
  %v3814 = vld [vmem:[%s1 + $0xc0] sm:$0xf]
  %v3815 = vld [vmem:[%s1 + $0xc4] sm:$0xf]
  %v3816 = vld [vmem:[%s1 + $0xc8] sm:$0xf]
  %v3817 = vld [vmem:[%s1 + $0xcc] sm:$0xf]
  %v3818 = vld [vmem:[%s1 + $0xd0] sm:$0xf]
  %v3819 = vld [vmem:[%s1 + $0xd4] sm:$0xf]
  %v3820 = vrot.slane %v3792, 7
  %v3821 = vrot.slane %v3793, 7
  %v3822 = vrot.slane %v3794, 7
  %v3823 = vrot.slane %v3795, 7
  %v3824 = vrot.slane %v3796, 7
  %v3825 = vrot.slane %v3797, 7
  %v3826 = vrot.slane %v3798, 7
  %v3827 = vrot.slane %v3799, 7
  %v3828 = vrot.slane %v3800, 7
  %v3829 = vrot.slane %v3801, 7
  %v3830 = vrot.slane %v3802, 7
  %v3831 = vrot.slane %v3803, 7
  %v3832 = vrot.slane %v3804, 7
  %v3833 = vrot.slane %v3805, 7
  %v3834 = vrot.slane %v3806, 7
  %v3835 = vrot.slane %v3807, 7
  %v3836 = vsel %vm354, %v3834, %v3835
  %v3837 = vsel %vm354, %v3833, %v3834
  %v3838 = vsel %vm354, %v3832, %v3833
  %v3839 = vsel %vm354, %v3831, %v3832
  %v3840 = vsel %vm354, %v3830, %v3831
  %v3841 = vsel %vm354, %v3829, %v3830
  %v3842 = vsel %vm354, %v3828, %v3829
  %v3843 = vsel %vm354, %v3827, %v3828
  %v3844 = vsel %vm354, %v3826, %v3827
  %v3845 = vsel %vm354, %v3825, %v3826
  %v3846 = vsel %vm354, %v3824, %v3825
  %v3847 = vsel %vm354, %v3823, %v3824
  %v3848 = vsel %vm354, %v3822, %v3823
  %v3849 = vsel %vm354, %v3821, %v3822
  %v3850 = vsel %vm354, %v3820, %v3821
  %v3851 = vsel %vm354, %v3835, %v3820
  %v3852 = vmul.f32 %v3851, %v92
  %v3853 = vmul.f32 %v3850, %v93
  %v3854 = vmul.f32 %v3849, %v94
  %v3855 = vmul.f32 %v3848, %v95
  %v3856 = vmul.f32 %v3847, %v96
  %v3857 = vmul.f32 %v3846, %v97
  %v3858 = vmul.f32 %v3845, %v98
  %v3859 = vmul.f32 %v3844, %v99
  %v3860 = vmul.f32 %v3843, %v100
  %v3861 = vmul.f32 %v3842, %v101
  %v3862 = vmul.f32 %v3841, %v102
  %v3863 = vmul.f32 %v3840, %v103
  %v3864 = vmul.f32 %v3839, %v104
  %v3865 = vmul.f32 %v3838, %v105
  %v3866 = vmul.f32 %v3837, %v106
  %v3867 = vmul.f32 %v3836, %v107
  %v3868 = vrot.slane %v3792, 1
  %v3869 = vrot.slane %v3793, 1
  %v3870 = vrot.slane %v3794, 1
  %v3871 = vrot.slane %v3795, 1
  %v3872 = vrot.slane %v3796, 1
  %v3873 = vrot.slane %v3797, 1
  %v3874 = vrot.slane %v3798, 1
  %v3875 = vrot.slane %v3799, 1
  %v3876 = vrot.slane %v3800, 1
  %v3877 = vrot.slane %v3801, 1
  %v3878 = vrot.slane %v3802, 1
  %v3879 = vrot.slane %v3803, 1
  %v3880 = vrot.slane %v3804, 1
  %v3881 = vrot.slane %v3805, 1
  %v3882 = vrot.slane %v3806, 1
  %v3883 = vrot.slane %v3807, 1
  %v3884 = vsel %vm403, %v3882, %v3883
  %v3885 = vsel %vm403, %v3881, %v3882
  %v3886 = vsel %vm403, %v3880, %v3881
  %v3887 = vsel %vm403, %v3879, %v3880
  %v3888 = vsel %vm403, %v3878, %v3879
  %v3889 = vsel %vm403, %v3877, %v3878
  %v3890 = vsel %vm403, %v3876, %v3877
  %v3891 = vsel %vm403, %v3875, %v3876
  %v3892 = vsel %vm403, %v3874, %v3875
  %v3893 = vsel %vm403, %v3873, %v3874
  %v3894 = vsel %vm403, %v3872, %v3873
  %v3895 = vsel %vm403, %v3871, %v3872
  %v3896 = vsel %vm403, %v3870, %v3871
  %v3897 = vsel %vm403, %v3869, %v3870
  %v3898 = vsel %vm403, %v3868, %v3869
  %v3899 = vsel %vm403, %v3883, %v3868
  %v3900 = vmul.f32 %v3898, %v140
  %v3901 = vmul.f32 %v3897, %v141
  %v3902 = vmul.f32 %v3896, %v142
  %v3903 = vmul.f32 %v3895, %v143
  %v3904 = vmul.f32 %v3894, %v144
  %v3905 = vmul.f32 %v3893, %v145
  %v3906 = vmul.f32 %v3892, %v146
  %v3907 = vmul.f32 %v3891, %v147
  %v3908 = vmul.f32 %v3890, %v148
  %v3909 = vmul.f32 %v3889, %v149
  %v3910 = vmul.f32 %v3888, %v150
  %v3911 = vmul.f32 %v3887, %v151
  %v3912 = vmul.f32 %v3886, %v152
  %v3913 = vmul.f32 %v3885, %v153
  %v3914 = vmul.f32 %v3884, %v154
  %v3915 = vmul.f32 %v3899, %v155
  %3932 = vrot.lane.b32.xlu0 %v3792, 32
  %v3933 = vpop.permute.xlu0 %3932
  %3934 = vrot.lane.b32.xlu0 %v3793, 32
  %v3935 = vpop.permute.xlu0 %3934
  %3936 = vrot.lane.b32.xlu0 %v3794, 32
  %v3937 = vpop.permute.xlu0 %3936
  %3938 = vrot.lane.b32.xlu0 %v3795, 32
  %v3939 = vpop.permute.xlu0 %3938
  %3940 = vrot.lane.b32.xlu0 %v3796, 32
  %v3941 = vpop.permute.xlu0 %3940
  %3942 = vrot.lane.b32.xlu0 %v3797, 32
  %v3943 = vpop.permute.xlu0 %3942
  %3944 = vrot.lane.b32.xlu0 %v3798, 32
  %v3945 = vpop.permute.xlu0 %3944
  %3946 = vrot.lane.b32.xlu0 %v3799, 32
  %v3947 = vpop.permute.xlu0 %3946
  %3948 = vrot.lane.b32.xlu0 %v3800, 32
  %v3949 = vpop.permute.xlu0 %3948
  %3950 = vrot.lane.b32.xlu0 %v3801, 32
  %v3951 = vpop.permute.xlu0 %3950
  %3952 = vrot.lane.b32.xlu0 %v3802, 32
  %v3953 = vpop.permute.xlu0 %3952
  %3954 = vrot.lane.b32.xlu0 %v3803, 32
  %v3955 = vpop.permute.xlu0 %3954
  %3956 = vrot.lane.b32.xlu0 %v3804, 32
  %v3957 = vpop.permute.xlu0 %3956
  %3958 = vrot.lane.b32.xlu0 %v3805, 32
  %v3959 = vpop.permute.xlu0 %3958
  %3960 = vrot.lane.b32.xlu0 %v3806, 32
  %v3961 = vpop.permute.xlu0 %3960
  %3962 = vrot.lane.b32.xlu0 %v3807, 32
  %v3963 = vpop.permute.xlu0 %3962
  %3996 = vrot.lane.b32.xlu0 %v3900, 64
  %v3997 = vpop.permute.xlu0 %3996
  %3998 = vrot.lane.b32.xlu0 %v3901, 64
  %v3999 = vpop.permute.xlu0 %3998
  %4000 = vrot.lane.b32.xlu0 %v3902, 64
  %v4001 = vpop.permute.xlu0 %4000
  %4002 = vrot.lane.b32.xlu0 %v3903, 64
  %v4003 = vpop.permute.xlu0 %4002
  %4004 = vrot.lane.b32.xlu0 %v3904, 64
  %v4005 = vpop.permute.xlu0 %4004
  %4006 = vrot.lane.b32.xlu0 %v3905, 64
  %v4007 = vpop.permute.xlu0 %4006
  %4008 = vrot.lane.b32.xlu0 %v3906, 64
  %v4009 = vpop.permute.xlu0 %4008
  %4010 = vrot.lane.b32.xlu0 %v3907, 64
  %v4011 = vpop.permute.xlu0 %4010
  %4012 = vrot.lane.b32.xlu0 %v3908, 64
  %v4013 = vpop.permute.xlu0 %4012
  %4014 = vrot.lane.b32.xlu0 %v3909, 64
  %v4015 = vpop.permute.xlu0 %4014
  %4016 = vrot.lane.b32.xlu0 %v3910, 64
  %v4017 = vpop.permute.xlu0 %4016
  %4018 = vrot.lane.b32.xlu0 %v3911, 64
  %v4019 = vpop.permute.xlu0 %4018
  %4020 = vrot.lane.b32.xlu0 %v3912, 64
  %v4021 = vpop.permute.xlu0 %4020
  %4022 = vrot.lane.b32.xlu0 %v3913, 64
  %v4023 = vpop.permute.xlu0 %4022
  %4024 = vrot.lane.b32.xlu0 %v3914, 64
  %v4025 = vpop.permute.xlu0 %4024
  %4026 = vrot.lane.b32.xlu0 %v3915, 64
  %v4027 = vpop.permute.xlu0 %4026
  %v4044 = vsel %vm581, %v3852, %v3933
  %v4045 = vsel %vm581, %v3853, %v3935
  %v4046 = vsel %vm581, %v3854, %v3937
  %v4047 = vsel %vm581, %v3855, %v3939
  %v4048 = vsel %vm581, %v3856, %v3941
  %v4049 = vsel %vm581, %v3857, %v3943
  %v4050 = vsel %vm581, %v3858, %v3945
  %v4051 = vsel %vm581, %v3859, %v3947
  %v4052 = vsel %vm581, %v3860, %v3949
  %v4053 = vsel %vm581, %v3861, %v3951
  %v4054 = vsel %vm581, %v3862, %v3953
  %v4055 = vsel %vm581, %v3863, %v3955
  %v4056 = vsel %vm581, %v3864, %v3957
  %v4057 = vsel %vm581, %v3865, %v3959
  %v4058 = vsel %vm581, %v3866, %v3961
  %v4059 = vsel %vm581, %v3867, %v3963
  %v4060 = vsel %vm1131, %v4044, %v3997
  %v4061 = vsel %vm1131, %v4045, %v3999
  %v4062 = vsel %vm1131, %v4046, %v4001
  %v4063 = vsel %vm1131, %v4047, %v4003
  %v4064 = vsel %vm1131, %v4048, %v4005
  %v4065 = vsel %vm1131, %v4049, %v4007
  %v4066 = vsel %vm1131, %v4050, %v4009
  %v4067 = vsel %vm1131, %v4051, %v4011
  %v4068 = vsel %vm1131, %v4052, %v4013
  %v4069 = vsel %vm1131, %v4053, %v4015
  %v4070 = vsel %vm1131, %v4054, %v4017
  %v4071 = vsel %vm1131, %v4055, %v4019
  %v4072 = vsel %vm1131, %v4056, %v4021
  %v4073 = vsel %vm1131, %v4057, %v4023
  %v4074 = vsel %vm1131, %v4058, %v4025
  %v4075 = vsel %vm1131, %v4059, %v4027
  %v4076 = vpack.c.bf16 %v4061, %v4060
  %v4077 = vpack.c.bf16 %v4063, %v4062
  %v4078 = vpack.c.bf16 %v4065, %v4064
  %v4079 = vpack.c.bf16 %v4067, %v4066
  %v4080 = vpack.c.bf16 %v4069, %v4068
  %v4081 = vpack.c.bf16 %v4071, %v4070
  %v4082 = vpack.c.bf16 %v4073, %v4072
  %v4083 = vpack.c.bf16 %v4075, %v4074
  %v4096 = vunpack.c.l.b16 %v3808
  %v4097 = vunpack.c.l.b16 %v3809
  %v4098 = vunpack.c.l.b16 %v3810
  %v4099 = vunpack.c.l.b16 %v3811
  %v4100 = vunpack.c.l.b16 %v3812
  %v4101 = vunpack.c.l.b16 %v3813
  %v4102 = vunpack.c.l.b16 %v3814
  %v4103 = vunpack.c.l.b16 %v3815
  %v4104 = vunpack.c.l.b16 %v3816
  %v4105 = vunpack.c.l.b16 %v3817
  %v4106 = vunpack.c.l.b16 %v3818
  %v4107 = vunpack.c.l.b16 %v3819
  %v4108 = vpack.c.b16 %v4097, %v4096
  %v4109 = vpack.c.b16 %v4099, %v4098
  %v4110 = vpack.c.b16 %v4101, %v4100
  %v4111 = vpack.c.b16 %v4103, %v4102
  %v4112 = vpack.c.b16 %v4105, %v4104
  %v4113 = vpack.c.b16 %v4107, %v4106
  %v4121 = vsel %vm1192, %v4076, 0
  %v4124 = vsel %vm1192, %v4077, 0
  %v4127 = vsel %vm1192, %v4078, 0
  %v4130 = vsel %vm1192, %v4079, 0
  %v4133 = vsel %vm1192, %v4080, 0
  %v4136 = vsel %vm1192, %v4081, 0
  %v4139 = vsel %vm1192, %v4082, 0
  %v4142 = vsel %vm1192, %v4083, 0
  %4144 = vmatpush.bf16.msra.mxu0 0
  %4145 = vmatpush.bf16.msra.mxu0 0
  %4146 = vmatpush.bf16.msra.mxu0 %v4113
  %4147 = vmatpush.bf16.msra.mxu0 %v4112
  %4148 = vmatpush.bf16.msra.mxu0 %v4111
  %4149 = vmatpush.bf16.msra.mxu0 %v4110
  %4150 = vmatpush.bf16.msra.mxu0 %v4109
  %4151 = vmatpush.bf16.msra.mxu0 %v4108
  %4152 = vmatmul.bf16.gmra.mxu0 %v4121
  %v4153 = vpop.f32.mrf.mxu0
  %v4154 = vadd.f32 0.0, %v4153
  %v4155 = vpop.f32.mrf.mxu0
  %v4156 = vadd.f32 0.0, %v4155
  %4157 = vmatmul.bf16.gmra.mxu0 %v4124
  %v4158 = vpop.f32.mrf.mxu0
  %v4159 = vadd.f32 0.0, %v4158
  %v4160 = vpop.f32.mrf.mxu0
  %v4161 = vadd.f32 0.0, %v4160
  %4162 = vmatmul.bf16.gmra.mxu0 %v4127
  %v4163 = vpop.f32.mrf.mxu0
  %v4164 = vadd.f32 0.0, %v4163
  %v4165 = vpop.f32.mrf.mxu0
  %v4166 = vadd.f32 0.0, %v4165
  %4167 = vmatmul.bf16.gmra.mxu0 %v4130
  %v4168 = vpop.f32.mrf.mxu0
  %v4169 = vadd.f32 0.0, %v4168
  %v4170 = vpop.f32.mrf.mxu0
  %v4171 = vadd.f32 0.0, %v4170
  %4172 = vmatmul.bf16.gmra.mxu0 %v4133
  %v4173 = vpop.f32.mrf.mxu0
  %v4174 = vadd.f32 0.0, %v4173
  %v4175 = vpop.f32.mrf.mxu0
  %v4176 = vadd.f32 0.0, %v4175
  %4177 = vmatmul.bf16.gmra.mxu0 %v4136
  %v4178 = vpop.f32.mrf.mxu0
  %v4179 = vadd.f32 0.0, %v4178
  %v4180 = vpop.f32.mrf.mxu0
  %v4181 = vadd.f32 0.0, %v4180
  %4182 = vmatmul.bf16.gmra.mxu0 %v4139
  %v4183 = vpop.f32.mrf.mxu0
  %v4184 = vadd.f32 0.0, %v4183
  %v4185 = vpop.f32.mrf.mxu0
  %v4186 = vadd.f32 0.0, %v4185
  %4187 = vmatmul.bf16.gmra.mxu0 %v4142
  %v4188 = vpop.f32.mrf.mxu0
  %v4189 = vadd.f32 0.0, %v4188
  %v4190 = vpop.f32.mrf.mxu0
  %v4191 = vadd.f32 0.0, %v4190
  %4192 = vdwg.mxu0
  %v4193 = vld [vmem:[%s3 + $0x8] sm:$0x1]
  %v4194 = vld [vmem:[%s3 + $0x9] sm:$0x1]
  %v4195 = vsel %vm581, %v4154, 0.0
  %v4196 = vsel %vm581, %v4156, 0.0
  %v4197 = vadd.f32 %v4195, %v4196
  %v4198 = vsel %vm581, %v4159, 0.0
  %v4199 = vadd.f32 %v4197, %v4198
  %v4200 = vsel %vm581, %v4161, 0.0
  %v4201 = vadd.f32 %v4199, %v4200
  %v4202 = vsel %vm581, %v4164, 0.0
  %v4203 = vadd.f32 %v4201, %v4202
  %v4204 = vsel %vm581, %v4166, 0.0
  %v4205 = vadd.f32 %v4203, %v4204
  %v4206 = vsel %vm581, %v4169, 0.0
  %v4207 = vadd.f32 %v4205, %v4206
  %v4208 = vsel %vm581, %v4171, 0.0
  %v4209 = vadd.f32 %v4207, %v4208
  %v4210 = vsel %vm581, %v4174, 0.0
  %v4211 = vadd.f32 %v4209, %v4210
  %v4212 = vsel %vm581, %v4176, 0.0
  %v4213 = vadd.f32 %v4211, %v4212
  %v4214 = vsel %vm581, %v4179, 0.0
  %v4215 = vadd.f32 %v4213, %v4214
  %v4216 = vsel %vm581, %v4181, 0.0
  %v4217 = vadd.f32 %v4215, %v4216
  %v4218 = vsel %vm581, %v4184, 0.0
  %v4219 = vadd.f32 %v4217, %v4218
  %v4220 = vsel %vm581, %v4186, 0.0
  %v4221 = vadd.f32 %v4219, %v4220
  %v4222 = vsel %vm581, %v4189, 0.0
  %v4223 = vadd.f32 %v4221, %v4222
  %v4224 = vsel %vm581, %v4191, 0.0
  %v4225 = vadd.f32 %v4223, %v4224
  %v4226 = vrot.slane %v4225, 4
  %v4227 = vadd.f32 %v4225, %v4226
  %v4228 = vrot.slane %v4227, 2
  %v4229 = vadd.f32 %v4227, %v4228
  %v4230 = vrot.slane %v4229, 1
  %v4231 = vadd.f32 %v4229, %v4230
  %v4232 = vmul.f32 %v4231, %v743
  %v4233 = vmul.f32 %v4154, %v4154
  %v4234 = vmul.f32 %v4156, %v4156
  %v4235 = vmul.f32 %v4159, %v4159
  %v4236 = vmul.f32 %v4161, %v4161
  %v4237 = vmul.f32 %v4164, %v4164
  %v4238 = vmul.f32 %v4166, %v4166
  %v4239 = vmul.f32 %v4169, %v4169
  %v4240 = vmul.f32 %v4171, %v4171
  %v4241 = vmul.f32 %v4174, %v4174
  %v4242 = vmul.f32 %v4176, %v4176
  %v4243 = vmul.f32 %v4179, %v4179
  %v4244 = vmul.f32 %v4181, %v4181
  %v4245 = vmul.f32 %v4184, %v4184
  %v4246 = vmul.f32 %v4186, %v4186
  %v4247 = vmul.f32 %v4189, %v4189
  %v4248 = vmul.f32 %v4191, %v4191
  %v4249 = vsel %vm581, %v4233, 0.0
  %v4250 = vsel %vm581, %v4234, 0.0
  %v4251 = vadd.f32 %v4249, %v4250
  %v4252 = vsel %vm581, %v4235, 0.0
  %v4253 = vadd.f32 %v4251, %v4252
  %v4254 = vsel %vm581, %v4236, 0.0
  %v4255 = vadd.f32 %v4253, %v4254
  %v4256 = vsel %vm581, %v4237, 0.0
  %v4257 = vadd.f32 %v4255, %v4256
  %v4258 = vsel %vm581, %v4238, 0.0
  %v4259 = vadd.f32 %v4257, %v4258
  %v4260 = vsel %vm581, %v4239, 0.0
  %v4261 = vadd.f32 %v4259, %v4260
  %v4262 = vsel %vm581, %v4240, 0.0
  %v4263 = vadd.f32 %v4261, %v4262
  %v4264 = vsel %vm581, %v4241, 0.0
  %v4265 = vadd.f32 %v4263, %v4264
  %v4266 = vsel %vm581, %v4242, 0.0
  %v4267 = vadd.f32 %v4265, %v4266
  %v4268 = vsel %vm581, %v4243, 0.0
  %v4269 = vadd.f32 %v4267, %v4268
  %v4270 = vsel %vm581, %v4244, 0.0
  %v4271 = vadd.f32 %v4269, %v4270
  %v4272 = vsel %vm581, %v4245, 0.0
  %v4273 = vadd.f32 %v4271, %v4272
  %v4274 = vsel %vm581, %v4246, 0.0
  %v4275 = vadd.f32 %v4273, %v4274
  %v4276 = vsel %vm581, %v4247, 0.0
  %v4277 = vadd.f32 %v4275, %v4276
  %v4278 = vsel %vm581, %v4248, 0.0
  %v4279 = vadd.f32 %v4277, %v4278
  %v4280 = vrot.slane %v4279, 4
  %v4281 = vadd.f32 %v4279, %v4280
  %v4282 = vrot.slane %v4281, 2
  %v4283 = vadd.f32 %v4281, %v4282
  %v4284 = vrot.slane %v4283, 1
  %v4285 = vadd.f32 %v4283, %v4284
  %v4286 = vmul.f32 %v4285, %v743
  %v4287 = vmul.f32 %v4232, %v4232
  %v4288 = vsub.f32 %v4286, %v4287
  %v4289 = vmax.f32 %v4288, 0.0
  %v4290 = vsub.f32 %v4154, %v4232
  %v4291 = vsub.f32 %v4156, %v4232
  %v4292 = vsub.f32 %v4159, %v4232
  %v4293 = vsub.f32 %v4161, %v4232
  %v4294 = vsub.f32 %v4164, %v4232
  %v4295 = vsub.f32 %v4166, %v4232
  %v4296 = vsub.f32 %v4169, %v4232
  %v4297 = vsub.f32 %v4171, %v4232
  %v4298 = vsub.f32 %v4174, %v4232
  %v4299 = vsub.f32 %v4176, %v4232
  %v4300 = vsub.f32 %v4179, %v4232
  %v4301 = vsub.f32 %v4181, %v4232
  %v4302 = vsub.f32 %v4184, %v4232
  %v4303 = vsub.f32 %v4186, %v4232
  %v4304 = vsub.f32 %v4189, %v4232
  %v4305 = vsub.f32 %v4191, %v4232
  %v4306 = vperm.slane %v4193, 0
  %v4307 = vmul.f32 %v4306, %v4290
  %v4308 = vmul.f32 %v4306, %v4291
  %v4309 = vmul.f32 %v4306, %v4292
  %v4310 = vmul.f32 %v4306, %v4293
  %v4311 = vmul.f32 %v4306, %v4294
  %v4312 = vmul.f32 %v4306, %v4295
  %v4313 = vmul.f32 %v4306, %v4296
  %v4314 = vmul.f32 %v4306, %v4297
  %v4315 = vmul.f32 %v4306, %v4298
  %v4316 = vmul.f32 %v4306, %v4299
  %v4317 = vmul.f32 %v4306, %v4300
  %v4318 = vmul.f32 %v4306, %v4301
  %v4319 = vmul.f32 %v4306, %v4302
  %v4320 = vmul.f32 %v4306, %v4303
  %v4321 = vmul.f32 %v4306, %v4304
  %v4322 = vmul.f32 %v4306, %v4305
  %v4323 = vadd.f32 %v4289, 1e-05
  %v4324 = vrsqrt.pop %v4323
  %v4325 = vmul.f32 %v4324, %v4323
  %v4326 = vmul.f32 %v4325, %v4324
  %v4327 = vmul.f32 0.5, %v4326
  %v4328 = vsub.f32 1.5, %v4327
  %v4329 = vmul.f32 %v4324, %v4328
  %vm4330 = vweird.f32 %v4323
  %vm4331 = vweird.f32 %v4324
  %vm4332 = vmor %vm4330, %vm4331
  %v4333 = vsel %vm4332, %v4324, %v4329
  %v4334 = vmul.f32 %v4307, %v4333
  %v4335 = vmul.f32 %v4308, %v4333
  %v4336 = vmul.f32 %v4309, %v4333
  %v4337 = vmul.f32 %v4310, %v4333
  %v4338 = vmul.f32 %v4311, %v4333
  %v4339 = vmul.f32 %v4312, %v4333
  %v4340 = vmul.f32 %v4313, %v4333
  %v4341 = vmul.f32 %v4314, %v4333
  %v4342 = vmul.f32 %v4315, %v4333
  %v4343 = vmul.f32 %v4316, %v4333
  %v4344 = vmul.f32 %v4317, %v4333
  %v4345 = vmul.f32 %v4318, %v4333
  %v4346 = vmul.f32 %v4319, %v4333
  %v4347 = vmul.f32 %v4320, %v4333
  %v4348 = vmul.f32 %v4321, %v4333
  %v4349 = vmul.f32 %v4322, %v4333
  %v4350 = vperm.slane %v4194, 0
  %v4351 = vadd.f32 %v4334, %v4350
  %v4352 = vadd.f32 %v4335, %v4350
  %v4353 = vadd.f32 %v4336, %v4350
  %v4354 = vadd.f32 %v4337, %v4350
  %v4355 = vadd.f32 %v4338, %v4350
  %v4356 = vadd.f32 %v4339, %v4350
  %v4357 = vadd.f32 %v4340, %v4350
  %v4358 = vadd.f32 %v4341, %v4350
  %v4359 = vadd.f32 %v4342, %v4350
  %v4360 = vadd.f32 %v4343, %v4350
  %v4361 = vadd.f32 %v4344, %v4350
  %v4362 = vadd.f32 %v4345, %v4350
  %v4363 = vadd.f32 %v4346, %v4350
  %v4364 = vadd.f32 %v4347, %v4350
  %v4365 = vadd.f32 %v4348, %v4350
  %v4366 = vadd.f32 %v4349, %v4350
  %v4367 = vld [vmem:[%s5] sm:$0x3]
  %v4368 = vpack.c.bf16 %v4352, %v4351
  %v4369 = vpack.c.bf16 %v4354, %v4353
  %v4370 = vpack.c.bf16 %v4356, %v4355
  %v4371 = vpack.c.bf16 %v4358, %v4357
  %v4372 = vpack.c.bf16 %v4360, %v4359
  %v4373 = vpack.c.bf16 %v4362, %v4361
  %v4374 = vpack.c.bf16 %v4364, %v4363
  %v4375 = vpack.c.bf16 %v4366, %v4365
  %4376 = vmatpush.bf16.msra.mxu0 %v4375
  %4377 = vmatpush.bf16.msra.mxu0 %v4374
  %4378 = vmatpush.bf16.msra.mxu0 %v4373
  %4379 = vmatpush.bf16.msra.mxu0 %v4372
  %4380 = vmatpush.bf16.msra.mxu0 %v4371
  %4381 = vmatpush.bf16.msra.mxu0 %v4370
  %4382 = vmatpush.bf16.msra.mxu0 %v4369
  %4383 = vmatpush.bf16.msra.mxu0 %v4368
  %4384 = vmatmul.bf16.gmra.mxu0 %v4367
  %v4385 = vpop.f32.mrf.mxu0
  %v4386 = vadd.f32 0.0, %v4385
  %v4387 = vpop.f32.mrf.mxu0
  %4388 = vdwg.mxu0
  %v4389 = vld [vmem:[%s6] sm:$0x1]
  %v4390 = vperm.slane %v4389, 0
  %v4391 = vmul.f32 %v4386, %v4390
  %vm4392 = vcmask 257024
  %v4393 = vsel %vm4392, %v4391, 0.0
  %4394 = vadd.xlane.f32.xlu0 %v4393
  %v4395 = vpop.xlane.xlu0 %4394
  %v4396 = vld [vmem:[%s6 + $0x1] sm:$0x1]
  %v4397 = vperm.slane %v4396, 0
  %v4398 = vadd.f32 %v4395, %v4397
  %vm4399 = vcmask 3072
  %4400 = vst.msk [vmem:[%s7] sm:$0xf] %vm4399, %v4398
  // Predicated region
  $region30: #{tpu_custom_call.1} parent=0 // pred_check
    _
  $region31: #{tpu_custom_call.1} parent=0 // pred_check_branch
    %4402 = sbr.rel (0) target = $region33
  $region32: #{tpu_custom_call.1} parent=0 // pred_region
    _
  $region33: #{tpu_custom_call.1} parent=0 // pred_fallthru
    _
  // Predicated region
  $region34: #{tpu_custom_call.1} parent=0 // pred_check
    _
  $region35: #{tpu_custom_call.1} parent=0 // pred_check_branch
    %4404 = sbr.rel (0) target = $region37
  $region36: #{tpu_custom_call.1} parent=0 // pred_region
    _
  $region37: #{tpu_custom_call.1} parent=0 // pred_fallthru
    _

</llo_original>
